<compile_context>
chip_gen: v7x
topology: tpu7x:2x2x1
jax: 0.10.0
libtpu: 0.0.40
codegen_flags: <defaults>
</compile_context>

<pallas_src>
import functools

import jax
import jax.numpy as jnp
from jax.experimental import pallas as pl
from jax.experimental.pallas import tpu as pltpu

# ---- small synthetic CLIP text-tower config -------------------------------
N_CLASSES = 2      # number of classnames -> number of prompts
SEQ_LEN = 8        # context length
WIDTH = 32         # transformer width D
HEADS = 4          # attention heads
LAYERS = 2         # transformer layers
VOCAB = 64         # vocab size (EOT = VOCAB - 1, SOT = VOCAB - 2)
EMBED_DIM = 32     # text_projection output dim

CUSTOM_TEMPLATES = {'OxfordPets': 'a photo of a {}, a type of pet.'}


def _layer_norm(x, gamma, beta, eps=1e-5):
    mu = jnp.mean(x, axis=-1, keepdims=True)
    var = jnp.mean(jnp.square(x - mu), axis=-1, keepdims=True)
    return (x - mu) * jax.lax.rsqrt(var + eps) * gamma + beta


# ---------------------------------------------------------------------------
# Fused Pallas kernel: LAYERS residual attention blocks + ln_final +
# EOT selection + text projection, for one prompt per grid step.
# ---------------------------------------------------------------------------
def _clip_text_fused_kernel(x_ref,
                            ln1_g_ref, ln1_b_ref, w_qkv_ref, b_qkv_ref,
                            w_out_ref, b_out_ref, ln2_g_ref, ln2_b_ref,
                            w_fc_ref, b_fc_ref, w_proj_ref, b_proj_ref,
                            lnf_g_ref, lnf_b_ref, onehot_ref, proj_ref,
                            o_ref, *, num_heads, num_layers):
    x = x_ref[0].astype(jnp.float32)                       # [L, D] for this prompt
    L, D = x.shape
    hd = D // num_heads
    scale = jnp.float32(1.0 / (hd ** 0.5))

    # Causal mask: built once, reused by every layer (JAX does not CSE iotas).
    qi = jax.lax.broadcasted_iota(jnp.int32, (L, L), 0)
    ki = jax.lax.broadcasted_iota(jnp.int32, (L, L), 1)
    causal = ki <= qi
    neg = jnp.float32(-1e9)                                # finite, NaN-safe mask value

    def layer_body(l, x):
        # ---- x = x + MHA(ln_1(x)), causal --------------------------------
        h = _layer_norm(x, ln1_g_ref[l], ln1_b_ref[l])
        qkv = jnp.dot(h.astype(jnp.bfloat16), w_qkv_ref[l],
                      preferred_element_type=jnp.float32) + b_qkv_ref[l]   # [L, 3D]
        heads = []
        for hh in range(num_heads):                        # transpose-free head loop
            q_h = qkv[:, hh * hd:(hh + 1) * hd].astype(jnp.bfloat16)
            k_h = qkv[:, D + hh * hd:D + (hh + 1) * hd].astype(jnp.bfloat16)
            v_h = qkv[:, 2 * D + hh * hd:2 * D + (hh + 1) * hd].astype(jnp.bfloat16)
            # contract on last dims: no k transpose needed
            s = jax.lax.dot_general(q_h, k_h, (((1,), (1,)), ((), ())),
                                    preferred_element_type=jnp.float32) * scale
            s = jnp.where(causal, s, neg)
            s = s - jnp.max(s, axis=-1, keepdims=True)
            p = jnp.exp(s)
            p = p * pl.reciprocal(jnp.sum(p, axis=-1, keepdims=True), approx=True)
            heads.append(jnp.dot(p.astype(jnp.bfloat16), v_h,
                                 preferred_element_type=jnp.float32))      # [L, hd]
        attn = jnp.concatenate(heads, axis=-1)             # [L, D], no relayout transposes
        attn = jnp.dot(attn.astype(jnp.bfloat16), w_out_ref[l],
                       preferred_element_type=jnp.float32) + b_out_ref[l]
        x = x + attn

        # ---- x = x + MLP(ln_2(x)), QuickGELU ------------------------------
        h = _layer_norm(x, ln2_g_ref[l], ln2_b_ref[l])
        h = jnp.dot(h.astype(jnp.bfloat16), w_fc_ref[l],
                    preferred_element_type=jnp.float32) + b_fc_ref[l]
        h = h * jax.nn.sigmoid(1.702 * h)                  # QuickGELU (f32, EUP sigmoid)
        h = jnp.dot(h.astype(jnp.bfloat16), w_proj_ref[l],
                    preferred_element_type=jnp.float32) + b_proj_ref[l]
        return x + h

    x = jax.lax.fori_loop(0, num_layers, layer_body, x, unroll=True)

    # ---- ln_final + EOT-token selection + text projection -----------------
    h = _layer_norm(x, lnf_g_ref[...], lnf_b_ref[...])                       # [L, D]
    sel = jnp.dot(onehot_ref[0], h, preferred_element_type=jnp.float32)      # [1, D]
    out = jnp.dot(sel.astype(jnp.bfloat16), proj_ref[...],
                  preferred_element_type=jnp.float32)                        # [1, E]
    o_ref[...] = out.reshape(o_ref.shape).astype(o_ref.dtype)


# ---------------------------------------------------------------------------
# Parameter init (deterministic, synthetic): stacked per-layer weights
# ---------------------------------------------------------------------------
def init_params(key):
    D, L, V, E = WIDTH, SEQ_LEN, VOCAB, EMBED_DIM
    ks = jax.random.split(key, 8)

    def rnd(k, shape, s):
        return jax.random.normal(k, shape, jnp.float32) * s

    return {
        'token_embedding': rnd(ks[0], (V, D), 0.02),
        'positional_embedding': rnd(ks[1], (L, D), 0.01),
        'ln_final_g': jnp.ones((1, D), jnp.float32),
        'ln_final_b': jnp.zeros((1, D), jnp.float32),
        'text_projection': rnd(ks[2], (D, E), D ** -0.5),
        # stacked per-layer weights: leading axis = layer index
        'ln1_g': jnp.ones((LAYERS, 1, D), jnp.float32),
        'ln1_b': jnp.zeros((LAYERS, 1, D), jnp.float32),
        'w_qkv': rnd(ks[3], (LAYERS, D, 3 * D), D ** -0.5),
        'b_qkv': jnp.zeros((LAYERS, 1, 3 * D), jnp.float32),
        'w_out': rnd(ks[4], (LAYERS, D, D), D ** -0.5),
        'b_out': jnp.zeros((LAYERS, 1, D), jnp.float32),
        'ln2_g': jnp.ones((LAYERS, 1, D), jnp.float32),
        'ln2_b': jnp.zeros((LAYERS, 1, D), jnp.float32),
        'w_fc': rnd(ks[5], (LAYERS, D, 4 * D), D ** -0.5),
        'b_fc': jnp.zeros((LAYERS, 1, 4 * D), jnp.float32),
        'w_proj': rnd(ks[6], (LAYERS, 4 * D, D), (4 * D) ** -0.5),
        'b_proj': jnp.zeros((LAYERS, 1, D), jnp.float32),
    }


def tokenize(prompts, key):
    """Synthetic deterministic tokenizer: [SOT, body..., EOT, pad...]."""
    # TODO(synk): real clip.tokenize (BPE) has no Pallas/JAX equivalent; synthesized here.
    n = len(prompts)
    body_len = SEQ_LEN - 3
    body = jax.random.randint(key, (n, body_len), 1, VOCAB - 2, dtype=jnp.int32)
    sot = jnp.full((n, 1), VOCAB - 2, jnp.int32)
    eot = jnp.full((n, 1), VOCAB - 1, jnp.int32)   # max id -> argmax finds EOT pos
    pad = jnp.zeros((n, 1), jnp.int32)
    return jnp.concatenate([sot, body, eot, pad], axis=1)   # [N, L]


# ---------------------------------------------------------------------------
# encode_text: glue (embedding gather, one-hot) + one fused pallas_call
# ---------------------------------------------------------------------------
def encode_text(tokens, params):
    N, L = tokens.shape
    D, E = WIDTH, EMBED_DIM

    # glue: gather-style embedding lookup + EOT one-hot (no tidy BlockSpec form)
    x = params['token_embedding'][tokens].astype(jnp.float32)            # [N, L, D]
    x = x + params['positional_embedding'][None, :, :]
    eot_pos = jnp.argmax(tokens, axis=-1)                                 # EOT = max id
    onehot = jax.nn.one_hot(eot_pos, L, dtype=jnp.float32)[:, None, :]    # [N, 1, L]

    def bf16(a):   # matmul operands only; LN/softmax/residual math stays f32
        return a.astype(jnp.bfloat16)

    args = (
        x,
        params['ln1_g'], params['ln1_b'], bf16(params['w_qkv']), params['b_qkv'],
        bf16(params['w_out']), params['b_out'], params['ln2_g'], params['ln2_b'],
        bf16(params['w_fc']), params['b_fc'], bf16(params['w_proj']), params['b_proj'],
        params['ln_final_g'], params['ln_final_b'], onehot,
        bf16(params['text_projection']),
    )

    def resident(a):
        # whole array, constant block index -> stays VMEM-resident across the grid
        nd = a.ndim
        return pl.BlockSpec(a.shape, lambda n, _nd=nd: (0,) * _nd)

    in_specs = [pl.BlockSpec((1, L, D), lambda n: (n, 0, 0))]            # x: per prompt
    in_specs += [resident(a) for a in args[1:15]]                        # weights / LN params
    in_specs += [pl.BlockSpec((1, 1, L), lambda n: (n, 0, 0))]           # onehot: per prompt
    in_specs += [resident(args[16])]                                     # text projection

    grid_spec = pltpu.PrefetchScalarGridSpec(
        num_scalar_prefetch=0,
        grid=(N,),                                                       # parallel over prompts
        in_specs=in_specs,
        out_specs=pl.BlockSpec((1, 1, E), lambda n: (n, 0, 0)),
    )

    out = pl.pallas_call(
        functools.partial(_clip_text_fused_kernel, num_heads=HEADS, num_layers=LAYERS),
        out_shape=jax.ShapeDtypeStruct((N, 1, E), jnp.float32),
        grid_spec=grid_spec,
        compiler_params=pltpu.CompilerParams(dimension_semantics=("parallel",)),
    )(*args)
    return out[:, 0, :]                                                  # [N, E]


def text_encoder_forward(classnames, params, tok_key):
    temp = CUSTOM_TEMPLATES['OxfordPets']
    prompts = [temp.format(c.replace('_', ' ')) for c in classnames]
    tokens = tokenize(prompts, tok_key)
    return encode_text(tokens, params)                                   # [N, EMBED_DIM]


if __name__ == "__main__":
    key = jax.random.PRNGKey(0)
    k_params, k_tok = jax.random.split(key)
    params = init_params(k_params)
    classnames = ["abyssinian_cat", "beagle"]
    text_features = text_encoder_forward(classnames, params, k_tok)
    jax.block_until_ready(text_features)
    assert text_features.shape == (N_CLASSES, EMBED_DIM)
    assert bool(jnp.all(jnp.isfinite(text_features)))
    print("KERNEL_OK")
</pallas_src>

<mosaic_0001>
module attributes {stable_mosaic.version = 11 : i64} {
  func.func @_clip_text_fused_kernel(%arg0: i32, %arg1: memref<1x8x32xf32, #tpu.memory_space<vmem>>, %arg2: memref<2x1x32xf32, #tpu.memory_space<vmem>>, %arg3: memref<2x1x32xf32, #tpu.memory_space<vmem>>, %arg4: memref<2x32x96xbf16, #tpu.memory_space<vmem>>, %arg5: memref<2x1x96xf32, #tpu.memory_space<vmem>>, %arg6: memref<2x32x32xbf16, #tpu.memory_space<vmem>>, %arg7: memref<2x1x32xf32, #tpu.memory_space<vmem>>, %arg8: memref<2x1x32xf32, #tpu.memory_space<vmem>>, %arg9: memref<2x1x32xf32, #tpu.memory_space<vmem>>, %arg10: memref<2x32x128xbf16, #tpu.memory_space<vmem>>, %arg11: memref<2x1x128xf32, #tpu.memory_space<vmem>>, %arg12: memref<2x128x32xbf16, #tpu.memory_space<vmem>>, %arg13: memref<2x1x32xf32, #tpu.memory_space<vmem>>, %arg14: memref<1x32xf32, #tpu.memory_space<vmem>>, %arg15: memref<1x32xf32, #tpu.memory_space<vmem>>, %arg16: memref<1x1x8xf32, #tpu.memory_space<vmem>>, %arg17: memref<32x32xbf16, #tpu.memory_space<vmem>>, %arg18: memref<1x1x32xf32, #tpu.memory_space<vmem>>) attributes {dimension_semantics = [#tpu.dimension_semantics<parallel>], iteration_bounds = array<i64: 2>, scalar_prefetch = 0 : i64, scratch_operands = 0 : i64, tpu.core_type = #tpu.core_type<tc>, window_params = [{transform_indices = @transform_0, window_bounds = array<i64: 1, 8, 32>}, {pipeline_mode = #tpu.pipeline_mode<synchronous>, transform_indices = @transform_1, window_bounds = array<i64: 2, 1, 32>}, {pipeline_mode = #tpu.pipeline_mode<synchronous>, transform_indices = @transform_2, window_bounds = array<i64: 2, 1, 32>}, {pipeline_mode = #tpu.pipeline_mode<synchronous>, transform_indices = @transform_3, window_bounds = array<i64: 2, 32, 96>}, {pipeline_mode = #tpu.pipeline_mode<synchronous>, transform_indices = @transform_4, window_bounds = array<i64: 2, 1, 96>}, {pipeline_mode = #tpu.pipeline_mode<synchronous>, transform_indices = @transform_5, window_bounds = array<i64: 2, 32, 32>}, {pipeline_mode = #tpu.pipeline_mode<synchronous>, transform_indices = @transform_6, window_bounds = array<i64: 2, 1, 32>}, {pipeline_mode = #tpu.pipeline_mode<synchronous>, transform_indices = @transform_7, window_bounds = array<i64: 2, 1, 32>}, {pipeline_mode = #tpu.pipeline_mode<synchronous>, transform_indices = @transform_8, window_bounds = array<i64: 2, 1, 32>}, {pipeline_mode = #tpu.pipeline_mode<synchronous>, transform_indices = @transform_9, window_bounds = array<i64: 2, 32, 128>}, {pipeline_mode = #tpu.pipeline_mode<synchronous>, transform_indices = @transform_10, window_bounds = array<i64: 2, 1, 128>}, {pipeline_mode = #tpu.pipeline_mode<synchronous>, transform_indices = @transform_11, window_bounds = array<i64: 2, 128, 32>}, {pipeline_mode = #tpu.pipeline_mode<synchronous>, transform_indices = @transform_12, window_bounds = array<i64: 2, 1, 32>}, {pipeline_mode = #tpu.pipeline_mode<synchronous>, transform_indices = @transform_13, window_bounds = array<i64: 1, 32>}, {pipeline_mode = #tpu.pipeline_mode<synchronous>, transform_indices = @transform_14, window_bounds = array<i64: 1, 32>}, {transform_indices = @transform_15, window_bounds = array<i64: 1, 1, 8>}, {pipeline_mode = #tpu.pipeline_mode<synchronous>, transform_indices = @transform_16, window_bounds = array<i64: 32, 32>}, {transform_indices = @transform_17, window_bounds = array<i64: 1, 1, 32>}]} {
    %c0 = arith.constant 0 : index
    %c0_0 = arith.constant 0 : index
    %c0_1 = arith.constant 0 : index
    %0 = vector.load %arg1[%c0, %c0_0, %c0_1] : memref<1x8x32xf32, #tpu.memory_space<vmem>>, vector<1x8x32xf32>
    %1 = vector.shape_cast %0 : vector<1x8x32xf32> to vector<8x32xf32>
    %2 = tpu.iota {dimensions = array<i32: 0>} : vector<8x8xi32>
    %3 = tpu.iota {dimensions = array<i32: 1>} : vector<8x8xi32>
    %4 = arith.cmpi sle, %3, %2 : vector<8x8xi32>
    %cst = arith.constant 0.353553385 : f32
    %cst_2 = arith.constant -1.000000e+09 : f32
    %c0_i32 = arith.constant 0 : i32
    %5 = arith.index_cast %c0_i32 : i32 to index
    %c0_3 = arith.constant 0 : index
    %c0_4 = arith.constant 0 : index
    %6 = vector.load %arg2[%5, %c0_3, %c0_4] : memref<2x1x32xf32, #tpu.memory_space<vmem>>, vector<1x1x32xf32>
    %7 = vector.shape_cast %6 : vector<1x1x32xf32> to vector<1x32xf32>
    %8 = arith.index_cast %c0_i32 : i32 to index
    %c0_5 = arith.constant 0 : index
    %c0_6 = arith.constant 0 : index
    %9 = vector.load %arg3[%8, %c0_5, %c0_6] : memref<2x1x32xf32, #tpu.memory_space<vmem>>, vector<1x1x32xf32>
    %10 = vector.shape_cast %9 : vector<1x1x32xf32> to vector<1x32xf32>
    %cst_7 = arith.constant dense<0.000000e+00> : vector<8xf32>
    %11 = vector.multi_reduction <add>, %1, %cst_7 [1] : vector<8x32xf32> to vector<8xf32>
    %12 = vector.shape_cast %11 : vector<8xf32> to vector<8x1xf32>
    %cst_8 = arith.constant 3.200000e+01 : f32
    %13 = vector.broadcast %cst_8 : f32 to vector<8x1xf32>
    %14 = arith.divf %12, %13 : vector<8x1xf32>
    %15 = vector.broadcast %14 : vector<8x1xf32> to vector<8x32xf32>
    %16 = arith.subf %1, %15 : vector<8x32xf32>
    %17 = arith.mulf %16, %16 : vector<8x32xf32>
    %cst_9 = arith.constant dense<0.000000e+00> : vector<8xf32>
    %18 = vector.multi_reduction <add>, %17, %cst_9 [1] : vector<8x32xf32> to vector<8xf32>
    %19 = vector.shape_cast %18 : vector<8xf32> to vector<8x1xf32>
    %cst_10 = arith.constant 3.200000e+01 : f32
    %20 = vector.broadcast %cst_10 : f32 to vector<8x1xf32>
    %21 = arith.divf %19, %20 : vector<8x1xf32>
    %22 = vector.broadcast %14 : vector<8x1xf32> to vector<8x32xf32>
    %23 = arith.subf %1, %22 : vector<8x32xf32>
    %cst_11 = arith.constant 9.99999974E-6 : f32
    %24 = vector.broadcast %cst_11 : f32 to vector<8x1xf32>
    %25 = arith.addf %21, %24 : vector<8x1xf32>
    %26 = math.rsqrt %25 : vector<8x1xf32>
    %27 = vector.broadcast %26 : vector<8x1xf32> to vector<8x32xf32>
    %28 = arith.mulf %23, %27 : vector<8x32xf32>
    %29 = vector.broadcast %7 : vector<1x32xf32> to vector<8x32xf32>
    %30 = arith.mulf %28, %29 : vector<8x32xf32>
    %31 = vector.broadcast %10 : vector<1x32xf32> to vector<8x32xf32>
    %32 = arith.addf %30, %31 : vector<8x32xf32>
    %33 = arith.truncf %32 : vector<8x32xf32> to vector<8x32xbf16>
    %34 = arith.index_cast %c0_i32 : i32 to index
    %c0_12 = arith.constant 0 : index
    %c0_13 = arith.constant 0 : index
    %35 = vector.load %arg4[%34, %c0_12, %c0_13] : memref<2x32x96xbf16, #tpu.memory_space<vmem>>, vector<1x32x96xbf16>
    %36 = vector.shape_cast %35 : vector<1x32x96xbf16> to vector<32x96xbf16>
    %cst_14 = arith.constant dense<0.000000e+00> : vector<8x96xf32>
    %37 = tpu.matmul %33, %36, %cst_14 {dimension_numbers = #tpu.dot_dimension_numbers<[1], [0], [0], [1], [0, 0, 1, 1], [], []>} : vector<8x32xbf16>, vector<32x96xbf16>, vector<8x96xf32> -> vector<8x96xf32>
    %38 = arith.index_cast %c0_i32 : i32 to index
    %c0_15 = arith.constant 0 : index
    %c0_16 = arith.constant 0 : index
    %39 = vector.load %arg5[%38, %c0_15, %c0_16] : memref<2x1x96xf32, #tpu.memory_space<vmem>>, vector<1x1x96xf32>
    %40 = vector.shape_cast %39 : vector<1x1x96xf32> to vector<1x96xf32>
    %41 = vector.broadcast %40 : vector<1x96xf32> to vector<8x96xf32>
    %42 = arith.addf %37, %41 : vector<8x96xf32>
    %43 = vector.extract_strided_slice %42 {offsets = [0, 0], sizes = [8, 8], strides = [1, 1]} : vector<8x96xf32> to vector<8x8xf32>
    %44 = arith.truncf %43 : vector<8x8xf32> to vector<8x8xbf16>
    %45 = vector.extract_strided_slice %42 {offsets = [0, 32], sizes = [8, 8], strides = [1, 1]} : vector<8x96xf32> to vector<8x8xf32>
    %46 = arith.truncf %45 : vector<8x8xf32> to vector<8x8xbf16>
    %47 = vector.extract_strided_slice %42 {offsets = [0, 64], sizes = [8, 8], strides = [1, 1]} : vector<8x96xf32> to vector<8x8xf32>
    %48 = arith.truncf %47 : vector<8x8xf32> to vector<8x8xbf16>
    %cst_17 = arith.constant dense<0.000000e+00> : vector<8x8xf32>
    %49 = tpu.matmul %44, %46, %cst_17 {dimension_numbers = #tpu.dot_dimension_numbers<[1], [1], [0], [0], [0, 0, 1, 0], [], []>} : vector<8x8xbf16>, vector<8x8xbf16>, vector<8x8xf32> -> vector<8x8xf32>
    %50 = vector.broadcast %cst : f32 to vector<8x8xf32>
    %51 = arith.mulf %49, %50 : vector<8x8xf32>
    %52 = vector.broadcast %cst_2 : f32 to vector<8x8xf32>
    %53 = arith.select %4, %51, %52 : vector<8x8xi1>, vector<8x8xf32>
    %cst_18 = arith.constant dense<0xFF800000> : vector<8xf32>
    %54 = vector.multi_reduction <maximumf>, %53, %cst_18 [1] : vector<8x8xf32> to vector<8xf32>
    %55 = vector.shape_cast %54 : vector<8xf32> to vector<8x1xf32>
    %56 = vector.broadcast %55 : vector<8x1xf32> to vector<8x8xf32>
    %57 = arith.subf %53, %56 : vector<8x8xf32>
    %58 = math.exp %57 : vector<8x8xf32>
    %cst_19 = arith.constant dense<0.000000e+00> : vector<8xf32>
    %59 = vector.multi_reduction <add>, %58, %cst_19 [1] : vector<8x8xf32> to vector<8xf32>
    %60 = vector.shape_cast %59 : vector<8xf32> to vector<8x1xf32>
    %61 = tpu.reciprocal %60 {approx = true} : vector<8x1xf32> -> vector<8x1xf32>
    %62 = vector.broadcast %61 : vector<8x1xf32> to vector<8x8xf32>
    %63 = arith.mulf %58, %62 : vector<8x8xf32>
    %64 = arith.truncf %63 : vector<8x8xf32> to vector<8x8xbf16>
    %cst_20 = arith.constant dense<0.000000e+00> : vector<8x8xf32>
    %65 = tpu.matmul %64, %48, %cst_20 {dimension_numbers = #tpu.dot_dimension_numbers<[1], [0], [0], [1], [0, 0, 1, 1], [], []>} : vector<8x8xbf16>, vector<8x8xbf16>, vector<8x8xf32> -> vector<8x8xf32>
    %66 = vector.extract_strided_slice %42 {offsets = [0, 8], sizes = [8, 8], strides = [1, 1]} : vector<8x96xf32> to vector<8x8xf32>
    %67 = arith.truncf %66 : vector<8x8xf32> to vector<8x8xbf16>
    %68 = vector.extract_strided_slice %42 {offsets = [0, 40], sizes = [8, 8], strides = [1, 1]} : vector<8x96xf32> to vector<8x8xf32>
    %69 = arith.truncf %68 : vector<8x8xf32> to vector<8x8xbf16>
    %70 = vector.extract_strided_slice %42 {offsets = [0, 72], sizes = [8, 8], strides = [1, 1]} : vector<8x96xf32> to vector<8x8xf32>
    %71 = arith.truncf %70 : vector<8x8xf32> to vector<8x8xbf16>
    %cst_21 = arith.constant dense<0.000000e+00> : vector<8x8xf32>
    %72 = tpu.matmul %67, %69, %cst_21 {dimension_numbers = #tpu.dot_dimension_numbers<[1], [1], [0], [0], [0, 0, 1, 0], [], []>} : vector<8x8xbf16>, vector<8x8xbf16>, vector<8x8xf32> -> vector<8x8xf32>
    %73 = vector.broadcast %cst : f32 to vector<8x8xf32>
    %74 = arith.mulf %72, %73 : vector<8x8xf32>
    %75 = vector.broadcast %cst_2 : f32 to vector<8x8xf32>
    %76 = arith.select %4, %74, %75 : vector<8x8xi1>, vector<8x8xf32>
    %cst_22 = arith.constant dense<0xFF800000> : vector<8xf32>
    %77 = vector.multi_reduction <maximumf>, %76, %cst_22 [1] : vector<8x8xf32> to vector<8xf32>
    %78 = vector.shape_cast %77 : vector<8xf32> to vector<8x1xf32>
    %79 = vector.broadcast %78 : vector<8x1xf32> to vector<8x8xf32>
    %80 = arith.subf %76, %79 : vector<8x8xf32>
    %81 = math.exp %80 : vector<8x8xf32>
    %cst_23 = arith.constant dense<0.000000e+00> : vector<8xf32>
    %82 = vector.multi_reduction <add>, %81, %cst_23 [1] : vector<8x8xf32> to vector<8xf32>
    %83 = vector.shape_cast %82 : vector<8xf32> to vector<8x1xf32>
    %84 = tpu.reciprocal %83 {approx = true} : vector<8x1xf32> -> vector<8x1xf32>
    %85 = vector.broadcast %84 : vector<8x1xf32> to vector<8x8xf32>
    %86 = arith.mulf %81, %85 : vector<8x8xf32>
    %87 = arith.truncf %86 : vector<8x8xf32> to vector<8x8xbf16>
    %cst_24 = arith.constant dense<0.000000e+00> : vector<8x8xf32>
    %88 = tpu.matmul %87, %71, %cst_24 {dimension_numbers = #tpu.dot_dimension_numbers<[1], [0], [0], [1], [0, 0, 1, 1], [], []>} : vector<8x8xbf16>, vector<8x8xbf16>, vector<8x8xf32> -> vector<8x8xf32>
    %89 = vector.extract_strided_slice %42 {offsets = [0, 16], sizes = [8, 8], strides = [1, 1]} : vector<8x96xf32> to vector<8x8xf32>
    %90 = arith.truncf %89 : vector<8x8xf32> to vector<8x8xbf16>
    %91 = vector.extract_strided_slice %42 {offsets = [0, 48], sizes = [8, 8], strides = [1, 1]} : vector<8x96xf32> to vector<8x8xf32>
    %92 = arith.truncf %91 : vector<8x8xf32> to vector<8x8xbf16>
    %93 = vector.extract_strided_slice %42 {offsets = [0, 80], sizes = [8, 8], strides = [1, 1]} : vector<8x96xf32> to vector<8x8xf32>
    %94 = arith.truncf %93 : vector<8x8xf32> to vector<8x8xbf16>
    %cst_25 = arith.constant dense<0.000000e+00> : vector<8x8xf32>
    %95 = tpu.matmul %90, %92, %cst_25 {dimension_numbers = #tpu.dot_dimension_numbers<[1], [1], [0], [0], [0, 0, 1, 0], [], []>} : vector<8x8xbf16>, vector<8x8xbf16>, vector<8x8xf32> -> vector<8x8xf32>
    %96 = vector.broadcast %cst : f32 to vector<8x8xf32>
    %97 = arith.mulf %95, %96 : vector<8x8xf32>
    %98 = vector.broadcast %cst_2 : f32 to vector<8x8xf32>
    %99 = arith.select %4, %97, %98 : vector<8x8xi1>, vector<8x8xf32>
    %cst_26 = arith.constant dense<0xFF800000> : vector<8xf32>
    %100 = vector.multi_reduction <maximumf>, %99, %cst_26 [1] : vector<8x8xf32> to vector<8xf32>
    %101 = vector.shape_cast %100 : vector<8xf32> to vector<8x1xf32>
    %102 = vector.broadcast %101 : vector<8x1xf32> to vector<8x8xf32>
    %103 = arith.subf %99, %102 : vector<8x8xf32>
    %104 = math.exp %103 : vector<8x8xf32>
    %cst_27 = arith.constant dense<0.000000e+00> : vector<8xf32>
    %105 = vector.multi_reduction <add>, %104, %cst_27 [1] : vector<8x8xf32> to vector<8xf32>
    %106 = vector.shape_cast %105 : vector<8xf32> to vector<8x1xf32>
    %107 = tpu.reciprocal %106 {approx = true} : vector<8x1xf32> -> vector<8x1xf32>
    %108 = vector.broadcast %107 : vector<8x1xf32> to vector<8x8xf32>
    %109 = arith.mulf %104, %108 : vector<8x8xf32>
    %110 = arith.truncf %109 : vector<8x8xf32> to vector<8x8xbf16>
    %cst_28 = arith.constant dense<0.000000e+00> : vector<8x8xf32>
    %111 = tpu.matmul %110, %94, %cst_28 {dimension_numbers = #tpu.dot_dimension_numbers<[1], [0], [0], [1], [0, 0, 1, 1], [], []>} : vector<8x8xbf16>, vector<8x8xbf16>, vector<8x8xf32> -> vector<8x8xf32>
    %112 = vector.extract_strided_slice %42 {offsets = [0, 24], sizes = [8, 8], strides = [1, 1]} : vector<8x96xf32> to vector<8x8xf32>
    %113 = arith.truncf %112 : vector<8x8xf32> to vector<8x8xbf16>
    %114 = vector.extract_strided_slice %42 {offsets = [0, 56], sizes = [8, 8], strides = [1, 1]} : vector<8x96xf32> to vector<8x8xf32>
    %115 = arith.truncf %114 : vector<8x8xf32> to vector<8x8xbf16>
    %116 = vector.extract_strided_slice %42 {offsets = [0, 88], sizes = [8, 8], strides = [1, 1]} : vector<8x96xf32> to vector<8x8xf32>
    %117 = arith.truncf %116 : vector<8x8xf32> to vector<8x8xbf16>
    %cst_29 = arith.constant dense<0.000000e+00> : vector<8x8xf32>
    %118 = tpu.matmul %113, %115, %cst_29 {dimension_numbers = #tpu.dot_dimension_numbers<[1], [1], [0], [0], [0, 0, 1, 0], [], []>} : vector<8x8xbf16>, vector<8x8xbf16>, vector<8x8xf32> -> vector<8x8xf32>
    %119 = vector.broadcast %cst : f32 to vector<8x8xf32>
    %120 = arith.mulf %118, %119 : vector<8x8xf32>
    %121 = vector.broadcast %cst_2 : f32 to vector<8x8xf32>
    %122 = arith.select %4, %120, %121 : vector<8x8xi1>, vector<8x8xf32>
    %cst_30 = arith.constant dense<0xFF800000> : vector<8xf32>
    %123 = vector.multi_reduction <maximumf>, %122, %cst_30 [1] : vector<8x8xf32> to vector<8xf32>
    %124 = vector.shape_cast %123 : vector<8xf32> to vector<8x1xf32>
    %125 = vector.broadcast %124 : vector<8x1xf32> to vector<8x8xf32>
    %126 = arith.subf %122, %125 : vector<8x8xf32>
    %127 = math.exp %126 : vector<8x8xf32>
    %cst_31 = arith.constant dense<0.000000e+00> : vector<8xf32>
    %128 = vector.multi_reduction <add>, %127, %cst_31 [1] : vector<8x8xf32> to vector<8xf32>
    %129 = vector.shape_cast %128 : vector<8xf32> to vector<8x1xf32>
    %130 = tpu.reciprocal %129 {approx = true} : vector<8x1xf32> -> vector<8x1xf32>
    %131 = vector.broadcast %130 : vector<8x1xf32> to vector<8x8xf32>
    %132 = arith.mulf %127, %131 : vector<8x8xf32>
    %133 = arith.truncf %132 : vector<8x8xf32> to vector<8x8xbf16>
    %cst_32 = arith.constant dense<0.000000e+00> : vector<8x8xf32>
    %134 = tpu.matmul %133, %117, %cst_32 {dimension_numbers = #tpu.dot_dimension_numbers<[1], [0], [0], [1], [0, 0, 1, 1], [], []>} : vector<8x8xbf16>, vector<8x8xbf16>, vector<8x8xf32> -> vector<8x8xf32>
    %135 = tpu.concatenate %65, %88, %111, %134 in 1 : vector<8x8xf32>, vector<8x8xf32>, vector<8x8xf32>, vector<8x8xf32> -> vector<8x32xf32>
    %136 = arith.truncf %135 : vector<8x32xf32> to vector<8x32xbf16>
    %137 = arith.index_cast %c0_i32 : i32 to index
    %c0_33 = arith.constant 0 : index
    %c0_34 = arith.constant 0 : index
    %138 = vector.load %arg6[%137, %c0_33, %c0_34] : memref<2x32x32xbf16, #tpu.memory_space<vmem>>, vector<1x32x32xbf16>
    %139 = vector.shape_cast %138 : vector<1x32x32xbf16> to vector<32x32xbf16>
    %cst_35 = arith.constant dense<0.000000e+00> : vector<8x32xf32>
    %140 = tpu.matmul %136, %139, %cst_35 {dimension_numbers = #tpu.dot_dimension_numbers<[1], [0], [0], [1], [0, 0, 1, 1], [], []>} : vector<8x32xbf16>, vector<32x32xbf16>, vector<8x32xf32> -> vector<8x32xf32>
    %141 = arith.index_cast %c0_i32 : i32 to index
    %c0_36 = arith.constant 0 : index
    %c0_37 = arith.constant 0 : index
    %142 = vector.load %arg7[%141, %c0_36, %c0_37] : memref<2x1x32xf32, #tpu.memory_space<vmem>>, vector<1x1x32xf32>
    %143 = vector.shape_cast %142 : vector<1x1x32xf32> to vector<1x32xf32>
    %144 = vector.broadcast %143 : vector<1x32xf32> to vector<8x32xf32>
    %145 = arith.addf %140, %144 : vector<8x32xf32>
    %146 = arith.addf %1, %145 : vector<8x32xf32>
    %147 = arith.index_cast %c0_i32 : i32 to index
    %c0_38 = arith.constant 0 : index
    %c0_39 = arith.constant 0 : index
    %148 = vector.load %arg8[%147, %c0_38, %c0_39] : memref<2x1x32xf32, #tpu.memory_space<vmem>>, vector<1x1x32xf32>
    %149 = vector.shape_cast %148 : vector<1x1x32xf32> to vector<1x32xf32>
    %150 = arith.index_cast %c0_i32 : i32 to index
    %c0_40 = arith.constant 0 : index
    %c0_41 = arith.constant 0 : index
    %151 = vector.load %arg9[%150, %c0_40, %c0_41] : memref<2x1x32xf32, #tpu.memory_space<vmem>>, vector<1x1x32xf32>
    %152 = vector.shape_cast %151 : vector<1x1x32xf32> to vector<1x32xf32>
    %cst_42 = arith.constant dense<0.000000e+00> : vector<8xf32>
    %153 = vector.multi_reduction <add>, %146, %cst_42 [1] : vector<8x32xf32> to vector<8xf32>
    %154 = vector.shape_cast %153 : vector<8xf32> to vector<8x1xf32>
    %cst_43 = arith.constant 3.200000e+01 : f32
    %155 = vector.broadcast %cst_43 : f32 to vector<8x1xf32>
    %156 = arith.divf %154, %155 : vector<8x1xf32>
    %157 = vector.broadcast %156 : vector<8x1xf32> to vector<8x32xf32>
    %158 = arith.subf %146, %157 : vector<8x32xf32>
    %159 = arith.mulf %158, %158 : vector<8x32xf32>
    %cst_44 = arith.constant dense<0.000000e+00> : vector<8xf32>
    %160 = vector.multi_reduction <add>, %159, %cst_44 [1] : vector<8x32xf32> to vector<8xf32>
    %161 = vector.shape_cast %160 : vector<8xf32> to vector<8x1xf32>
    %cst_45 = arith.constant 3.200000e+01 : f32
    %162 = vector.broadcast %cst_45 : f32 to vector<8x1xf32>
    %163 = arith.divf %161, %162 : vector<8x1xf32>
    %164 = vector.broadcast %156 : vector<8x1xf32> to vector<8x32xf32>
    %165 = arith.subf %146, %164 : vector<8x32xf32>
    %cst_46 = arith.constant 9.99999974E-6 : f32
    %166 = vector.broadcast %cst_46 : f32 to vector<8x1xf32>
    %167 = arith.addf %163, %166 : vector<8x1xf32>
    %168 = math.rsqrt %167 : vector<8x1xf32>
    %169 = vector.broadcast %168 : vector<8x1xf32> to vector<8x32xf32>
    %170 = arith.mulf %165, %169 : vector<8x32xf32>
    %171 = vector.broadcast %149 : vector<1x32xf32> to vector<8x32xf32>
    %172 = arith.mulf %170, %171 : vector<8x32xf32>
    %173 = vector.broadcast %152 : vector<1x32xf32> to vector<8x32xf32>
    %174 = arith.addf %172, %173 : vector<8x32xf32>
    %175 = arith.truncf %174 : vector<8x32xf32> to vector<8x32xbf16>
    %176 = arith.index_cast %c0_i32 : i32 to index
    %c0_47 = arith.constant 0 : index
    %c0_48 = arith.constant 0 : index
    %177 = vector.load %arg10[%176, %c0_47, %c0_48] : memref<2x32x128xbf16, #tpu.memory_space<vmem>>, vector<1x32x128xbf16>
    %178 = vector.shape_cast %177 : vector<1x32x128xbf16> to vector<32x128xbf16>
    %cst_49 = arith.constant dense<0.000000e+00> : vector<8x128xf32>
    %179 = tpu.matmul %175, %178, %cst_49 {dimension_numbers = #tpu.dot_dimension_numbers<[1], [0], [0], [1], [0, 0, 1, 1], [], []>} : vector<8x32xbf16>, vector<32x128xbf16>, vector<8x128xf32> -> vector<8x128xf32>
    %180 = arith.index_cast %c0_i32 : i32 to index
    %c0_50 = arith.constant 0 : index
    %c0_51 = arith.constant 0 : index
    %181 = vector.load %arg11[%180, %c0_50, %c0_51] : memref<2x1x128xf32, #tpu.memory_space<vmem>>, vector<1x1x128xf32>
    %182 = vector.shape_cast %181 : vector<1x1x128xf32> to vector<1x128xf32>
    %183 = vector.broadcast %182 : vector<1x128xf32> to vector<8x128xf32>
    %184 = arith.addf %179, %183 : vector<8x128xf32>
    %cst_52 = arith.constant 1.702000e+00 : f32
    %185 = vector.broadcast %cst_52 : f32 to vector<8x128xf32>
    %186 = arith.mulf %185, %184 : vector<8x128xf32>
    %187 = arith.negf %186 : vector<8x128xf32>
    %188 = math.exp %187 : vector<8x128xf32>
    %cst_53 = arith.constant 1.000000e+00 : f32
    %189 = vector.broadcast %cst_53 : f32 to vector<8x128xf32>
    %190 = arith.addf %189, %188 : vector<8x128xf32>
    %191 = arith.divf %189, %190 : vector<8x128xf32>
    %192 = arith.mulf %184, %191 : vector<8x128xf32>
    %193 = arith.truncf %192 : vector<8x128xf32> to vector<8x128xbf16>
    %194 = arith.index_cast %c0_i32 : i32 to index
    %c0_54 = arith.constant 0 : index
    %c0_55 = arith.constant 0 : index
    %195 = vector.load %arg12[%194, %c0_54, %c0_55] : memref<2x128x32xbf16, #tpu.memory_space<vmem>>, vector<1x128x32xbf16>
    %196 = vector.shape_cast %195 : vector<1x128x32xbf16> to vector<128x32xbf16>
    %cst_56 = arith.constant dense<0.000000e+00> : vector<8x32xf32>
    %197 = tpu.matmul %193, %196, %cst_56 {dimension_numbers = #tpu.dot_dimension_numbers<[1], [0], [0], [1], [0, 0, 1, 1], [], []>} : vector<8x128xbf16>, vector<128x32xbf16>, vector<8x32xf32> -> vector<8x32xf32>
    %198 = arith.index_cast %c0_i32 : i32 to index
    %c0_57 = arith.constant 0 : index
    %c0_58 = arith.constant 0 : index
    %199 = vector.load %arg13[%198, %c0_57, %c0_58] : memref<2x1x32xf32, #tpu.memory_space<vmem>>, vector<1x1x32xf32>
    %200 = vector.shape_cast %199 : vector<1x1x32xf32> to vector<1x32xf32>
    %201 = vector.broadcast %200 : vector<1x32xf32> to vector<8x32xf32>
    %202 = arith.addf %197, %201 : vector<8x32xf32>
    %203 = arith.addf %146, %202 : vector<8x32xf32>
    %c1_i32 = arith.constant 1 : i32
    %204 = arith.index_cast %c1_i32 : i32 to index
    %c0_59 = arith.constant 0 : index
    %c0_60 = arith.constant 0 : index
    %205 = vector.load %arg2[%204, %c0_59, %c0_60] : memref<2x1x32xf32, #tpu.memory_space<vmem>>, vector<1x1x32xf32>
    %206 = vector.shape_cast %205 : vector<1x1x32xf32> to vector<1x32xf32>
    %207 = arith.index_cast %c1_i32 : i32 to index
    %c0_61 = arith.constant 0 : index
    %c0_62 = arith.constant 0 : index
    %208 = vector.load %arg3[%207, %c0_61, %c0_62] : memref<2x1x32xf32, #tpu.memory_space<vmem>>, vector<1x1x32xf32>
    %209 = vector.shape_cast %208 : vector<1x1x32xf32> to vector<1x32xf32>
    %cst_63 = arith.constant dense<0.000000e+00> : vector<8xf32>
    %210 = vector.multi_reduction <add>, %203, %cst_63 [1] : vector<8x32xf32> to vector<8xf32>
    %211 = vector.shape_cast %210 : vector<8xf32> to vector<8x1xf32>
    %cst_64 = arith.constant 3.200000e+01 : f32
    %212 = vector.broadcast %cst_64 : f32 to vector<8x1xf32>
    %213 = arith.divf %211, %212 : vector<8x1xf32>
    %214 = vector.broadcast %213 : vector<8x1xf32> to vector<8x32xf32>
    %215 = arith.subf %203, %214 : vector<8x32xf32>
    %216 = arith.mulf %215, %215 : vector<8x32xf32>
    %cst_65 = arith.constant dense<0.000000e+00> : vector<8xf32>
    %217 = vector.multi_reduction <add>, %216, %cst_65 [1] : vector<8x32xf32> to vector<8xf32>
    %218 = vector.shape_cast %217 : vector<8xf32> to vector<8x1xf32>
    %cst_66 = arith.constant 3.200000e+01 : f32
    %219 = vector.broadcast %cst_66 : f32 to vector<8x1xf32>
    %220 = arith.divf %218, %219 : vector<8x1xf32>
    %221 = vector.broadcast %213 : vector<8x1xf32> to vector<8x32xf32>
    %222 = arith.subf %203, %221 : vector<8x32xf32>
    %cst_67 = arith.constant 9.99999974E-6 : f32
    %223 = vector.broadcast %cst_67 : f32 to vector<8x1xf32>
    %224 = arith.addf %220, %223 : vector<8x1xf32>
    %225 = math.rsqrt %224 : vector<8x1xf32>
    %226 = vector.broadcast %225 : vector<8x1xf32> to vector<8x32xf32>
    %227 = arith.mulf %222, %226 : vector<8x32xf32>
    %228 = vector.broadcast %206 : vector<1x32xf32> to vector<8x32xf32>
    %229 = arith.mulf %227, %228 : vector<8x32xf32>
    %230 = vector.broadcast %209 : vector<1x32xf32> to vector<8x32xf32>
    %231 = arith.addf %229, %230 : vector<8x32xf32>
    %232 = arith.truncf %231 : vector<8x32xf32> to vector<8x32xbf16>
    %233 = arith.index_cast %c1_i32 : i32 to index
    %c0_68 = arith.constant 0 : index
    %c0_69 = arith.constant 0 : index
    %234 = vector.load %arg4[%233, %c0_68, %c0_69] : memref<2x32x96xbf16, #tpu.memory_space<vmem>>, vector<1x32x96xbf16>
    %235 = vector.shape_cast %234 : vector<1x32x96xbf16> to vector<32x96xbf16>
    %cst_70 = arith.constant dense<0.000000e+00> : vector<8x96xf32>
    %236 = tpu.matmul %232, %235, %cst_70 {dimension_numbers = #tpu.dot_dimension_numbers<[1], [0], [0], [1], [0, 0, 1, 1], [], []>} : vector<8x32xbf16>, vector<32x96xbf16>, vector<8x96xf32> -> vector<8x96xf32>
    %237 = arith.index_cast %c1_i32 : i32 to index
    %c0_71 = arith.constant 0 : index
    %c0_72 = arith.constant 0 : index
    %238 = vector.load %arg5[%237, %c0_71, %c0_72] : memref<2x1x96xf32, #tpu.memory_space<vmem>>, vector<1x1x96xf32>
    %239 = vector.shape_cast %238 : vector<1x1x96xf32> to vector<1x96xf32>
    %240 = vector.broadcast %239 : vector<1x96xf32> to vector<8x96xf32>
    %241 = arith.addf %236, %240 : vector<8x96xf32>
    %242 = vector.extract_strided_slice %241 {offsets = [0, 0], sizes = [8, 8], strides = [1, 1]} : vector<8x96xf32> to vector<8x8xf32>
    %243 = arith.truncf %242 : vector<8x8xf32> to vector<8x8xbf16>
    %244 = vector.extract_strided_slice %241 {offsets = [0, 32], sizes = [8, 8], strides = [1, 1]} : vector<8x96xf32> to vector<8x8xf32>
    %245 = arith.truncf %244 : vector<8x8xf32> to vector<8x8xbf16>
    %246 = vector.extract_strided_slice %241 {offsets = [0, 64], sizes = [8, 8], strides = [1, 1]} : vector<8x96xf32> to vector<8x8xf32>
    %247 = arith.truncf %246 : vector<8x8xf32> to vector<8x8xbf16>
    %cst_73 = arith.constant dense<0.000000e+00> : vector<8x8xf32>
    %248 = tpu.matmul %243, %245, %cst_73 {dimension_numbers = #tpu.dot_dimension_numbers<[1], [1], [0], [0], [0, 0, 1, 0], [], []>} : vector<8x8xbf16>, vector<8x8xbf16>, vector<8x8xf32> -> vector<8x8xf32>
    %249 = vector.broadcast %cst : f32 to vector<8x8xf32>
    %250 = arith.mulf %248, %249 : vector<8x8xf32>
    %251 = vector.broadcast %cst_2 : f32 to vector<8x8xf32>
    %252 = arith.select %4, %250, %251 : vector<8x8xi1>, vector<8x8xf32>
    %cst_74 = arith.constant dense<0xFF800000> : vector<8xf32>
    %253 = vector.multi_reduction <maximumf>, %252, %cst_74 [1] : vector<8x8xf32> to vector<8xf32>
    %254 = vector.shape_cast %253 : vector<8xf32> to vector<8x1xf32>
    %255 = vector.broadcast %254 : vector<8x1xf32> to vector<8x8xf32>
    %256 = arith.subf %252, %255 : vector<8x8xf32>
    %257 = math.exp %256 : vector<8x8xf32>
    %cst_75 = arith.constant dense<0.000000e+00> : vector<8xf32>
    %258 = vector.multi_reduction <add>, %257, %cst_75 [1] : vector<8x8xf32> to vector<8xf32>
    %259 = vector.shape_cast %258 : vector<8xf32> to vector<8x1xf32>
    %260 = tpu.reciprocal %259 {approx = true} : vector<8x1xf32> -> vector<8x1xf32>
    %261 = vector.broadcast %260 : vector<8x1xf32> to vector<8x8xf32>
    %262 = arith.mulf %257, %261 : vector<8x8xf32>
    %263 = arith.truncf %262 : vector<8x8xf32> to vector<8x8xbf16>
    %cst_76 = arith.constant dense<0.000000e+00> : vector<8x8xf32>
    %264 = tpu.matmul %263, %247, %cst_76 {dimension_numbers = #tpu.dot_dimension_numbers<[1], [0], [0], [1], [0, 0, 1, 1], [], []>} : vector<8x8xbf16>, vector<8x8xbf16>, vector<8x8xf32> -> vector<8x8xf32>
    %265 = vector.extract_strided_slice %241 {offsets = [0, 8], sizes = [8, 8], strides = [1, 1]} : vector<8x96xf32> to vector<8x8xf32>
    %266 = arith.truncf %265 : vector<8x8xf32> to vector<8x8xbf16>
    %267 = vector.extract_strided_slice %241 {offsets = [0, 40], sizes = [8, 8], strides = [1, 1]} : vector<8x96xf32> to vector<8x8xf32>
    %268 = arith.truncf %267 : vector<8x8xf32> to vector<8x8xbf16>
    %269 = vector.extract_strided_slice %241 {offsets = [0, 72], sizes = [8, 8], strides = [1, 1]} : vector<8x96xf32> to vector<8x8xf32>
    %270 = arith.truncf %269 : vector<8x8xf32> to vector<8x8xbf16>
    %cst_77 = arith.constant dense<0.000000e+00> : vector<8x8xf32>
    %271 = tpu.matmul %266, %268, %cst_77 {dimension_numbers = #tpu.dot_dimension_numbers<[1], [1], [0], [0], [0, 0, 1, 0], [], []>} : vector<8x8xbf16>, vector<8x8xbf16>, vector<8x8xf32> -> vector<8x8xf32>
    %272 = vector.broadcast %cst : f32 to vector<8x8xf32>
    %273 = arith.mulf %271, %272 : vector<8x8xf32>
    %274 = vector.broadcast %cst_2 : f32 to vector<8x8xf32>
    %275 = arith.select %4, %273, %274 : vector<8x8xi1>, vector<8x8xf32>
    %cst_78 = arith.constant dense<0xFF800000> : vector<8xf32>
    %276 = vector.multi_reduction <maximumf>, %275, %cst_78 [1] : vector<8x8xf32> to vector<8xf32>
    %277 = vector.shape_cast %276 : vector<8xf32> to vector<8x1xf32>
    %278 = vector.broadcast %277 : vector<8x1xf32> to vector<8x8xf32>
    %279 = arith.subf %275, %278 : vector<8x8xf32>
    %280 = math.exp %279 : vector<8x8xf32>
    %cst_79 = arith.constant dense<0.000000e+00> : vector<8xf32>
    %281 = vector.multi_reduction <add>, %280, %cst_79 [1] : vector<8x8xf32> to vector<8xf32>
    %282 = vector.shape_cast %281 : vector<8xf32> to vector<8x1xf32>
    %283 = tpu.reciprocal %282 {approx = true} : vector<8x1xf32> -> vector<8x1xf32>
    %284 = vector.broadcast %283 : vector<8x1xf32> to vector<8x8xf32>
    %285 = arith.mulf %280, %284 : vector<8x8xf32>
    %286 = arith.truncf %285 : vector<8x8xf32> to vector<8x8xbf16>
    %cst_80 = arith.constant dense<0.000000e+00> : vector<8x8xf32>
    %287 = tpu.matmul %286, %270, %cst_80 {dimension_numbers = #tpu.dot_dimension_numbers<[1], [0], [0], [1], [0, 0, 1, 1], [], []>} : vector<8x8xbf16>, vector<8x8xbf16>, vector<8x8xf32> -> vector<8x8xf32>
    %288 = vector.extract_strided_slice %241 {offsets = [0, 16], sizes = [8, 8], strides = [1, 1]} : vector<8x96xf32> to vector<8x8xf32>
    %289 = arith.truncf %288 : vector<8x8xf32> to vector<8x8xbf16>
    %290 = vector.extract_strided_slice %241 {offsets = [0, 48], sizes = [8, 8], strides = [1, 1]} : vector<8x96xf32> to vector<8x8xf32>
    %291 = arith.truncf %290 : vector<8x8xf32> to vector<8x8xbf16>
    %292 = vector.extract_strided_slice %241 {offsets = [0, 80], sizes = [8, 8], strides = [1, 1]} : vector<8x96xf32> to vector<8x8xf32>
    %293 = arith.truncf %292 : vector<8x8xf32> to vector<8x8xbf16>
    %cst_81 = arith.constant dense<0.000000e+00> : vector<8x8xf32>
    %294 = tpu.matmul %289, %291, %cst_81 {dimension_numbers = #tpu.dot_dimension_numbers<[1], [1], [0], [0], [0, 0, 1, 0], [], []>} : vector<8x8xbf16>, vector<8x8xbf16>, vector<8x8xf32> -> vector<8x8xf32>
    %295 = vector.broadcast %cst : f32 to vector<8x8xf32>
    %296 = arith.mulf %294, %295 : vector<8x8xf32>
    %297 = vector.broadcast %cst_2 : f32 to vector<8x8xf32>
    %298 = arith.select %4, %296, %297 : vector<8x8xi1>, vector<8x8xf32>
    %cst_82 = arith.constant dense<0xFF800000> : vector<8xf32>
    %299 = vector.multi_reduction <maximumf>, %298, %cst_82 [1] : vector<8x8xf32> to vector<8xf32>
    %300 = vector.shape_cast %299 : vector<8xf32> to vector<8x1xf32>
    %301 = vector.broadcast %300 : vector<8x1xf32> to vector<8x8xf32>
    %302 = arith.subf %298, %301 : vector<8x8xf32>
    %303 = math.exp %302 : vector<8x8xf32>
    %cst_83 = arith.constant dense<0.000000e+00> : vector<8xf32>
    %304 = vector.multi_reduction <add>, %303, %cst_83 [1] : vector<8x8xf32> to vector<8xf32>
    %305 = vector.shape_cast %304 : vector<8xf32> to vector<8x1xf32>
    %306 = tpu.reciprocal %305 {approx = true} : vector<8x1xf32> -> vector<8x1xf32>
    %307 = vector.broadcast %306 : vector<8x1xf32> to vector<8x8xf32>
    %308 = arith.mulf %303, %307 : vector<8x8xf32>
    %309 = arith.truncf %308 : vector<8x8xf32> to vector<8x8xbf16>
    %cst_84 = arith.constant dense<0.000000e+00> : vector<8x8xf32>
    %310 = tpu.matmul %309, %293, %cst_84 {dimension_numbers = #tpu.dot_dimension_numbers<[1], [0], [0], [1], [0, 0, 1, 1], [], []>} : vector<8x8xbf16>, vector<8x8xbf16>, vector<8x8xf32> -> vector<8x8xf32>
    %311 = vector.extract_strided_slice %241 {offsets = [0, 24], sizes = [8, 8], strides = [1, 1]} : vector<8x96xf32> to vector<8x8xf32>
    %312 = arith.truncf %311 : vector<8x8xf32> to vector<8x8xbf16>
    %313 = vector.extract_strided_slice %241 {offsets = [0, 56], sizes = [8, 8], strides = [1, 1]} : vector<8x96xf32> to vector<8x8xf32>
    %314 = arith.truncf %313 : vector<8x8xf32> to vector<8x8xbf16>
    %315 = vector.extract_strided_slice %241 {offsets = [0, 88], sizes = [8, 8], strides = [1, 1]} : vector<8x96xf32> to vector<8x8xf32>
    %316 = arith.truncf %315 : vector<8x8xf32> to vector<8x8xbf16>
    %cst_85 = arith.constant dense<0.000000e+00> : vector<8x8xf32>
    %317 = tpu.matmul %312, %314, %cst_85 {dimension_numbers = #tpu.dot_dimension_numbers<[1], [1], [0], [0], [0, 0, 1, 0], [], []>} : vector<8x8xbf16>, vector<8x8xbf16>, vector<8x8xf32> -> vector<8x8xf32>
    %318 = vector.broadcast %cst : f32 to vector<8x8xf32>
    %319 = arith.mulf %317, %318 : vector<8x8xf32>
    %320 = vector.broadcast %cst_2 : f32 to vector<8x8xf32>
    %321 = arith.select %4, %319, %320 : vector<8x8xi1>, vector<8x8xf32>
    %cst_86 = arith.constant dense<0xFF800000> : vector<8xf32>
    %322 = vector.multi_reduction <maximumf>, %321, %cst_86 [1] : vector<8x8xf32> to vector<8xf32>
    %323 = vector.shape_cast %322 : vector<8xf32> to vector<8x1xf32>
    %324 = vector.broadcast %323 : vector<8x1xf32> to vector<8x8xf32>
    %325 = arith.subf %321, %324 : vector<8x8xf32>
    %326 = math.exp %325 : vector<8x8xf32>
    %cst_87 = arith.constant dense<0.000000e+00> : vector<8xf32>
    %327 = vector.multi_reduction <add>, %326, %cst_87 [1] : vector<8x8xf32> to vector<8xf32>
    %328 = vector.shape_cast %327 : vector<8xf32> to vector<8x1xf32>
    %329 = tpu.reciprocal %328 {approx = true} : vector<8x1xf32> -> vector<8x1xf32>
    %330 = vector.broadcast %329 : vector<8x1xf32> to vector<8x8xf32>
    %331 = arith.mulf %326, %330 : vector<8x8xf32>
    %332 = arith.truncf %331 : vector<8x8xf32> to vector<8x8xbf16>
    %cst_88 = arith.constant dense<0.000000e+00> : vector<8x8xf32>
    %333 = tpu.matmul %332, %316, %cst_88 {dimension_numbers = #tpu.dot_dimension_numbers<[1], [0], [0], [1], [0, 0, 1, 1], [], []>} : vector<8x8xbf16>, vector<8x8xbf16>, vector<8x8xf32> -> vector<8x8xf32>
    %334 = tpu.concatenate %264, %287, %310, %333 in 1 : vector<8x8xf32>, vector<8x8xf32>, vector<8x8xf32>, vector<8x8xf32> -> vector<8x32xf32>
    %335 = arith.truncf %334 : vector<8x32xf32> to vector<8x32xbf16>
    %336 = arith.index_cast %c1_i32 : i32 to index
    %c0_89 = arith.constant 0 : index
    %c0_90 = arith.constant 0 : index
    %337 = vector.load %arg6[%336, %c0_89, %c0_90] : memref<2x32x32xbf16, #tpu.memory_space<vmem>>, vector<1x32x32xbf16>
    %338 = vector.shape_cast %337 : vector<1x32x32xbf16> to vector<32x32xbf16>
    %cst_91 = arith.constant dense<0.000000e+00> : vector<8x32xf32>
    %339 = tpu.matmul %335, %338, %cst_91 {dimension_numbers = #tpu.dot_dimension_numbers<[1], [0], [0], [1], [0, 0, 1, 1], [], []>} : vector<8x32xbf16>, vector<32x32xbf16>, vector<8x32xf32> -> vector<8x32xf32>
    %340 = arith.index_cast %c1_i32 : i32 to index
    %c0_92 = arith.constant 0 : index
    %c0_93 = arith.constant 0 : index
    %341 = vector.load %arg7[%340, %c0_92, %c0_93] : memref<2x1x32xf32, #tpu.memory_space<vmem>>, vector<1x1x32xf32>
    %342 = vector.shape_cast %341 : vector<1x1x32xf32> to vector<1x32xf32>
    %343 = vector.broadcast %342 : vector<1x32xf32> to vector<8x32xf32>
    %344 = arith.addf %339, %343 : vector<8x32xf32>
    %345 = arith.addf %203, %344 : vector<8x32xf32>
    %346 = arith.index_cast %c1_i32 : i32 to index
    %c0_94 = arith.constant 0 : index
    %c0_95 = arith.constant 0 : index
    %347 = vector.load %arg8[%346, %c0_94, %c0_95] : memref<2x1x32xf32, #tpu.memory_space<vmem>>, vector<1x1x32xf32>
    %348 = vector.shape_cast %347 : vector<1x1x32xf32> to vector<1x32xf32>
    %349 = arith.index_cast %c1_i32 : i32 to index
    %c0_96 = arith.constant 0 : index
    %c0_97 = arith.constant 0 : index
    %350 = vector.load %arg9[%349, %c0_96, %c0_97] : memref<2x1x32xf32, #tpu.memory_space<vmem>>, vector<1x1x32xf32>
    %351 = vector.shape_cast %350 : vector<1x1x32xf32> to vector<1x32xf32>
    %cst_98 = arith.constant dense<0.000000e+00> : vector<8xf32>
    %352 = vector.multi_reduction <add>, %345, %cst_98 [1] : vector<8x32xf32> to vector<8xf32>
    %353 = vector.shape_cast %352 : vector<8xf32> to vector<8x1xf32>
    %cst_99 = arith.constant 3.200000e+01 : f32
    %354 = vector.broadcast %cst_99 : f32 to vector<8x1xf32>
    %355 = arith.divf %353, %354 : vector<8x1xf32>
    %356 = vector.broadcast %355 : vector<8x1xf32> to vector<8x32xf32>
    %357 = arith.subf %345, %356 : vector<8x32xf32>
    %358 = arith.mulf %357, %357 : vector<8x32xf32>
    %cst_100 = arith.constant dense<0.000000e+00> : vector<8xf32>
    %359 = vector.multi_reduction <add>, %358, %cst_100 [1] : vector<8x32xf32> to vector<8xf32>
    %360 = vector.shape_cast %359 : vector<8xf32> to vector<8x1xf32>
    %cst_101 = arith.constant 3.200000e+01 : f32
    %361 = vector.broadcast %cst_101 : f32 to vector<8x1xf32>
    %362 = arith.divf %360, %361 : vector<8x1xf32>
    %363 = vector.broadcast %355 : vector<8x1xf32> to vector<8x32xf32>
    %364 = arith.subf %345, %363 : vector<8x32xf32>
    %cst_102 = arith.constant 9.99999974E-6 : f32
    %365 = vector.broadcast %cst_102 : f32 to vector<8x1xf32>
    %366 = arith.addf %362, %365 : vector<8x1xf32>
    %367 = math.rsqrt %366 : vector<8x1xf32>
    %368 = vector.broadcast %367 : vector<8x1xf32> to vector<8x32xf32>
    %369 = arith.mulf %364, %368 : vector<8x32xf32>
    %370 = vector.broadcast %348 : vector<1x32xf32> to vector<8x32xf32>
    %371 = arith.mulf %369, %370 : vector<8x32xf32>
    %372 = vector.broadcast %351 : vector<1x32xf32> to vector<8x32xf32>
    %373 = arith.addf %371, %372 : vector<8x32xf32>
    %374 = arith.truncf %373 : vector<8x32xf32> to vector<8x32xbf16>
    %375 = arith.index_cast %c1_i32 : i32 to index
    %c0_103 = arith.constant 0 : index
    %c0_104 = arith.constant 0 : index
    %376 = vector.load %arg10[%375, %c0_103, %c0_104] : memref<2x32x128xbf16, #tpu.memory_space<vmem>>, vector<1x32x128xbf16>
    %377 = vector.shape_cast %376 : vector<1x32x128xbf16> to vector<32x128xbf16>
    %cst_105 = arith.constant dense<0.000000e+00> : vector<8x128xf32>
    %378 = tpu.matmul %374, %377, %cst_105 {dimension_numbers = #tpu.dot_dimension_numbers<[1], [0], [0], [1], [0, 0, 1, 1], [], []>} : vector<8x32xbf16>, vector<32x128xbf16>, vector<8x128xf32> -> vector<8x128xf32>
    %379 = arith.index_cast %c1_i32 : i32 to index
    %c0_106 = arith.constant 0 : index
    %c0_107 = arith.constant 0 : index
    %380 = vector.load %arg11[%379, %c0_106, %c0_107] : memref<2x1x128xf32, #tpu.memory_space<vmem>>, vector<1x1x128xf32>
    %381 = vector.shape_cast %380 : vector<1x1x128xf32> to vector<1x128xf32>
    %382 = vector.broadcast %381 : vector<1x128xf32> to vector<8x128xf32>
    %383 = arith.addf %378, %382 : vector<8x128xf32>
    %cst_108 = arith.constant 1.702000e+00 : f32
    %384 = vector.broadcast %cst_108 : f32 to vector<8x128xf32>
    %385 = arith.mulf %384, %383 : vector<8x128xf32>
    %386 = arith.negf %385 : vector<8x128xf32>
    %387 = math.exp %386 : vector<8x128xf32>
    %cst_109 = arith.constant 1.000000e+00 : f32
    %388 = vector.broadcast %cst_109 : f32 to vector<8x128xf32>
    %389 = arith.addf %388, %387 : vector<8x128xf32>
    %390 = arith.divf %388, %389 : vector<8x128xf32>
    %391 = arith.mulf %383, %390 : vector<8x128xf32>
    %392 = arith.truncf %391 : vector<8x128xf32> to vector<8x128xbf16>
    %393 = arith.index_cast %c1_i32 : i32 to index
    %c0_110 = arith.constant 0 : index
    %c0_111 = arith.constant 0 : index
    %394 = vector.load %arg12[%393, %c0_110, %c0_111] : memref<2x128x32xbf16, #tpu.memory_space<vmem>>, vector<1x128x32xbf16>
    %395 = vector.shape_cast %394 : vector<1x128x32xbf16> to vector<128x32xbf16>
    %cst_112 = arith.constant dense<0.000000e+00> : vector<8x32xf32>
    %396 = tpu.matmul %392, %395, %cst_112 {dimension_numbers = #tpu.dot_dimension_numbers<[1], [0], [0], [1], [0, 0, 1, 1], [], []>} : vector<8x128xbf16>, vector<128x32xbf16>, vector<8x32xf32> -> vector<8x32xf32>
    %397 = arith.index_cast %c1_i32 : i32 to index
    %c0_113 = arith.constant 0 : index
    %c0_114 = arith.constant 0 : index
    %398 = vector.load %arg13[%397, %c0_113, %c0_114] : memref<2x1x32xf32, #tpu.memory_space<vmem>>, vector<1x1x32xf32>
    %399 = vector.shape_cast %398 : vector<1x1x32xf32> to vector<1x32xf32>
    %400 = vector.broadcast %399 : vector<1x32xf32> to vector<8x32xf32>
    %401 = arith.addf %396, %400 : vector<8x32xf32>
    %402 = arith.addf %345, %401 : vector<8x32xf32>
    %c2_i32 = arith.constant 2 : i32
    %c0_115 = arith.constant 0 : index
    %c0_116 = arith.constant 0 : index
    %403 = vector.load %arg14[%c0_115, %c0_116] : memref<1x32xf32, #tpu.memory_space<vmem>>, vector<1x32xf32>
    %c0_117 = arith.constant 0 : index
    %c0_118 = arith.constant 0 : index
    %404 = vector.load %arg15[%c0_117, %c0_118] : memref<1x32xf32, #tpu.memory_space<vmem>>, vector<1x32xf32>
    %cst_119 = arith.constant dense<0.000000e+00> : vector<8xf32>
    %405 = vector.multi_reduction <add>, %402, %cst_119 [1] : vector<8x32xf32> to vector<8xf32>
    %406 = vector.shape_cast %405 : vector<8xf32> to vector<8x1xf32>
    %cst_120 = arith.constant 3.200000e+01 : f32
    %407 = vector.broadcast %cst_120 : f32 to vector<8x1xf32>
    %408 = arith.divf %406, %407 : vector<8x1xf32>
    %409 = vector.broadcast %408 : vector<8x1xf32> to vector<8x32xf32>
    %410 = arith.subf %402, %409 : vector<8x32xf32>
    %411 = arith.mulf %410, %410 : vector<8x32xf32>
    %cst_121 = arith.constant dense<0.000000e+00> : vector<8xf32>
    %412 = vector.multi_reduction <add>, %411, %cst_121 [1] : vector<8x32xf32> to vector<8xf32>
    %413 = vector.shape_cast %412 : vector<8xf32> to vector<8x1xf32>
    %cst_122 = arith.constant 3.200000e+01 : f32
    %414 = vector.broadcast %cst_122 : f32 to vector<8x1xf32>
    %415 = arith.divf %413, %414 : vector<8x1xf32>
    %416 = vector.broadcast %408 : vector<8x1xf32> to vector<8x32xf32>
    %417 = arith.subf %402, %416 : vector<8x32xf32>
    %cst_123 = arith.constant 9.99999974E-6 : f32
    %418 = vector.broadcast %cst_123 : f32 to vector<8x1xf32>
    %419 = arith.addf %415, %418 : vector<8x1xf32>
    %420 = math.rsqrt %419 : vector<8x1xf32>
    %421 = vector.broadcast %420 : vector<8x1xf32> to vector<8x32xf32>
    %422 = arith.mulf %417, %421 : vector<8x32xf32>
    %423 = vector.broadcast %403 : vector<1x32xf32> to vector<8x32xf32>
    %424 = arith.mulf %422, %423 : vector<8x32xf32>
    %425 = vector.broadcast %404 : vector<1x32xf32> to vector<8x32xf32>
    %426 = arith.addf %424, %425 : vector<8x32xf32>
    %c0_124 = arith.constant 0 : index
    %c0_125 = arith.constant 0 : index
    %c0_126 = arith.constant 0 : index
    %427 = vector.load %arg16[%c0_124, %c0_125, %c0_126] : memref<1x1x8xf32, #tpu.memory_space<vmem>>, vector<1x1x8xf32>
    %428 = vector.shape_cast %427 : vector<1x1x8xf32> to vector<1x8xf32>
    %cst_127 = arith.constant dense<0.000000e+00> : vector<1x32xf32>
    %429 = tpu.matmul %428, %426, %cst_127 {dimension_numbers = #tpu.dot_dimension_numbers<[1], [0], [0], [1], [0, 0, 1, 1], [], []>} : vector<1x8xf32>, vector<8x32xf32>, vector<1x32xf32> -> vector<1x32xf32>
    %430 = arith.truncf %429 : vector<1x32xf32> to vector<1x32xbf16>
    %c0_128 = arith.constant 0 : index
    %c0_129 = arith.constant 0 : index
    %431 = vector.load %arg17[%c0_128, %c0_129] : memref<32x32xbf16, #tpu.memory_space<vmem>>, vector<32x32xbf16>
    %cst_130 = arith.constant dense<0.000000e+00> : vector<1x32xf32>
    %432 = tpu.matmul %430, %431, %cst_130 {dimension_numbers = #tpu.dot_dimension_numbers<[1], [0], [0], [1], [0, 0, 1, 1], [], []>} : vector<1x32xbf16>, vector<32x32xbf16>, vector<1x32xf32> -> vector<1x32xf32>
    %433 = vector.shape_cast %432 : vector<1x32xf32> to vector<1x1x32xf32>
    %c0_131 = arith.constant 0 : index
    %c0_132 = arith.constant 0 : index
    %c0_133 = arith.constant 0 : index
    %434 = vector.load %arg18[%c0_131, %c0_132, %c0_133] : memref<1x1x32xf32, #tpu.memory_space<vmem>>, vector<1x1x32xf32>
    tpu.vector_store %arg18[%c0_131, %c0_132, %c0_133], %433 {strides = array<i32>} : memref<1x1x32xf32, #tpu.memory_space<vmem>>, vector<1x1x32xf32>,
    return
  }
  func.func @transform_0(%arg0: i32) -> (i32, i32, i32) {
    %c0_i32 = arith.constant 0 : i32
    %c0_i32_0 = arith.constant 0 : i32
    %c0_i32_1 = arith.constant 0 : i32
    return %arg0, %c0_i32, %c0_i32_0 : i32, i32, i32
  }
  func.func @transform_1(%arg0: i32) -> (i32, i32, i32) {
    %c0_i32 = arith.constant 0 : i32
    %c0_i32_0 = arith.constant 0 : i32
    %c0_i32_1 = arith.constant 0 : i32
    %c0_i32_2 = arith.constant 0 : i32
    return %c0_i32, %c0_i32_0, %c0_i32_1 : i32, i32, i32
  }
  func.func @transform_2(%arg0: i32) -> (i32, i32, i32) {
    %c0_i32 = arith.constant 0 : i32
    %c0_i32_0 = arith.constant 0 : i32
    %c0_i32_1 = arith.constant 0 : i32
    %c0_i32_2 = arith.constant 0 : i32
    return %c0_i32, %c0_i32_0, %c0_i32_1 : i32, i32, i32
  }
  func.func @transform_3(%arg0: i32) -> (i32, i32, i32) {
    %c0_i32 = arith.constant 0 : i32
    %c0_i32_0 = arith.constant 0 : i32
    %c0_i32_1 = arith.constant 0 : i32
    %c0_i32_2 = arith.constant 0 : i32
    return %c0_i32, %c0_i32_0, %c0_i32_1 : i32, i32, i32
  }
  func.func @transform_4(%arg0: i32) -> (i32, i32, i32) {
    %c0_i32 = arith.constant 0 : i32
    %c0_i32_0 = arith.constant 0 : i32
    %c0_i32_1 = arith.constant 0 : i32
    %c0_i32_2 = arith.constant 0 : i32
    return %c0_i32, %c0_i32_0, %c0_i32_1 : i32, i32, i32
  }
  func.func @transform_5(%arg0: i32) -> (i32, i32, i32) {
    %c0_i32 = arith.constant 0 : i32
    %c0_i32_0 = arith.constant 0 : i32
    %c0_i32_1 = arith.constant 0 : i32
    %c0_i32_2 = arith.constant 0 : i32
    return %c0_i32, %c0_i32_0, %c0_i32_1 : i32, i32, i32
  }
  func.func @transform_6(%arg0: i32) -> (i32, i32, i32) {
    %c0_i32 = arith.constant 0 : i32
    %c0_i32_0 = arith.constant 0 : i32
    %c0_i32_1 = arith.constant 0 : i32
    %c0_i32_2 = arith.constant 0 : i32
    return %c0_i32, %c0_i32_0, %c0_i32_1 : i32, i32, i32
  }
  func.func @transform_7(%arg0: i32) -> (i32, i32, i32) {
    %c0_i32 = arith.constant 0 : i32
    %c0_i32_0 = arith.constant 0 : i32
    %c0_i32_1 = arith.constant 0 : i32
    %c0_i32_2 = arith.constant 0 : i32
    return %c0_i32, %c0_i32_0, %c0_i32_1 : i32, i32, i32
  }
  func.func @transform_8(%arg0: i32) -> (i32, i32, i32) {
    %c0_i32 = arith.constant 0 : i32
    %c0_i32_0 = arith.constant 0 : i32
    %c0_i32_1 = arith.constant 0 : i32
    %c0_i32_2 = arith.constant 0 : i32
    return %c0_i32, %c0_i32_0, %c0_i32_1 : i32, i32, i32
  }
  func.func @transform_9(%arg0: i32) -> (i32, i32, i32) {
    %c0_i32 = arith.constant 0 : i32
    %c0_i32_0 = arith.constant 0 : i32
    %c0_i32_1 = arith.constant 0 : i32
    %c0_i32_2 = arith.constant 0 : i32
    return %c0_i32, %c0_i32_0, %c0_i32_1 : i32, i32, i32
  }
  func.func @transform_10(%arg0: i32) -> (i32, i32, i32) {
    %c0_i32 = arith.constant 0 : i32
    %c0_i32_0 = arith.constant 0 : i32
    %c0_i32_1 = arith.constant 0 : i32
    %c0_i32_2 = arith.constant 0 : i32
    return %c0_i32, %c0_i32_0, %c0_i32_1 : i32, i32, i32
  }
  func.func @transform_11(%arg0: i32) -> (i32, i32, i32) {
    %c0_i32 = arith.constant 0 : i32
    %c0_i32_0 = arith.constant 0 : i32
    %c0_i32_1 = arith.constant 0 : i32
    %c0_i32_2 = arith.constant 0 : i32
    return %c0_i32, %c0_i32_0, %c0_i32_1 : i32, i32, i32
  }
  func.func @transform_12(%arg0: i32) -> (i32, i32, i32) {
    %c0_i32 = arith.constant 0 : i32
    %c0_i32_0 = arith.constant 0 : i32
    %c0_i32_1 = arith.constant 0 : i32
    %c0_i32_2 = arith.constant 0 : i32
    return %c0_i32, %c0_i32_0, %c0_i32_1 : i32, i32, i32
  }
  func.func @transform_13(%arg0: i32) -> (i32, i32) {
    %c0_i32 = arith.constant 0 : i32
    %c0_i32_0 = arith.constant 0 : i32
    %c0_i32_1 = arith.constant 0 : i32
    return %c0_i32, %c0_i32_0 : i32, i32
  }
  func.func @transform_14(%arg0: i32) -> (i32, i32) {
    %c0_i32 = arith.constant 0 : i32
    %c0_i32_0 = arith.constant 0 : i32
    %c0_i32_1 = arith.constant 0 : i32
    return %c0_i32, %c0_i32_0 : i32, i32
  }
  func.func @transform_15(%arg0: i32) -> (i32, i32, i32) {
    %c0_i32 = arith.constant 0 : i32
    %c0_i32_0 = arith.constant 0 : i32
    %c0_i32_1 = arith.constant 0 : i32
    return %arg0, %c0_i32, %c0_i32_0 : i32, i32, i32
  }
  func.func @transform_16(%arg0: i32) -> (i32, i32) {
    %c0_i32 = arith.constant 0 : i32
    %c0_i32_0 = arith.constant 0 : i32
    %c0_i32_1 = arith.constant 0 : i32
    return %c0_i32, %c0_i32_0 : i32, i32
  }
  func.func @transform_17(%arg0: i32) -> (i32, i32, i32) {
    %c0_i32 = arith.constant 0 : i32
    %c0_i32_0 = arith.constant 0 : i32
    %c0_i32_1 = arith.constant 0 : i32
    return %arg0, %c0_i32, %c0_i32_0 : i32, i32, i32
  }
}

</mosaic_0001>

<llo_original>
// kernel: tpu_custom_call.1
$region0: #{tpu_custom_call.1}
  #allocation0 [shape = 'u32[]', space=smem, size = 0x4, offset = 0x4, fixed_abs, tag = 'smem constant byte address 0x4 - core index']
  #allocation1 [shape = 'u32[144,128]{1,0:T(1,128)}', space=vmem, size = 0x12000, scoped, tag = 'internal scratch']
  %s0 = inlined_call_operand.vmem [shape: f32[2,8,32], index: 0, kind: input, shape index: {}]
  %s1 = inlined_call_operand.vmem [shape: f32[2,1,32], index: 1, kind: input, shape index: {}]
  %s2 = inlined_call_operand.vmem [shape: f32[2,1,32], index: 2, kind: input, shape index: {}]
  %s3 = inlined_call_operand.vmem [shape: bf16[2,32,96], index: 3, kind: input, shape index: {}]
  %s4 = inlined_call_operand.vmem [shape: f32[2,1,96], index: 4, kind: input, shape index: {}]
  %s5 = inlined_call_operand.vmem [shape: bf16[2,32,32], index: 5, kind: input, shape index: {}]
  %s6 = inlined_call_operand.vmem [shape: f32[2,1,32], index: 6, kind: input, shape index: {}]
  %s7 = inlined_call_operand.vmem [shape: f32[2,1,32], index: 7, kind: input, shape index: {}]
  %s8 = inlined_call_operand.vmem [shape: f32[2,1,32], index: 8, kind: input, shape index: {}]
  %s9 = inlined_call_operand.vmem [shape: bf16[2,32,128], index: 9, kind: input, shape index: {}]
  %s10 = inlined_call_operand.vmem [shape: f32[2,1,128], index: 10, kind: input, shape index: {}]
  %s11 = inlined_call_operand.vmem [shape: bf16[2,128,32], index: 11, kind: input, shape index: {}]
  %s12 = inlined_call_operand.vmem [shape: f32[2,1,32], index: 12, kind: input, shape index: {}]
  %s13 = inlined_call_operand.vmem [shape: f32[1,32], index: 13, kind: input, shape index: {}]
  %s14 = inlined_call_operand.vmem [shape: f32[1,32], index: 14, kind: input, shape index: {}]
  %s15 = inlined_call_operand.vmem [shape: f32[2,1,8], index: 15, kind: input, shape index: {}]
  %s16 = inlined_call_operand.vmem [shape: bf16[32,32], index: 16, kind: input, shape index: {}]
  %s17 = inlined_call_operand.hbm [shape: f32[2,1,32], index: 17, kind: output, shape index: {}]
  %s18 = sld [smem:[#allocation0]]
  $region101: #{tpu_custom_call.1} parent=0
    _
  %s20 = ssub.s32 1, %s18
  %s21 = scalar_select 0, %s20, %s18
  $region1: #{tpu_custom_call.1} parent=0
    #allocation2 [shape = 'u8[1024]{0}', space=vmem, size = 0x400, scoped, tag = 'output window, operand 0']
    #allocation3 [shape = 's32[2]{0}', space=sflag, size = 0x8, scoped, tag = 'scoped memory for tpu_custom_call.1']
    %22 = vsyncpa [#allocation3], 0
    %s23 = scalar_lea.sflag [#allocation3], 1
    %24 = vsyncpa %s23, 0
    loop: start=0, step=1, limit=4
    $region2: #{tpu_custom_call.1} parent=1 // loop_pre_header
      _
    $region3: #{tpu_custom_call.1} parent=1 // loop_header
      %s26 = sphi 0, %s30
      %p27 = scmp.ge.s32.totalorder %s26, 4
      %s36 = sphi 0, %s38
      %s39 = sphi 0, %s36
      %s40 = sphi 0, %s39
      %s56 = sphi 0, %s40
      %s60 = sphi 0, %s60
      %s62 = sphi 0, %s60
      %s63 = sphi 0, %s62
      %s77 = sphi 0, %s63
      %s81 = sphi 0, %s81
      %s83 = sphi 0, %s81
      %s84 = sphi 0, %s83
      %s98 = sphi 0, %s84
      %s102 = sphi 0, %s102
      %s104 = sphi 0, %s102
      %s105 = sphi 0, %s104
      %s119 = sphi 0, %s105
      %s123 = sphi 0, %s123
      %s125 = sphi 0, %s123
      %s126 = sphi 0, %s125
      %s140 = sphi 0, %s126
      %s144 = sphi 0, %s144
      %s146 = sphi 0, %s144
      %s147 = sphi 0, %s146
      %s161 = sphi 0, %s147
      %s165 = sphi 0, %s165
      %s167 = sphi 0, %s165
      %s168 = sphi 0, %s167
      %s182 = sphi 0, %s168
      %s186 = sphi 0, %s186
      %s188 = sphi 0, %s186
      %s189 = sphi 0, %s188
      %s203 = sphi 0, %s189
      %s207 = sphi 0, %s207
      %s209 = sphi 0, %s207
      %s210 = sphi 0, %s209
      %s224 = sphi 0, %s210
      %s228 = sphi 0, %s228
      %s230 = sphi 0, %s228
      %s231 = sphi 0, %s230
      %s245 = sphi 0, %s231
      %s249 = sphi 0, %s249
      %s251 = sphi 0, %s249
      %s252 = sphi 0, %s251
      %s266 = sphi 0, %s252
      %s270 = sphi 0, %s270
      %s272 = sphi 0, %s270
      %s273 = sphi 0, %s272
      %s287 = sphi 0, %s273
      %s291 = sphi 0, %s291
      %s293 = sphi 0, %s291
      %s294 = sphi 0, %s293
      %s308 = sphi 0, %s294
      %s312 = sphi 0, %s312
      %s314 = sphi 0, %s312
      %s315 = sphi 0, %s314
      %s329 = sphi 0, %s315
      %s333 = sphi 0, %s333
      %s335 = sphi 0, %s333
      %s336 = sphi 0, %s335
      %s350 = sphi 0, %s336
      %s356 = sphi 0, %s358
      %s359 = sphi 0, %s356
      %s360 = sphi 0, %s359
      %s376 = sphi 0, %s360
      %s380 = sphi 0, %s380
      %s382 = sphi 0, %s380
      %s383 = sphi 0, %s382
      %s397 = sphi 0, %s383
      %s403 = sphi 0, %s405
      %s406 = sphi 0, %s403
      %s407 = sphi 0, %s406
      %s423 = sphi 0, %s407
    $region4: #{tpu_custom_call.1} parent=1 // loop_header_branch
      %29 = sbr.rel (%p27) target = $region8
    $region5: #{tpu_custom_call.1} parent=1 // loop_body
      %s31 = ssub.s32 %s26, 1
      %s32 = ssub.s32 %s26, 2
      %s33 = sadd.s32 %s26, 1
      %s34 = ssub.s32 %s26, %s33
      %p35 = scmp.eq.s32.totalorder %s34, 0
      %s37 = sadd.s32 %s36, 1
      %s38 = scalar_select %p35, %s36, %s37
      %p41 = pneg %p35
      %p42 = scmp.eq.s32.totalorder %s26, 1
      %p43 = por %p41, %p42
      %p44 = scmp.ne.s32.totalorder %s36, %s39
      %p45 = scmp.eq.s32.totalorder %s26, 0
      %p46 = por %p44, %p45
      %p47 = scmp.ne.s32.totalorder %s36, %s39
      %p48 = scmp.eq.s32.totalorder %s31, 1
      %p49 = por %p47, %p48
      %p50 = scmp.ne.s32.totalorder %s39, %s40
      %p51 = scmp.eq.s32.totalorder %s31, 0
      %p52 = por %p50, %p51
      %p53 = scmp.ne.s32.totalorder %s39, %s40
      %p54 = scmp.eq.s32.totalorder %s32, 1
      %p55 = por %p53, %p54
      %p57 = scmp.ne.s32.totalorder %s40, %s56
      %p58 = scmp.eq.s32.totalorder %s32, 0
      %p59 = por %p57, %p58
      %s61 = sadd.s32 %s60, 1
      %p64 = scmp.eq.s32.totalorder %s26, 1
      %p65 = scmp.ne.s32.totalorder %s60, %s62
      %p66 = scmp.eq.s32.totalorder %s26, 0
      %p67 = por %p65, %p66
      %p68 = scmp.ne.s32.totalorder %s60, %s62
      %p69 = scmp.eq.s32.totalorder %s31, 1
      %p70 = por %p68, %p69
      %p71 = scmp.ne.s32.totalorder %s62, %s63
      %p72 = scmp.eq.s32.totalorder %s31, 0
      %p73 = por %p71, %p72
      %p74 = scmp.ne.s32.totalorder %s62, %s63
      %p75 = scmp.eq.s32.totalorder %s32, 1
      %p76 = por %p74, %p75
      %p78 = scmp.ne.s32.totalorder %s63, %s77
      %p79 = scmp.eq.s32.totalorder %s32, 0
      %p80 = por %p78, %p79
      %s82 = sadd.s32 %s81, 1
      %p85 = scmp.eq.s32.totalorder %s26, 1
      %p86 = scmp.ne.s32.totalorder %s81, %s83
      %p87 = scmp.eq.s32.totalorder %s26, 0
      %p88 = por %p86, %p87
      %p89 = scmp.ne.s32.totalorder %s81, %s83
      %p90 = scmp.eq.s32.totalorder %s31, 1
      %p91 = por %p89, %p90
      %p92 = scmp.ne.s32.totalorder %s83, %s84
      %p93 = scmp.eq.s32.totalorder %s31, 0
      %p94 = por %p92, %p93
      %p95 = scmp.ne.s32.totalorder %s83, %s84
      %p96 = scmp.eq.s32.totalorder %s32, 1
      %p97 = por %p95, %p96
      %p99 = scmp.ne.s32.totalorder %s84, %s98
      %p100 = scmp.eq.s32.totalorder %s32, 0
      %p101 = por %p99, %p100
      %s103 = sadd.s32 %s102, 1
      %p106 = scmp.eq.s32.totalorder %s26, 1
      %p107 = scmp.ne.s32.totalorder %s102, %s104
      %p108 = scmp.eq.s32.totalorder %s26, 0
      %p109 = por %p107, %p108
      %p110 = scmp.ne.s32.totalorder %s102, %s104
      %p111 = scmp.eq.s32.totalorder %s31, 1
      %p112 = por %p110, %p111
      %p113 = scmp.ne.s32.totalorder %s104, %s105
      %p114 = scmp.eq.s32.totalorder %s31, 0
      %p115 = por %p113, %p114
      %p116 = scmp.ne.s32.totalorder %s104, %s105
      %p117 = scmp.eq.s32.totalorder %s32, 1
      %p118 = por %p116, %p117
      %p120 = scmp.ne.s32.totalorder %s105, %s119
      %p121 = scmp.eq.s32.totalorder %s32, 0
      %p122 = por %p120, %p121
      %s124 = sadd.s32 %s123, 1
      %p127 = scmp.eq.s32.totalorder %s26, 1
      %p128 = scmp.ne.s32.totalorder %s123, %s125
      %p129 = scmp.eq.s32.totalorder %s26, 0
      %p130 = por %p128, %p129
      %p131 = scmp.ne.s32.totalorder %s123, %s125
      %p132 = scmp.eq.s32.totalorder %s31, 1
      %p133 = por %p131, %p132
      %p134 = scmp.ne.s32.totalorder %s125, %s126
      %p135 = scmp.eq.s32.totalorder %s31, 0
      %p136 = por %p134, %p135
      %p137 = scmp.ne.s32.totalorder %s125, %s126
      %p138 = scmp.eq.s32.totalorder %s32, 1
      %p139 = por %p137, %p138
      %p141 = scmp.ne.s32.totalorder %s126, %s140
      %p142 = scmp.eq.s32.totalorder %s32, 0
      %p143 = por %p141, %p142
      %s145 = sadd.s32 %s144, 1
      %p148 = scmp.eq.s32.totalorder %s26, 1
      %p149 = scmp.ne.s32.totalorder %s144, %s146
      %p150 = scmp.eq.s32.totalorder %s26, 0
      %p151 = por %p149, %p150
      %p152 = scmp.ne.s32.totalorder %s144, %s146
      %p153 = scmp.eq.s32.totalorder %s31, 1
      %p154 = por %p152, %p153
      %p155 = scmp.ne.s32.totalorder %s146, %s147
      %p156 = scmp.eq.s32.totalorder %s31, 0
      %p157 = por %p155, %p156
      %p158 = scmp.ne.s32.totalorder %s146, %s147
      %p159 = scmp.eq.s32.totalorder %s32, 1
      %p160 = por %p158, %p159
      %p162 = scmp.ne.s32.totalorder %s147, %s161
      %p163 = scmp.eq.s32.totalorder %s32, 0
      %p164 = por %p162, %p163
      %s166 = sadd.s32 %s165, 1
      %p169 = scmp.eq.s32.totalorder %s26, 1
      %p170 = scmp.ne.s32.totalorder %s165, %s167
      %p171 = scmp.eq.s32.totalorder %s26, 0
      %p172 = por %p170, %p171
      %p173 = scmp.ne.s32.totalorder %s165, %s167
      %p174 = scmp.eq.s32.totalorder %s31, 1
      %p175 = por %p173, %p174
      %p176 = scmp.ne.s32.totalorder %s167, %s168
      %p177 = scmp.eq.s32.totalorder %s31, 0
      %p178 = por %p176, %p177
      %p179 = scmp.ne.s32.totalorder %s167, %s168
      %p180 = scmp.eq.s32.totalorder %s32, 1
      %p181 = por %p179, %p180
      %p183 = scmp.ne.s32.totalorder %s168, %s182
      %p184 = scmp.eq.s32.totalorder %s32, 0
      %p185 = por %p183, %p184
      %s187 = sadd.s32 %s186, 1
      %p190 = scmp.eq.s32.totalorder %s26, 1
      %p191 = scmp.ne.s32.totalorder %s186, %s188
      %p192 = scmp.eq.s32.totalorder %s26, 0
      %p193 = por %p191, %p192
      %p194 = scmp.ne.s32.totalorder %s186, %s188
      %p195 = scmp.eq.s32.totalorder %s31, 1
      %p196 = por %p194, %p195
      %p197 = scmp.ne.s32.totalorder %s188, %s189
      %p198 = scmp.eq.s32.totalorder %s31, 0
      %p199 = por %p197, %p198
      %p200 = scmp.ne.s32.totalorder %s188, %s189
      %p201 = scmp.eq.s32.totalorder %s32, 1
      %p202 = por %p200, %p201
      %p204 = scmp.ne.s32.totalorder %s189, %s203
      %p205 = scmp.eq.s32.totalorder %s32, 0
      %p206 = por %p204, %p205
      %s208 = sadd.s32 %s207, 1
      %p211 = scmp.eq.s32.totalorder %s26, 1
      %p212 = scmp.ne.s32.totalorder %s207, %s209
      %p213 = scmp.eq.s32.totalorder %s26, 0
      %p214 = por %p212, %p213
      %p215 = scmp.ne.s32.totalorder %s207, %s209
      %p216 = scmp.eq.s32.totalorder %s31, 1
      %p217 = por %p215, %p216
      %p218 = scmp.ne.s32.totalorder %s209, %s210
      %p219 = scmp.eq.s32.totalorder %s31, 0
      %p220 = por %p218, %p219
      %p221 = scmp.ne.s32.totalorder %s209, %s210
      %p222 = scmp.eq.s32.totalorder %s32, 1
      %p223 = por %p221, %p222
      %p225 = scmp.ne.s32.totalorder %s210, %s224
      %p226 = scmp.eq.s32.totalorder %s32, 0
      %p227 = por %p225, %p226
      %s229 = sadd.s32 %s228, 1
      %p232 = scmp.eq.s32.totalorder %s26, 1
      %p233 = scmp.ne.s32.totalorder %s228, %s230
      %p234 = scmp.eq.s32.totalorder %s26, 0
      %p235 = por %p233, %p234
      %p236 = scmp.ne.s32.totalorder %s228, %s230
      %p237 = scmp.eq.s32.totalorder %s31, 1
      %p238 = por %p236, %p237
      %p239 = scmp.ne.s32.totalorder %s230, %s231
      %p240 = scmp.eq.s32.totalorder %s31, 0
      %p241 = por %p239, %p240
      %p242 = scmp.ne.s32.totalorder %s230, %s231
      %p243 = scmp.eq.s32.totalorder %s32, 1
      %p244 = por %p242, %p243
      %p246 = scmp.ne.s32.totalorder %s231, %s245
      %p247 = scmp.eq.s32.totalorder %s32, 0
      %p248 = por %p246, %p247
      %s250 = sadd.s32 %s249, 1
      %p253 = scmp.eq.s32.totalorder %s26, 1
      %p254 = scmp.ne.s32.totalorder %s249, %s251
      %p255 = scmp.eq.s32.totalorder %s26, 0
      %p256 = por %p254, %p255
      %p257 = scmp.ne.s32.totalorder %s249, %s251
      %p258 = scmp.eq.s32.totalorder %s31, 1
      %p259 = por %p257, %p258
      %p260 = scmp.ne.s32.totalorder %s251, %s252
      %p261 = scmp.eq.s32.totalorder %s31, 0
      %p262 = por %p260, %p261
      %p263 = scmp.ne.s32.totalorder %s251, %s252
      %p264 = scmp.eq.s32.totalorder %s32, 1
      %p265 = por %p263, %p264
      %p267 = scmp.ne.s32.totalorder %s252, %s266
      %p268 = scmp.eq.s32.totalorder %s32, 0
      %p269 = por %p267, %p268
      %s271 = sadd.s32 %s270, 1
      %p274 = scmp.eq.s32.totalorder %s26, 1
      %p275 = scmp.ne.s32.totalorder %s270, %s272
      %p276 = scmp.eq.s32.totalorder %s26, 0
      %p277 = por %p275, %p276
      %p278 = scmp.ne.s32.totalorder %s270, %s272
      %p279 = scmp.eq.s32.totalorder %s31, 1
      %p280 = por %p278, %p279
      %p281 = scmp.ne.s32.totalorder %s272, %s273
      %p282 = scmp.eq.s32.totalorder %s31, 0
      %p283 = por %p281, %p282
      %p284 = scmp.ne.s32.totalorder %s272, %s273
      %p285 = scmp.eq.s32.totalorder %s32, 1
      %p286 = por %p284, %p285
      %p288 = scmp.ne.s32.totalorder %s273, %s287
      %p289 = scmp.eq.s32.totalorder %s32, 0
      %p290 = por %p288, %p289
      %s292 = sadd.s32 %s291, 1
      %p295 = scmp.eq.s32.totalorder %s26, 1
      %p296 = scmp.ne.s32.totalorder %s291, %s293
      %p297 = scmp.eq.s32.totalorder %s26, 0
      %p298 = por %p296, %p297
      %p299 = scmp.ne.s32.totalorder %s291, %s293
      %p300 = scmp.eq.s32.totalorder %s31, 1
      %p301 = por %p299, %p300
      %p302 = scmp.ne.s32.totalorder %s293, %s294
      %p303 = scmp.eq.s32.totalorder %s31, 0
      %p304 = por %p302, %p303
      %p305 = scmp.ne.s32.totalorder %s293, %s294
      %p306 = scmp.eq.s32.totalorder %s32, 1
      %p307 = por %p305, %p306
      %p309 = scmp.ne.s32.totalorder %s294, %s308
      %p310 = scmp.eq.s32.totalorder %s32, 0
      %p311 = por %p309, %p310
      %s313 = sadd.s32 %s312, 1
      %p316 = scmp.eq.s32.totalorder %s26, 1
      %p317 = scmp.ne.s32.totalorder %s312, %s314
      %p318 = scmp.eq.s32.totalorder %s26, 0
      %p319 = por %p317, %p318
      %p320 = scmp.ne.s32.totalorder %s312, %s314
      %p321 = scmp.eq.s32.totalorder %s31, 1
      %p322 = por %p320, %p321
      %p323 = scmp.ne.s32.totalorder %s314, %s315
      %p324 = scmp.eq.s32.totalorder %s31, 0
      %p325 = por %p323, %p324
      %p326 = scmp.ne.s32.totalorder %s314, %s315
      %p327 = scmp.eq.s32.totalorder %s32, 1
      %p328 = por %p326, %p327
      %p330 = scmp.ne.s32.totalorder %s315, %s329
      %p331 = scmp.eq.s32.totalorder %s32, 0
      %p332 = por %p330, %p331
      %s334 = sadd.s32 %s333, 1
      %p337 = scmp.eq.s32.totalorder %s26, 1
      %p338 = scmp.ne.s32.totalorder %s333, %s335
      %p339 = scmp.eq.s32.totalorder %s26, 0
      %p340 = por %p338, %p339
      %p341 = scmp.ne.s32.totalorder %s333, %s335
      %p342 = scmp.eq.s32.totalorder %s31, 1
      %p343 = por %p341, %p342
      %p344 = scmp.ne.s32.totalorder %s335, %s336
      %p345 = scmp.eq.s32.totalorder %s31, 0
      %p346 = por %p344, %p345
      %p347 = scmp.ne.s32.totalorder %s335, %s336
      %p348 = scmp.eq.s32.totalorder %s32, 1
      %p349 = por %p347, %p348
      %p351 = scmp.ne.s32.totalorder %s336, %s350
      %p352 = scmp.eq.s32.totalorder %s32, 0
      %p353 = por %p351, %p352
      %s354 = ssub.s32 %s26, %s33
      %p355 = scmp.eq.s32.totalorder %s354, 0
      %s357 = sadd.s32 %s356, 1
      %s358 = scalar_select %p355, %s356, %s357
      %p361 = pneg %p355
      %p362 = scmp.eq.s32.totalorder %s26, 1
      %p363 = por %p361, %p362
      %p364 = scmp.ne.s32.totalorder %s356, %s359
      %p365 = scmp.eq.s32.totalorder %s26, 0
      %p366 = por %p364, %p365
      %p367 = scmp.ne.s32.totalorder %s356, %s359
      %p368 = scmp.eq.s32.totalorder %s31, 1
      %p369 = por %p367, %p368
      %p370 = scmp.ne.s32.totalorder %s359, %s360
      %p371 = scmp.eq.s32.totalorder %s31, 0
      %p372 = por %p370, %p371
      %p373 = scmp.ne.s32.totalorder %s359, %s360
      %p374 = scmp.eq.s32.totalorder %s32, 1
      %p375 = por %p373, %p374
      %p377 = scmp.ne.s32.totalorder %s360, %s376
      %p378 = scmp.eq.s32.totalorder %s32, 0
      %p379 = por %p377, %p378
      %s381 = sadd.s32 %s380, 1
      %p384 = scmp.eq.s32.totalorder %s26, 1
      %p385 = scmp.ne.s32.totalorder %s380, %s382
      %p386 = scmp.eq.s32.totalorder %s26, 0
      %p387 = por %p385, %p386
      %p388 = scmp.ne.s32.totalorder %s380, %s382
      %p389 = scmp.eq.s32.totalorder %s31, 1
      %p390 = por %p388, %p389
      %p391 = scmp.ne.s32.totalorder %s382, %s383
      %p392 = scmp.eq.s32.totalorder %s31, 0
      %p393 = por %p391, %p392
      %p394 = scmp.ne.s32.totalorder %s382, %s383
      %p395 = scmp.eq.s32.totalorder %s32, 1
      %p396 = por %p394, %p395
      %p398 = scmp.ne.s32.totalorder %s383, %s397
      %p399 = scmp.eq.s32.totalorder %s32, 0
      %p400 = por %p398, %p399
      %s401 = ssub.s32 %s26, %s33
      %p402 = scmp.eq.s32.totalorder %s401, 0
      %s404 = sadd.s32 %s403, 1
      %s405 = scalar_select %p402, %s403, %s404
      %p408 = pneg %p402
      %p409 = scmp.eq.s32.totalorder %s26, 1
      %p410 = por %p408, %p409
      %p411 = scmp.ne.s32.totalorder %s403, %s406
      %p412 = scmp.eq.s32.totalorder %s26, 0
      %p413 = por %p411, %p412
      %p414 = scmp.ne.s32.totalorder %s403, %s406
      %p415 = scmp.eq.s32.totalorder %s31, 1
      %p416 = por %p414, %p415
      %p417 = scmp.ne.s32.totalorder %s406, %s407
      %p418 = scmp.eq.s32.totalorder %s31, 0
      %p419 = por %p417, %p418
      %p420 = scmp.ne.s32.totalorder %s406, %s407
      %p421 = scmp.eq.s32.totalorder %s32, 1
      %p422 = por %p420, %p421
      %p424 = scmp.ne.s32.totalorder %s407, %s423
      %p425 = scmp.eq.s32.totalorder %s32, 0
      %p426 = por %p424, %p425
      %p427 = scmp.le.s32.totalorder 1, %s26
      %p428 = scmp.lt.s32.totalorder %s26, 3
      %p429 = pnand %p427, %p428
      %p430 = pneg %p429
      // Predicated region
      $region9: #{tpu_custom_call.1} parent=5 // pred_check
        _
      $region10: #{tpu_custom_call.1} parent=5 // pred_check_branch
        %432 = sbr.rel (%p429) target = $region12
      $region11: #{tpu_custom_call.1} parent=5 // pred_region
        %s433 = ssub.s32 %s26, 1
        // Predicated region
        $region13: #{tpu_custom_call.1} parent=11 // pred_check
          %p434 = pneg %p73
        $region14: #{tpu_custom_call.1} parent=11 // pred_check_branch
          %436 = sbr.rel (%p434) target = $region16
        $region15: #{tpu_custom_call.1} parent=11 // pred_region
          _
        $region16: #{tpu_custom_call.1} parent=11 // pred_fallthru
          _
        // Predicated region
        $region17: #{tpu_custom_call.1} parent=11 // pred_check
          %p437 = pneg %p94
        $region18: #{tpu_custom_call.1} parent=11 // pred_check_branch
          %439 = sbr.rel (%p437) target = $region20
        $region19: #{tpu_custom_call.1} parent=11 // pred_region
          _
        $region20: #{tpu_custom_call.1} parent=11 // pred_fallthru
          _
        // Predicated region
        $region21: #{tpu_custom_call.1} parent=11 // pred_check
          %p440 = pneg %p115
        $region22: #{tpu_custom_call.1} parent=11 // pred_check_branch
          %442 = sbr.rel (%p440) target = $region24
        $region23: #{tpu_custom_call.1} parent=11 // pred_region
          _
        $region24: #{tpu_custom_call.1} parent=11 // pred_fallthru
          _
        // Predicated region
        $region25: #{tpu_custom_call.1} parent=11 // pred_check
          %p443 = pneg %p136
        $region26: #{tpu_custom_call.1} parent=11 // pred_check_branch
          %445 = sbr.rel (%p443) target = $region28
        $region27: #{tpu_custom_call.1} parent=11 // pred_region
          _
        $region28: #{tpu_custom_call.1} parent=11 // pred_fallthru
          _
        // Predicated region
        $region29: #{tpu_custom_call.1} parent=11 // pred_check
          %p446 = pneg %p157
        $region30: #{tpu_custom_call.1} parent=11 // pred_check_branch
          %448 = sbr.rel (%p446) target = $region32
        $region31: #{tpu_custom_call.1} parent=11 // pred_region
          _
        $region32: #{tpu_custom_call.1} parent=11 // pred_fallthru
          _
        // Predicated region
        $region33: #{tpu_custom_call.1} parent=11 // pred_check
          %p449 = pneg %p178
        $region34: #{tpu_custom_call.1} parent=11 // pred_check_branch
          %451 = sbr.rel (%p449) target = $region36
        $region35: #{tpu_custom_call.1} parent=11 // pred_region
          _
        $region36: #{tpu_custom_call.1} parent=11 // pred_fallthru
          _
        // Predicated region
        $region37: #{tpu_custom_call.1} parent=11 // pred_check
          %p452 = pneg %p199
        $region38: #{tpu_custom_call.1} parent=11 // pred_check_branch
          %454 = sbr.rel (%p452) target = $region40
        $region39: #{tpu_custom_call.1} parent=11 // pred_region
          _
        $region40: #{tpu_custom_call.1} parent=11 // pred_fallthru
          _
        // Predicated region
        $region41: #{tpu_custom_call.1} parent=11 // pred_check
          %p455 = pneg %p220
        $region42: #{tpu_custom_call.1} parent=11 // pred_check_branch
          %457 = sbr.rel (%p455) target = $region44
        $region43: #{tpu_custom_call.1} parent=11 // pred_region
          _
        $region44: #{tpu_custom_call.1} parent=11 // pred_fallthru
          _
        // Predicated region
        $region45: #{tpu_custom_call.1} parent=11 // pred_check
          %p458 = pneg %p241
        $region46: #{tpu_custom_call.1} parent=11 // pred_check_branch
          %460 = sbr.rel (%p458) target = $region48
        $region47: #{tpu_custom_call.1} parent=11 // pred_region
          _
        $region48: #{tpu_custom_call.1} parent=11 // pred_fallthru
          _
        // Predicated region
        $region49: #{tpu_custom_call.1} parent=11 // pred_check
          %p461 = pneg %p262
        $region50: #{tpu_custom_call.1} parent=11 // pred_check_branch
          %463 = sbr.rel (%p461) target = $region52
        $region51: #{tpu_custom_call.1} parent=11 // pred_region
          _
        $region52: #{tpu_custom_call.1} parent=11 // pred_fallthru
          _
        // Predicated region
        $region53: #{tpu_custom_call.1} parent=11 // pred_check
          %p464 = pneg %p283
        $region54: #{tpu_custom_call.1} parent=11 // pred_check_branch
          %466 = sbr.rel (%p464) target = $region56
        $region55: #{tpu_custom_call.1} parent=11 // pred_region
          _
        $region56: #{tpu_custom_call.1} parent=11 // pred_fallthru
          _
        // Predicated region
        $region57: #{tpu_custom_call.1} parent=11 // pred_check
          %p467 = pneg %p304
        $region58: #{tpu_custom_call.1} parent=11 // pred_check_branch
          %469 = sbr.rel (%p467) target = $region60
        $region59: #{tpu_custom_call.1} parent=11 // pred_region
          _
        $region60: #{tpu_custom_call.1} parent=11 // pred_fallthru
          _
        // Predicated region
        $region61: #{tpu_custom_call.1} parent=11 // pred_check
          %p470 = pneg %p325
        $region62: #{tpu_custom_call.1} parent=11 // pred_check_branch
          %472 = sbr.rel (%p470) target = $region64
        $region63: #{tpu_custom_call.1} parent=11 // pred_region
          _
        $region64: #{tpu_custom_call.1} parent=11 // pred_fallthru
          _
        // Predicated region
        $region65: #{tpu_custom_call.1} parent=11 // pred_check
          %p473 = pneg %p346
        $region66: #{tpu_custom_call.1} parent=11 // pred_check_branch
          %475 = sbr.rel (%p473) target = $region68
        $region67: #{tpu_custom_call.1} parent=11 // pred_region
          _
        $region68: #{tpu_custom_call.1} parent=11 // pred_fallthru
          _
        // Predicated region
        $region69: #{tpu_custom_call.1} parent=11 // pred_check
          %p476 = pneg %p393
        $region70: #{tpu_custom_call.1} parent=11 // pred_check_branch
          %478 = sbr.rel (%p476) target = $region72
        $region71: #{tpu_custom_call.1} parent=11 // pred_region
          _
        $region72: #{tpu_custom_call.1} parent=11 // pred_fallthru
          _
      $region12: #{tpu_custom_call.1} parent=5 // pred_fallthru
        _
      %p479 = scmp.lt.s32.totalorder %s26, 2
      // Predicated region
      $region73: #{tpu_custom_call.1} parent=5 // pred_check
        %p480 = pneg %p479
      $region74: #{tpu_custom_call.1} parent=5 // pred_check_branch
        %482 = sbr.rel (%p480) target = $region76
      $region75: #{tpu_custom_call.1} parent=5 // pred_region
        // Predicated region
        $region77: #{tpu_custom_call.1} parent=75 // pred_check
          %p483 = pneg %p46
        $region78: #{tpu_custom_call.1} parent=75 // pred_check_branch
          %485 = sbr.rel (%p483) target = $region80
        $region79: #{tpu_custom_call.1} parent=75 // pred_region
          %p486 = scmp.lt.s32.totalorder %s26, 1
          %s487 = scalar_select %p486, %s26, 1
          %s488 = smul.addr %s487, 8
          %s489 = scalar_lea.vmem %s0, %s488
        $region80: #{tpu_custom_call.1} parent=75 // pred_fallthru
          _
        // Predicated region
        $region81: #{tpu_custom_call.1} parent=75 // pred_check
          %p490 = pneg %p366
        $region82: #{tpu_custom_call.1} parent=75 // pred_check_branch
          %492 = sbr.rel (%p490) target = $region84
        $region83: #{tpu_custom_call.1} parent=75 // pred_region
          %p493 = scmp.lt.s32.totalorder %s26, 1
          %s494 = scalar_select %p493, %s26, 1
          %s495 = scalar_lea.vmem %s15, %s494
        $region84: #{tpu_custom_call.1} parent=75 // pred_fallthru
          _
      $region76: #{tpu_custom_call.1} parent=5 // pred_fallthru
        _
      %p496 = scmp.le.s32.totalorder 1, %s26
      %p497 = scmp.lt.s32.totalorder %s26, 3
      %p498 = pnand %p496, %p497
      %p499 = pneg %p498
      // Predicated region
      $region85: #{tpu_custom_call.1} parent=5 // pred_check
        _
      $region86: #{tpu_custom_call.1} parent=5 // pred_check_branch
        %501 = sbr.rel (%p498) target = $region88
      $region87: #{tpu_custom_call.1} parent=5 // pred_region
        %s502 = ssub.s32 %s26, 1
        %p503 = scmp.lt.s32.totalorder %s31, 1
        %s504 = scalar_select %p503, %s31, 1
        %s505 = smul.addr %s504, 8
        %s506 = scalar_lea.vmem %s0, %s505
        %p507 = pneg %p52
        %p508 = pneg %p49
        %p509 = pneg %p73
        %p510 = pneg %p70
        %p511 = pneg %p94
        %p512 = pneg %p91
        %p513 = pneg %p115
        %p514 = pneg %p112
        %p515 = pneg %p136
        %p516 = pneg %p133
        %p517 = pneg %p157
        %p518 = pneg %p154
        %p519 = pneg %p178
        %p520 = pneg %p175
        %p521 = pneg %p199
        %p522 = pneg %p196
        %p523 = pneg %p220
        %p524 = pneg %p217
        %p525 = pneg %p241
        %p526 = pneg %p238
        %p527 = pneg %p262
        %p528 = pneg %p259
        %p529 = pneg %p283
        %p530 = pneg %p280
        %p531 = pneg %p304
        %p532 = pneg %p301
        %p533 = pneg %p325
        %p534 = pneg %p322
        %p535 = pneg %p346
        %p536 = pneg %p343
        %p537 = scmp.lt.s32.totalorder %s31, 1
        %s538 = scalar_select %p537, %s31, 1
        %s539 = scalar_lea.vmem %s15, %s538
        %p540 = pneg %p372
        %p541 = pneg %p369
        %p542 = pneg %p393
        %p543 = pneg %p390
        %p544 = pneg %p419
        %p545 = pneg %p416
        %s546 = sand.u32 %s406, 1
        %s547 = scalar_lea.sflag [#allocation3], %s546
        %s548 = sand.u32 %s406, 1
        %s549 = scalar_lea.vmem [#allocation2], %s548
        %p550 = scmp.lt.s32.totalorder %s31, 1
        %s551 = scalar_select %p550, %s31, 1
        %s552 = smul.addr %s551, 8
        %s553 = scalar_lea.vmem %s0, %s552
        %p554 = scmp.lt.s32.totalorder %s31, 1
        %s555 = scalar_select %p554, %s31, 1
        %s556 = scalar_lea.vmem %s15, %s555
        %v558 = vld [vmem:[%s553] sm:$0xff]
        %v559 = vlaneseq
        %v560 = vshrl.u32 %v559, 7
        %v561 = vlaneseq
        %v562 = vand.u32 %v561, 127
        %vm563 = vcmp.le.s32.totalorder %v562, %v560
        %v564 = vld [vmem:[%s1] sm:$0x1]
        %v565 = vld [vmem:[%s2] sm:$0x1]
        %vm566 = vcmask 261120
        %v567 = vsel %vm566, %v558, 0.0
        %568 = vadd.xlane.f32.xlu0 %v567
        %v569 = vpop.xlane.xlu0 %568
        %v570 = vrcp.pop 32.0
        %v571 = vmul.f32 %v569, %v570
        %v572 = vsub.f32 %v558, %v571
        %v573 = vmul.f32 %v572, %v572
        %v574 = vsel %vm566, %v573, 0.0
        %575 = vadd.xlane.f32.xlu0 %v574
        %v576 = vpop.xlane.xlu0 %575
        %v577 = vmul.f32 %v576, %v570
        %v578 = vadd.f32 %v577, 1e-05
        %v579 = vrsqrt.pop %v578
        %v580 = vmul.f32 %v572, %v579
        %v582 = vlaneseq
        %v583 = vshrl.u32 %v582, 7
        %v584 = vsub.s32 0, %v583
        %v585 = vrot.slane %v564, %v584
        %v587 = vmul.f32 %v580, %v585
        %v589 = vlaneseq
        %v590 = vshrl.u32 %v589, 7
        %v591 = vsub.s32 0, %v590
        %v592 = vrot.slane %v565, %v591
        %v594 = vadd.f32 %v587, %v592
        %v595 = vpack.c.bf16 %v594, %v594
        %v596 = vld [vmem:[%s3] sm:$0xf]
        %v597 = vld [vmem:[%s3 + $0x4] sm:$0xf]
        %v598 = vld [vmem:[%s3 + $0x8] sm:$0xf]
        %v599 = vld [vmem:[%s3 + $0xc] sm:$0xf]
        %v600 = vld [vmem:[%s4] sm:$0x1]
        %v602 = vlaneseq
        %v603 = vshrl.u32 %v602, 7
        %v604 = vsub.s32 0, %v603
        %v605 = vrot.slane %v600, %v604
        %v611 = vunpack.c.l.b16 %v596
        %v612 = vunpack.c.l.b16 %v597
        %v613 = vunpack.c.l.b16 %v598
        %v614 = vunpack.c.l.b16 %v599
        %v615 = vpack.c.b16 %v612, %v611
        %v616 = vpack.c.b16 %v614, %v613
        %v620 = vsel %vm566, %v595, 0
        %622 = vmatprep.subr.bf16.mxu0 0
        %623 = vmatpush1.bf16.msra.mxu0 %v615
        %624 = vmatprep.subr.bf16.mxu0 0
        %625 = vmatpush1.bf16.msra.mxu0 %v616
        %626 = vmatprep.subr.bf16.mxu0 0
        %627 = vmatpush1.bf16.msra.mxu0 0
        %628 = vmatprep.subr.bf16.mxu0 0
        %629 = vmatpush1.bf16.msra.mxu0 0
        %630 = vmatprep.subr.bf16.mxu0 0
        %631 = vmatpush1.bf16.msra.mxu0 0
        %632 = vmatprep.subr.bf16.mxu0 0
        %633 = vmatpush1.bf16.msra.mxu0 0
        %634 = vmatprep.subr.bf16.mxu0 0
        %635 = vmatpush1.bf16.msra.mxu0 0
        %636 = vmatprep.subr.bf16.mxu0 0
        %637 = vmatpush1.bf16.msra.mxu0 0
        %638 = vmatprep.subr.bf16.mxu0 0
        %639 = vmatpush1.bf16.msra.mxu0 0
        %640 = vmatprep.subr.bf16.mxu0 0
        %641 = vmatpush1.bf16.msra.mxu0 0
        %642 = vmatprep.subr.bf16.mxu0 0
        %643 = vmatpush1.bf16.msra.mxu0 0
        %644 = vmatprep.subr.bf16.mxu0 0
        %645 = vmatpush1.bf16.msra.mxu0 0
        %646 = vmatprep.subr.bf16.mxu0 0
        %647 = vmatpush1.bf16.msra.mxu0 0
        %648 = vmatprep.subr.bf16.mxu0 0
        %649 = vmatpush1.bf16.msra.mxu0 0
        %650 = vmatprep.subr.bf16.mxu0 0
        %651 = vmatpush1.bf16.msra.mxu0 0
        %652 = vmatprep.subr.bf16.mxu0 0
        %653 = vmatpush1.bf16.msra.mxu0 0
        %654 = vmatprep.mubr.bf16.mxu0 0
        %655 = vmatmul.mubr.bf16.gmra.mrb[0].mxu0 %v620
        %v656 = vpop.f32.mrb[0].mxu0
        %v657 = vadd.f32 %v605, %v656
        %v658 = vpop.f32.mrb[0].mxu0
        %v659 = vpop.f32.mrb[0].mxu0
        %v660 = vpop.f32.mrb[0].mxu0
        %661 = vdwg.mxu0
        %v662 = vpack.c.bf16 %v657, %v657
        %664 = vrot.lane.b32.xlu0 %v662, 96
        %v665 = vpop.permute.xlu0 %664
        %vm666 = vcmask 64512
        %v668 = vsel %vm666, %v662, 0
        %v671 = vsel %vm666, %v665, 0
        %673 = vmatprep.subr.bf16.mxu0 0
        %674 = vmatpush1.bf16.xpose.msra.mxu0 %v671
        %675 = vmatprep.subr.bf16.mxu0 0
        %676 = vmatpush1.bf16.xpose.msra.mxu0 0
        %677 = vmatprep.subr.bf16.mxu0 0
        %678 = vmatpush1.bf16.xpose.msra.mxu0 0
        %679 = vmatprep.subr.bf16.mxu0 0
        %680 = vmatpush1.bf16.xpose.msra.mxu0 0
        %681 = vmatprep.subr.bf16.mxu0 0
        %682 = vmatpush1.bf16.xpose.msra.mxu0 0
        %683 = vmatprep.subr.bf16.mxu0 0
        %684 = vmatpush1.bf16.xpose.msra.mxu0 0
        %685 = vmatprep.subr.bf16.mxu0 0
        %686 = vmatpush1.bf16.xpose.msra.mxu0 0
        %687 = vmatprep.subr.bf16.mxu0 0
        %688 = vmatpush1.bf16.xpose.msra.mxu0 0
        %689 = vmatprep.subr.bf16.mxu0 0
        %690 = vmatpush1.bf16.xpose.msra.mxu0 0
        %691 = vmatprep.subr.bf16.mxu0 0
        %692 = vmatpush1.bf16.xpose.msra.mxu0 0
        %693 = vmatprep.subr.bf16.mxu0 0
        %694 = vmatpush1.bf16.xpose.msra.mxu0 0
        %695 = vmatprep.subr.bf16.mxu0 0
        %696 = vmatpush1.bf16.xpose.msra.mxu0 0
        %697 = vmatprep.subr.bf16.mxu0 0
        %698 = vmatpush1.bf16.xpose.msra.mxu0 0
        %699 = vmatprep.subr.bf16.mxu0 0
        %700 = vmatpush1.bf16.xpose.msra.mxu0 0
        %701 = vmatprep.subr.bf16.mxu0 0
        %702 = vmatpush1.bf16.xpose.msra.mxu0 0
        %703 = vmatprep.subr.bf16.mxu0 0
        %704 = vmatpush1.bf16.xpose.msra.mxu0 0
        %705 = vmatprep.mubr.bf16.mxu0 0
        %706 = vmatmul.mubr.bf16.gmra.mrb[0].mxu0 %v668
        %v707 = vpop.f32.mrb[0].mxu0
        %v708 = vadd.f32 0.0, %v707
        %v709 = vpop.f32.mrb[0].mxu0
        %v710 = vpop.f32.mrb[0].mxu0
        %v711 = vpop.f32.mrb[0].mxu0
        %712 = vdwg.mxu0
        %v713 = vmul.f32 %v708, 0.35355338
        %v714 = vsel %vm563, %v713, -1e+09
        %v715 = vsel %vm666, %v714, -inf
        %716 = vmax.xlane.f32.xlu0 %v715
        %v717 = vpop.xlane.xlu0 %716
        %v718 = vsub.f32 %v714, %v717
        %v719 = vmul.f32 %v718, 1.442695
        %v720 = vpow.pop %v719
        %v721 = vsel %vm666, %v720, 0.0
        %722 = vadd.xlane.f32.xlu0 %v721
        %v723 = vpop.xlane.xlu0 %722
        %v724 = vrcp.pop %v723
        %v725 = vmul.f32 %v720, %v724
        %v726 = vpack.c.bf16 %v725, %v725
        %727 = vrot.lane.b32.xlu0 %v662, 64
        %v728 = vpop.permute.xlu0 %727
        %v730 = vsel %vm666, %v726, 0
        %vm732 = vcmask 1043456
        %v734 = vsel %vm732, %v728, 0
        %736 = vmatprep.subr.bf16.mxu0 0
        %737 = vmatpush1.bf16.msra.mxu0 %v734
        %738 = vmatprep.subr.bf16.mxu0 0
        %739 = vmatpush1.bf16.msra.mxu0 0
        %740 = vmatprep.subr.bf16.mxu0 0
        %741 = vmatpush1.bf16.msra.mxu0 0
        %742 = vmatprep.subr.bf16.mxu0 0
        %743 = vmatpush1.bf16.msra.mxu0 0
        %744 = vmatprep.subr.bf16.mxu0 0
        %745 = vmatpush1.bf16.msra.mxu0 0
        %746 = vmatprep.subr.bf16.mxu0 0
        %747 = vmatpush1.bf16.msra.mxu0 0
        %748 = vmatprep.subr.bf16.mxu0 0
        %749 = vmatpush1.bf16.msra.mxu0 0
        %750 = vmatprep.subr.bf16.mxu0 0
        %751 = vmatpush1.bf16.msra.mxu0 0
        %752 = vmatprep.subr.bf16.mxu0 0
        %753 = vmatpush1.bf16.msra.mxu0 0
        %754 = vmatprep.subr.bf16.mxu0 0
        %755 = vmatpush1.bf16.msra.mxu0 0
        %756 = vmatprep.subr.bf16.mxu0 0
        %757 = vmatpush1.bf16.msra.mxu0 0
        %758 = vmatprep.subr.bf16.mxu0 0
        %759 = vmatpush1.bf16.msra.mxu0 0
        %760 = vmatprep.subr.bf16.mxu0 0
        %761 = vmatpush1.bf16.msra.mxu0 0
        %762 = vmatprep.subr.bf16.mxu0 0
        %763 = vmatpush1.bf16.msra.mxu0 0
        %764 = vmatprep.subr.bf16.mxu0 0
        %765 = vmatpush1.bf16.msra.mxu0 0
        %766 = vmatprep.subr.bf16.mxu0 0
        %767 = vmatpush1.bf16.msra.mxu0 0
        %768 = vmatprep.mubr.bf16.mxu0 0
        %769 = vmatmul.mubr.bf16.gmra.mrb[0].mxu0 %v730
        %v770 = vpop.f32.mrb[0].mxu0
        %v771 = vadd.f32 0.0, %v770
        %v772 = vpop.f32.mrb[0].mxu0
        %v773 = vpop.f32.mrb[0].mxu0
        %v774 = vpop.f32.mrb[0].mxu0
        %775 = vdwg.mxu0
        %776 = vrot.lane.b32.xlu0 %v662, 120
        %v777 = vpop.permute.xlu0 %776
        %778 = vrot.lane.b32.xlu0 %v662, 88
        %v779 = vpop.permute.xlu0 %778
        %v781 = vsel %vm666, %v777, 0
        %v784 = vsel %vm666, %v779, 0
        %786 = vmatprep.subr.bf16.mxu0 0
        %787 = vmatpush1.bf16.xpose.msra.mxu0 %v784
        %788 = vmatprep.subr.bf16.mxu0 0
        %789 = vmatpush1.bf16.xpose.msra.mxu0 0
        %790 = vmatprep.subr.bf16.mxu0 0
        %791 = vmatpush1.bf16.xpose.msra.mxu0 0
        %792 = vmatprep.subr.bf16.mxu0 0
        %793 = vmatpush1.bf16.xpose.msra.mxu0 0
        %794 = vmatprep.subr.bf16.mxu0 0
        %795 = vmatpush1.bf16.xpose.msra.mxu0 0
        %796 = vmatprep.subr.bf16.mxu0 0
        %797 = vmatpush1.bf16.xpose.msra.mxu0 0
        %798 = vmatprep.subr.bf16.mxu0 0
        %799 = vmatpush1.bf16.xpose.msra.mxu0 0
        %800 = vmatprep.subr.bf16.mxu0 0
        %801 = vmatpush1.bf16.xpose.msra.mxu0 0
        %802 = vmatprep.subr.bf16.mxu0 0
        %803 = vmatpush1.bf16.xpose.msra.mxu0 0
        %804 = vmatprep.subr.bf16.mxu0 0
        %805 = vmatpush1.bf16.xpose.msra.mxu0 0
        %806 = vmatprep.subr.bf16.mxu0 0
        %807 = vmatpush1.bf16.xpose.msra.mxu0 0
        %808 = vmatprep.subr.bf16.mxu0 0
        %809 = vmatpush1.bf16.xpose.msra.mxu0 0
        %810 = vmatprep.subr.bf16.mxu0 0
        %811 = vmatpush1.bf16.xpose.msra.mxu0 0
        %812 = vmatprep.subr.bf16.mxu0 0
        %813 = vmatpush1.bf16.xpose.msra.mxu0 0
        %814 = vmatprep.subr.bf16.mxu0 0
        %815 = vmatpush1.bf16.xpose.msra.mxu0 0
        %816 = vmatprep.subr.bf16.mxu0 0
        %817 = vmatpush1.bf16.xpose.msra.mxu0 0
        %818 = vmatprep.mubr.bf16.mxu0 0
        %819 = vmatmul.mubr.bf16.gmra.mrb[0].mxu0 %v781
        %v820 = vpop.f32.mrb[0].mxu0
        %v821 = vadd.f32 0.0, %v820
        %v822 = vpop.f32.mrb[0].mxu0
        %v823 = vpop.f32.mrb[0].mxu0
        %v824 = vpop.f32.mrb[0].mxu0
        %825 = vdwg.mxu0
        %v826 = vmul.f32 %v821, 0.35355338
        %v827 = vsel %vm563, %v826, -1e+09
        %v828 = vsel %vm666, %v827, -inf
        %829 = vmax.xlane.f32.xlu0 %v828
        %v830 = vpop.xlane.xlu0 %829
        %v831 = vsub.f32 %v827, %v830
        %v832 = vmul.f32 %v831, 1.442695
        %v833 = vpow.pop %v832
        %v834 = vsel %vm666, %v833, 0.0
        %835 = vadd.xlane.f32.xlu0 %v834
        %v836 = vpop.xlane.xlu0 %835
        %v837 = vrcp.pop %v836
        %v838 = vmul.f32 %v833, %v837
        %v839 = vpack.c.bf16 %v838, %v838
        %840 = vrot.lane.b32.xlu0 %v662, 56
        %v841 = vpop.permute.xlu0 %840
        %v843 = vsel %vm666, %v839, 0
        %v846 = vsel %vm732, %v841, 0
        %848 = vmatprep.subr.bf16.mxu0 0
        %849 = vmatpush1.bf16.msra.mxu0 %v846
        %850 = vmatprep.subr.bf16.mxu0 0
        %851 = vmatpush1.bf16.msra.mxu0 0
        %852 = vmatprep.subr.bf16.mxu0 0
        %853 = vmatpush1.bf16.msra.mxu0 0
        %854 = vmatprep.subr.bf16.mxu0 0
        %855 = vmatpush1.bf16.msra.mxu0 0
        %856 = vmatprep.subr.bf16.mxu0 0
        %857 = vmatpush1.bf16.msra.mxu0 0
        %858 = vmatprep.subr.bf16.mxu0 0
        %859 = vmatpush1.bf16.msra.mxu0 0
        %860 = vmatprep.subr.bf16.mxu0 0
        %861 = vmatpush1.bf16.msra.mxu0 0
        %862 = vmatprep.subr.bf16.mxu0 0
        %863 = vmatpush1.bf16.msra.mxu0 0
        %864 = vmatprep.subr.bf16.mxu0 0
        %865 = vmatpush1.bf16.msra.mxu0 0
        %866 = vmatprep.subr.bf16.mxu0 0
        %867 = vmatpush1.bf16.msra.mxu0 0
        %868 = vmatprep.subr.bf16.mxu0 0
        %869 = vmatpush1.bf16.msra.mxu0 0
        %870 = vmatprep.subr.bf16.mxu0 0
        %871 = vmatpush1.bf16.msra.mxu0 0
        %872 = vmatprep.subr.bf16.mxu0 0
        %873 = vmatpush1.bf16.msra.mxu0 0
        %874 = vmatprep.subr.bf16.mxu0 0
        %875 = vmatpush1.bf16.msra.mxu0 0
        %876 = vmatprep.subr.bf16.mxu0 0
        %877 = vmatpush1.bf16.msra.mxu0 0
        %878 = vmatprep.subr.bf16.mxu0 0
        %879 = vmatpush1.bf16.msra.mxu0 0
        %880 = vmatprep.mubr.bf16.mxu0 0
        %881 = vmatmul.mubr.bf16.gmra.mrb[0].mxu0 %v843
        %v882 = vpop.f32.mrb[0].mxu0
        %v883 = vadd.f32 0.0, %v882
        %v884 = vpop.f32.mrb[0].mxu0
        %v885 = vpop.f32.mrb[0].mxu0
        %v886 = vpop.f32.mrb[0].mxu0
        %887 = vdwg.mxu0
        %888 = vrot.lane.b32.xlu0 %v662, 112
        %v889 = vpop.permute.xlu0 %888
        %890 = vrot.lane.b32.xlu0 %v662, 80
        %v891 = vpop.permute.xlu0 %890
        %v893 = vsel %vm666, %v889, 0
        %v896 = vsel %vm666, %v891, 0
        %898 = vmatprep.subr.bf16.mxu0 0
        %899 = vmatpush1.bf16.xpose.msra.mxu0 %v896
        %900 = vmatprep.subr.bf16.mxu0 0
        %901 = vmatpush1.bf16.xpose.msra.mxu0 0
        %902 = vmatprep.subr.bf16.mxu0 0
        %903 = vmatpush1.bf16.xpose.msra.mxu0 0
        %904 = vmatprep.subr.bf16.mxu0 0
        %905 = vmatpush1.bf16.xpose.msra.mxu0 0
        %906 = vmatprep.subr.bf16.mxu0 0
        %907 = vmatpush1.bf16.xpose.msra.mxu0 0
        %908 = vmatprep.subr.bf16.mxu0 0
        %909 = vmatpush1.bf16.xpose.msra.mxu0 0
        %910 = vmatprep.subr.bf16.mxu0 0
        %911 = vmatpush1.bf16.xpose.msra.mxu0 0
        %912 = vmatprep.subr.bf16.mxu0 0
        %913 = vmatpush1.bf16.xpose.msra.mxu0 0
        %914 = vmatprep.subr.bf16.mxu0 0
        %915 = vmatpush1.bf16.xpose.msra.mxu0 0
        %916 = vmatprep.subr.bf16.mxu0 0
        %917 = vmatpush1.bf16.xpose.msra.mxu0 0
        %918 = vmatprep.subr.bf16.mxu0 0
        %919 = vmatpush1.bf16.xpose.msra.mxu0 0
        %920 = vmatprep.subr.bf16.mxu0 0
        %921 = vmatpush1.bf16.xpose.msra.mxu0 0
        %922 = vmatprep.subr.bf16.mxu0 0
        %923 = vmatpush1.bf16.xpose.msra.mxu0 0
        %924 = vmatprep.subr.bf16.mxu0 0
        %925 = vmatpush1.bf16.xpose.msra.mxu0 0
        %926 = vmatprep.subr.bf16.mxu0 0
        %927 = vmatpush1.bf16.xpose.msra.mxu0 0
        %928 = vmatprep.subr.bf16.mxu0 0
        %929 = vmatpush1.bf16.xpose.msra.mxu0 0
        %930 = vmatprep.mubr.bf16.mxu0 0
        %931 = vmatmul.mubr.bf16.gmra.mrb[0].mxu0 %v893
        %v932 = vpop.f32.mrb[0].mxu0
        %v933 = vadd.f32 0.0, %v932
        %v934 = vpop.f32.mrb[0].mxu0
        %v935 = vpop.f32.mrb[0].mxu0
        %v936 = vpop.f32.mrb[0].mxu0
        %937 = vdwg.mxu0
        %v938 = vmul.f32 %v933, 0.35355338
        %v939 = vsel %vm563, %v938, -1e+09
        %v940 = vsel %vm666, %v939, -inf
        %941 = vmax.xlane.f32.xlu0 %v940
        %v942 = vpop.xlane.xlu0 %941
        %v943 = vsub.f32 %v939, %v942
        %v944 = vmul.f32 %v943, 1.442695
        %v945 = vpow.pop %v944
        %v946 = vsel %vm666, %v945, 0.0
        %947 = vadd.xlane.f32.xlu0 %v946
        %v948 = vpop.xlane.xlu0 %947
        %v949 = vrcp.pop %v948
        %v950 = vmul.f32 %v945, %v949
        %v951 = vpack.c.bf16 %v950, %v950
        %952 = vrot.lane.b32.xlu0 %v662, 48
        %v953 = vpop.permute.xlu0 %952
        %v955 = vsel %vm666, %v951, 0
        %v958 = vsel %vm732, %v953, 0
        %960 = vmatprep.subr.bf16.mxu0 0
        %961 = vmatpush1.bf16.msra.mxu0 %v958
        %962 = vmatprep.subr.bf16.mxu0 0
        %963 = vmatpush1.bf16.msra.mxu0 0
        %964 = vmatprep.subr.bf16.mxu0 0
        %965 = vmatpush1.bf16.msra.mxu0 0
        %966 = vmatprep.subr.bf16.mxu0 0
        %967 = vmatpush1.bf16.msra.mxu0 0
        %968 = vmatprep.subr.bf16.mxu0 0
        %969 = vmatpush1.bf16.msra.mxu0 0
        %970 = vmatprep.subr.bf16.mxu0 0
        %971 = vmatpush1.bf16.msra.mxu0 0
        %972 = vmatprep.subr.bf16.mxu0 0
        %973 = vmatpush1.bf16.msra.mxu0 0
        %974 = vmatprep.subr.bf16.mxu0 0
        %975 = vmatpush1.bf16.msra.mxu0 0
        %976 = vmatprep.subr.bf16.mxu0 0
        %977 = vmatpush1.bf16.msra.mxu0 0
        %978 = vmatprep.subr.bf16.mxu0 0
        %979 = vmatpush1.bf16.msra.mxu0 0
        %980 = vmatprep.subr.bf16.mxu0 0
        %981 = vmatpush1.bf16.msra.mxu0 0
        %982 = vmatprep.subr.bf16.mxu0 0
        %983 = vmatpush1.bf16.msra.mxu0 0
        %984 = vmatprep.subr.bf16.mxu0 0
        %985 = vmatpush1.bf16.msra.mxu0 0
        %986 = vmatprep.subr.bf16.mxu0 0
        %987 = vmatpush1.bf16.msra.mxu0 0
        %988 = vmatprep.subr.bf16.mxu0 0
        %989 = vmatpush1.bf16.msra.mxu0 0
        %990 = vmatprep.subr.bf16.mxu0 0
        %991 = vmatpush1.bf16.msra.mxu0 0
        %992 = vmatprep.mubr.bf16.mxu0 0
        %993 = vmatmul.mubr.bf16.gmra.mrb[0].mxu0 %v955
        %v994 = vpop.f32.mrb[0].mxu0
        %v995 = vadd.f32 0.0, %v994
        %v996 = vpop.f32.mrb[0].mxu0
        %v997 = vpop.f32.mrb[0].mxu0
        %v998 = vpop.f32.mrb[0].mxu0
        %999 = vdwg.mxu0
        %1000 = vrot.lane.b32.xlu0 %v662, 104
        %v1001 = vpop.permute.xlu0 %1000
        %1002 = vrot.lane.b32.xlu0 %v662, 72
        %v1003 = vpop.permute.xlu0 %1002
        %v1005 = vsel %vm666, %v1001, 0
        %v1008 = vsel %vm666, %v1003, 0
        %1010 = vmatprep.subr.bf16.mxu0 0
        %1011 = vmatpush1.bf16.xpose.msra.mxu0 %v1008
        %1012 = vmatprep.subr.bf16.mxu0 0
        %1013 = vmatpush1.bf16.xpose.msra.mxu0 0
        %1014 = vmatprep.subr.bf16.mxu0 0
        %1015 = vmatpush1.bf16.xpose.msra.mxu0 0
        %1016 = vmatprep.subr.bf16.mxu0 0
        %1017 = vmatpush1.bf16.xpose.msra.mxu0 0
        %1018 = vmatprep.subr.bf16.mxu0 0
        %1019 = vmatpush1.bf16.xpose.msra.mxu0 0
        %1020 = vmatprep.subr.bf16.mxu0 0
        %1021 = vmatpush1.bf16.xpose.msra.mxu0 0
        %1022 = vmatprep.subr.bf16.mxu0 0
        %1023 = vmatpush1.bf16.xpose.msra.mxu0 0
        %1024 = vmatprep.subr.bf16.mxu0 0
        %1025 = vmatpush1.bf16.xpose.msra.mxu0 0
        %1026 = vmatprep.subr.bf16.mxu0 0
        %1027 = vmatpush1.bf16.xpose.msra.mxu0 0
        %1028 = vmatprep.subr.bf16.mxu0 0
        %1029 = vmatpush1.bf16.xpose.msra.mxu0 0
        %1030 = vmatprep.subr.bf16.mxu0 0
        %1031 = vmatpush1.bf16.xpose.msra.mxu0 0
        %1032 = vmatprep.subr.bf16.mxu0 0
        %1033 = vmatpush1.bf16.xpose.msra.mxu0 0
        %1034 = vmatprep.subr.bf16.mxu0 0
        %1035 = vmatpush1.bf16.xpose.msra.mxu0 0
        %1036 = vmatprep.subr.bf16.mxu0 0
        %1037 = vmatpush1.bf16.xpose.msra.mxu0 0
        %1038 = vmatprep.subr.bf16.mxu0 0
        %1039 = vmatpush1.bf16.xpose.msra.mxu0 0
        %1040 = vmatprep.subr.bf16.mxu0 0
        %1041 = vmatpush1.bf16.xpose.msra.mxu0 0
        %1042 = vmatprep.mubr.bf16.mxu0 0
        %1043 = vmatmul.mubr.bf16.gmra.mrb[0].mxu0 %v1005
        %v1044 = vpop.f32.mrb[0].mxu0
        %v1045 = vadd.f32 0.0, %v1044
        %v1046 = vpop.f32.mrb[0].mxu0
        %v1047 = vpop.f32.mrb[0].mxu0
        %v1048 = vpop.f32.mrb[0].mxu0
        %1049 = vdwg.mxu0
        %v1050 = vmul.f32 %v1045, 0.35355338
        %v1051 = vsel %vm563, %v1050, -1e+09
        %v1052 = vsel %vm666, %v1051, -inf
        %1053 = vmax.xlane.f32.xlu0 %v1052
        %v1054 = vpop.xlane.xlu0 %1053
        %v1055 = vsub.f32 %v1051, %v1054
        %v1056 = vmul.f32 %v1055, 1.442695
        %v1057 = vpow.pop %v1056
        %v1058 = vsel %vm666, %v1057, 0.0
        %1059 = vadd.xlane.f32.xlu0 %v1058
        %v1060 = vpop.xlane.xlu0 %1059
        %v1061 = vrcp.pop %v1060
        %v1062 = vmul.f32 %v1057, %v1061
        %v1063 = vpack.c.bf16 %v1062, %v1062
        %1064 = vrot.lane.b32.xlu0 %v662, 40
        %v1065 = vpop.permute.xlu0 %1064
        %v1067 = vsel %vm666, %v1063, 0
        %v1070 = vsel %vm732, %v1065, 0
        %1072 = vmatprep.subr.bf16.mxu0 0
        %1073 = vmatpush1.bf16.msra.mxu0 %v1070
        %1074 = vmatprep.subr.bf16.mxu0 0
        %1075 = vmatpush1.bf16.msra.mxu0 0
        %1076 = vmatprep.subr.bf16.mxu0 0
        %1077 = vmatpush1.bf16.msra.mxu0 0
        %1078 = vmatprep.subr.bf16.mxu0 0
        %1079 = vmatpush1.bf16.msra.mxu0 0
        %1080 = vmatprep.subr.bf16.mxu0 0
        %1081 = vmatpush1.bf16.msra.mxu0 0
        %1082 = vmatprep.subr.bf16.mxu0 0
        %1083 = vmatpush1.bf16.msra.mxu0 0
        %1084 = vmatprep.subr.bf16.mxu0 0
        %1085 = vmatpush1.bf16.msra.mxu0 0
        %1086 = vmatprep.subr.bf16.mxu0 0
        %1087 = vmatpush1.bf16.msra.mxu0 0
        %1088 = vmatprep.subr.bf16.mxu0 0
        %1089 = vmatpush1.bf16.msra.mxu0 0
        %1090 = vmatprep.subr.bf16.mxu0 0
        %1091 = vmatpush1.bf16.msra.mxu0 0
        %1092 = vmatprep.subr.bf16.mxu0 0
        %1093 = vmatpush1.bf16.msra.mxu0 0
        %1094 = vmatprep.subr.bf16.mxu0 0
        %1095 = vmatpush1.bf16.msra.mxu0 0
        %1096 = vmatprep.subr.bf16.mxu0 0
        %1097 = vmatpush1.bf16.msra.mxu0 0
        %1098 = vmatprep.subr.bf16.mxu0 0
        %1099 = vmatpush1.bf16.msra.mxu0 0
        %1100 = vmatprep.subr.bf16.mxu0 0
        %1101 = vmatpush1.bf16.msra.mxu0 0
        %1102 = vmatprep.subr.bf16.mxu0 0
        %1103 = vmatpush1.bf16.msra.mxu0 0
        %1104 = vmatprep.mubr.bf16.mxu0 0
        %1105 = vmatmul.mubr.bf16.gmra.mrb[0].mxu0 %v1067
        %v1106 = vpop.f32.mrb[0].mxu0
        %v1107 = vadd.f32 0.0, %v1106
        %v1108 = vpop.f32.mrb[0].mxu0
        %v1109 = vpop.f32.mrb[0].mxu0
        %v1110 = vpop.f32.mrb[0].mxu0
        %1111 = vdwg.mxu0
        %1113 = vrot.lane.b32.xlu0 %v883, 8
        %v1114 = vpop.permute.xlu0 %1113
        %1117 = vrot.lane.b32.xlu0 %v995, 16
        %v1118 = vpop.permute.xlu0 %1117
        %1121 = vrot.lane.b32.xlu0 %v1107, 24
        %v1122 = vpop.permute.xlu0 %1121
        %v1124 = vsel %vm666, %v771, %v1114
        %vm1125 = vcmask 130048
        %v1126 = vsel %vm1125, %v1124, %v1118
        %vm1127 = vcmask 195584
        %v1128 = vsel %vm1127, %v1126, %v1122
        %v1129 = vpack.c.bf16 %v1128, %v1128
        %v1130 = vld [vmem:[%s5] sm:$0xf]
        %v1131 = vld [vmem:[%s5 + $0x4] sm:$0xf]
        %v1132 = vld [vmem:[%s5 + $0x8] sm:$0xf]
        %v1133 = vld [vmem:[%s5 + $0xc] sm:$0xf]
        %v1134 = vld [vmem:[%s6] sm:$0x1]
        %v1136 = vlaneseq
        %v1137 = vshrl.u32 %v1136, 7
        %v1138 = vsub.s32 0, %v1137
        %v1139 = vrot.slane %v1134, %v1138
        %v1145 = vunpack.c.l.b16 %v1130
        %v1146 = vunpack.c.l.b16 %v1131
        %v1147 = vunpack.c.l.b16 %v1132
        %v1148 = vunpack.c.l.b16 %v1133
        %v1149 = vpack.c.b16 %v1146, %v1145
        %v1150 = vpack.c.b16 %v1148, %v1147
        %v1154 = vsel %vm566, %v1129, 0
        %1156 = vmatprep.subr.bf16.mxu0 0
        %1157 = vmatpush1.bf16.msra.mxu0 %v1149
        %1158 = vmatprep.subr.bf16.mxu0 0
        %1159 = vmatpush1.bf16.msra.mxu0 %v1150
        %1160 = vmatprep.subr.bf16.mxu0 0
        %1161 = vmatpush1.bf16.msra.mxu0 0
        %1162 = vmatprep.subr.bf16.mxu0 0
        %1163 = vmatpush1.bf16.msra.mxu0 0
        %1164 = vmatprep.subr.bf16.mxu0 0
        %1165 = vmatpush1.bf16.msra.mxu0 0
        %1166 = vmatprep.subr.bf16.mxu0 0
        %1167 = vmatpush1.bf16.msra.mxu0 0
        %1168 = vmatprep.subr.bf16.mxu0 0
        %1169 = vmatpush1.bf16.msra.mxu0 0
        %1170 = vmatprep.subr.bf16.mxu0 0
        %1171 = vmatpush1.bf16.msra.mxu0 0
        %1172 = vmatprep.subr.bf16.mxu0 0
        %1173 = vmatpush1.bf16.msra.mxu0 0
        %1174 = vmatprep.subr.bf16.mxu0 0
        %1175 = vmatpush1.bf16.msra.mxu0 0
        %1176 = vmatprep.subr.bf16.mxu0 0
        %1177 = vmatpush1.bf16.msra.mxu0 0
        %1178 = vmatprep.subr.bf16.mxu0 0
        %1179 = vmatpush1.bf16.msra.mxu0 0
        %1180 = vmatprep.subr.bf16.mxu0 0
        %1181 = vmatpush1.bf16.msra.mxu0 0
        %1182 = vmatprep.subr.bf16.mxu0 0
        %1183 = vmatpush1.bf16.msra.mxu0 0
        %1184 = vmatprep.subr.bf16.mxu0 0
        %1185 = vmatpush1.bf16.msra.mxu0 0
        %1186 = vmatprep.subr.bf16.mxu0 0
        %1187 = vmatpush1.bf16.msra.mxu0 0
        %1188 = vmatprep.mubr.bf16.mxu0 0
        %1189 = vmatmul.mubr.bf16.gmra.mrb[0].mxu0 %v1154
        %v1190 = vpop.f32.mrb[0].mxu0
        %v1191 = vadd.f32 %v1139, %v1190
        %v1192 = vpop.f32.mrb[0].mxu0
        %v1193 = vpop.f32.mrb[0].mxu0
        %v1194 = vpop.f32.mrb[0].mxu0
        %1195 = vdwg.mxu0
        %v1196 = vadd.f32 %v558, %v1191
        %v1197 = vld [vmem:[%s7] sm:$0x1]
        %v1198 = vld [vmem:[%s8] sm:$0x1]
        %v1199 = vsel %vm566, %v1196, 0.0
        %1200 = vadd.xlane.f32.xlu0 %v1199
        %v1201 = vpop.xlane.xlu0 %1200
        %v1202 = vmul.f32 %v1201, %v570
        %v1203 = vsub.f32 %v1196, %v1202
        %v1204 = vmul.f32 %v1203, %v1203
        %v1205 = vsel %vm566, %v1204, 0.0
        %1206 = vadd.xlane.f32.xlu0 %v1205
        %v1207 = vpop.xlane.xlu0 %1206
        %v1208 = vmul.f32 %v1207, %v570
        %v1209 = vadd.f32 %v1208, 1e-05
        %v1210 = vrsqrt.pop %v1209
        %v1211 = vmul.f32 %v1203, %v1210
        %v1213 = vlaneseq
        %v1214 = vshrl.u32 %v1213, 7
        %v1215 = vsub.s32 0, %v1214
        %v1216 = vrot.slane %v1197, %v1215
        %v1218 = vmul.f32 %v1211, %v1216
        %v1220 = vlaneseq
        %v1221 = vshrl.u32 %v1220, 7
        %v1222 = vsub.s32 0, %v1221
        %v1223 = vrot.slane %v1198, %v1222
        %v1225 = vadd.f32 %v1218, %v1223
        %v1226 = vpack.c.bf16 %v1225, %v1225
        %v1227 = vld [vmem:[%s9] sm:$0xf]
        %v1228 = vld [vmem:[%s9 + $0x4] sm:$0xf]
        %v1229 = vld [vmem:[%s9 + $0x8] sm:$0xf]
        %v1230 = vld [vmem:[%s9 + $0xc] sm:$0xf]
        %v1231 = vld [vmem:[%s10] sm:$0x1]
        %v1233 = vlaneseq
        %v1234 = vshrl.u32 %v1233, 7
        %v1235 = vsub.s32 0, %v1234
        %v1236 = vrot.slane %v1231, %v1235
        %v1242 = vunpack.c.l.b16 %v1227
        %v1243 = vunpack.c.l.b16 %v1228
        %v1244 = vunpack.c.l.b16 %v1229
        %v1245 = vunpack.c.l.b16 %v1230
        %v1246 = vpack.c.b16 %v1243, %v1242
        %v1247 = vpack.c.b16 %v1245, %v1244
        %v1251 = vsel %vm566, %v1226, 0
        %1253 = vmatprep.subr.bf16.mxu0 0
        %1254 = vmatpush1.bf16.msra.mxu0 %v1246
        %1255 = vmatprep.subr.bf16.mxu0 0
        %1256 = vmatpush1.bf16.msra.mxu0 %v1247
        %1257 = vmatprep.subr.bf16.mxu0 0
        %1258 = vmatpush1.bf16.msra.mxu0 0
        %1259 = vmatprep.subr.bf16.mxu0 0
        %1260 = vmatpush1.bf16.msra.mxu0 0
        %1261 = vmatprep.subr.bf16.mxu0 0
        %1262 = vmatpush1.bf16.msra.mxu0 0
        %1263 = vmatprep.subr.bf16.mxu0 0
        %1264 = vmatpush1.bf16.msra.mxu0 0
        %1265 = vmatprep.subr.bf16.mxu0 0
        %1266 = vmatpush1.bf16.msra.mxu0 0
        %1267 = vmatprep.subr.bf16.mxu0 0
        %1268 = vmatpush1.bf16.msra.mxu0 0
        %1269 = vmatprep.subr.bf16.mxu0 0
        %1270 = vmatpush1.bf16.msra.mxu0 0
        %1271 = vmatprep.subr.bf16.mxu0 0
        %1272 = vmatpush1.bf16.msra.mxu0 0
        %1273 = vmatprep.subr.bf16.mxu0 0
        %1274 = vmatpush1.bf16.msra.mxu0 0
        %1275 = vmatprep.subr.bf16.mxu0 0
        %1276 = vmatpush1.bf16.msra.mxu0 0
        %1277 = vmatprep.subr.bf16.mxu0 0
        %1278 = vmatpush1.bf16.msra.mxu0 0
        %1279 = vmatprep.subr.bf16.mxu0 0
        %1280 = vmatpush1.bf16.msra.mxu0 0
        %1281 = vmatprep.subr.bf16.mxu0 0
        %1282 = vmatpush1.bf16.msra.mxu0 0
        %1283 = vmatprep.subr.bf16.mxu0 0
        %1284 = vmatpush1.bf16.msra.mxu0 0
        %1285 = vmatprep.mubr.bf16.mxu0 0
        %1286 = vmatmul.mubr.bf16.gmra.mrb[0].mxu0 %v1251
        %v1287 = vpop.f32.mrb[0].mxu0
        %v1288 = vadd.f32 %v1236, %v1287
        %v1289 = vpop.f32.mrb[0].mxu0
        %v1290 = vpop.f32.mrb[0].mxu0
        %v1291 = vpop.f32.mrb[0].mxu0
        %1292 = vdwg.mxu0
        %v1293 = vmul.f32 %v1288, 1.702
        %v1294 = vxor.u32 %v1293, 2147483648
        %v1295 = vmul.f32 %v1294, 1.442695
        %v1296 = vpow.pop %v1295
        %v1297 = vadd.f32 %v1296, 1.0
        %v1298 = vrcp.pop %v1297
        %v1299 = vmul.f32 1.0, %v1298
        %v1300 = vmul.f32 %v1288, %v1299
        %v1301 = vpack.c.bf16 %v1300, %v1300
        %v1302 = vld [vmem:[%s11] sm:$0xf]
        %v1303 = vld [vmem:[%s11 + $0x4] sm:$0xf]
        %v1304 = vld [vmem:[%s11 + $0x8] sm:$0xf]
        %v1305 = vld [vmem:[%s11 + $0xc] sm:$0xf]
        %v1306 = vld [vmem:[%s11 + $0x10] sm:$0xf]
        %v1307 = vld [vmem:[%s11 + $0x14] sm:$0xf]
        %v1308 = vld [vmem:[%s11 + $0x18] sm:$0xf]
        %v1309 = vld [vmem:[%s11 + $0x1c] sm:$0xf]
        %v1310 = vld [vmem:[%s11 + $0x20] sm:$0xf]
        %v1311 = vld [vmem:[%s11 + $0x24] sm:$0xf]
        %v1312 = vld [vmem:[%s11 + $0x28] sm:$0xf]
        %v1313 = vld [vmem:[%s11 + $0x2c] sm:$0xf]
        %v1314 = vld [vmem:[%s11 + $0x30] sm:$0xf]
        %v1315 = vld [vmem:[%s11 + $0x34] sm:$0xf]
        %v1316 = vld [vmem:[%s11 + $0x38] sm:$0xf]
        %v1317 = vld [vmem:[%s11 + $0x3c] sm:$0xf]
        %v1318 = vld [vmem:[%s12] sm:$0x1]
        %v1320 = vlaneseq
        %v1321 = vshrl.u32 %v1320, 7
        %v1322 = vsub.s32 0, %v1321
        %v1323 = vrot.slane %v1318, %v1322
        %v1341 = vunpack.c.l.b16 %v1302
        %v1342 = vunpack.c.l.b16 %v1303
        %v1343 = vunpack.c.l.b16 %v1304
        %v1344 = vunpack.c.l.b16 %v1305
        %v1345 = vunpack.c.l.b16 %v1306
        %v1346 = vunpack.c.l.b16 %v1307
        %v1347 = vunpack.c.l.b16 %v1308
        %v1348 = vunpack.c.l.b16 %v1309
        %v1349 = vunpack.c.l.b16 %v1310
        %v1350 = vunpack.c.l.b16 %v1311
        %v1351 = vunpack.c.l.b16 %v1312
        %v1352 = vunpack.c.l.b16 %v1313
        %v1353 = vunpack.c.l.b16 %v1314
        %v1354 = vunpack.c.l.b16 %v1315
        %v1355 = vunpack.c.l.b16 %v1316
        %v1356 = vunpack.c.l.b16 %v1317
        %v1357 = vpack.c.b16 %v1342, %v1341
        %v1358 = vpack.c.b16 %v1344, %v1343
        %v1359 = vpack.c.b16 %v1346, %v1345
        %v1360 = vpack.c.b16 %v1348, %v1347
        %v1361 = vpack.c.b16 %v1350, %v1349
        %v1362 = vpack.c.b16 %v1352, %v1351
        %v1363 = vpack.c.b16 %v1354, %v1353
        %v1364 = vpack.c.b16 %v1356, %v1355
        %1373 = vmatprep.subr.bf16.mxu0 0
        %1374 = vmatpush1.bf16.msra.mxu0 %v1357
        %1375 = vmatprep.subr.bf16.mxu0 0
        %1376 = vmatpush1.bf16.msra.mxu0 %v1358
        %1377 = vmatprep.subr.bf16.mxu0 0
        %1378 = vmatpush1.bf16.msra.mxu0 %v1359
        %1379 = vmatprep.subr.bf16.mxu0 0
        %1380 = vmatpush1.bf16.msra.mxu0 %v1360
        %1381 = vmatprep.subr.bf16.mxu0 0
        %1382 = vmatpush1.bf16.msra.mxu0 %v1361
        %1383 = vmatprep.subr.bf16.mxu0 0
        %1384 = vmatpush1.bf16.msra.mxu0 %v1362
        %1385 = vmatprep.subr.bf16.mxu0 0
        %1386 = vmatpush1.bf16.msra.mxu0 %v1363
        %1387 = vmatprep.subr.bf16.mxu0 0
        %1388 = vmatpush1.bf16.msra.mxu0 %v1364
        %1389 = vmatprep.subr.bf16.mxu0 0
        %1390 = vmatpush1.bf16.msra.mxu0 0
        %1391 = vmatprep.subr.bf16.mxu0 0
        %1392 = vmatpush1.bf16.msra.mxu0 0
        %1393 = vmatprep.subr.bf16.mxu0 0
        %1394 = vmatpush1.bf16.msra.mxu0 0
        %1395 = vmatprep.subr.bf16.mxu0 0
        %1396 = vmatpush1.bf16.msra.mxu0 0
        %1397 = vmatprep.subr.bf16.mxu0 0
        %1398 = vmatpush1.bf16.msra.mxu0 0
        %1399 = vmatprep.subr.bf16.mxu0 0
        %1400 = vmatpush1.bf16.msra.mxu0 0
        %1401 = vmatprep.subr.bf16.mxu0 0
        %1402 = vmatpush1.bf16.msra.mxu0 0
        %1403 = vmatprep.subr.bf16.mxu0 0
        %1404 = vmatpush1.bf16.msra.mxu0 0
        %1405 = vmatprep.mubr.bf16.mxu0 0
        %1406 = vmatmul.mubr.bf16.gmra.mrb[0].mxu0 %v1301
        %v1407 = vpop.f32.mrb[0].mxu0
        %v1408 = vadd.f32 %v1323, %v1407
        %v1409 = vpop.f32.mrb[0].mxu0
        %v1410 = vpop.f32.mrb[0].mxu0
        %v1411 = vpop.f32.mrb[0].mxu0
        %1412 = vdwg.mxu0
        %v1413 = vadd.f32 %v1196, %v1408
        %s1414 = scalar_lea.vmem %s1, 1
        %v1415 = vld [vmem:[%s1414] sm:$0x1]
        %s1416 = scalar_lea.vmem %s2, 1
        %v1417 = vld [vmem:[%s1416] sm:$0x1]
        %v1418 = vsel %vm566, %v1413, 0.0
        %1419 = vadd.xlane.f32.xlu0 %v1418
        %v1420 = vpop.xlane.xlu0 %1419
        %v1421 = vmul.f32 %v1420, %v570
        %v1422 = vsub.f32 %v1413, %v1421
        %v1423 = vmul.f32 %v1422, %v1422
        %v1424 = vsel %vm566, %v1423, 0.0
        %1425 = vadd.xlane.f32.xlu0 %v1424
        %v1426 = vpop.xlane.xlu0 %1425
        %v1427 = vmul.f32 %v1426, %v570
        %v1428 = vadd.f32 %v1427, 1e-05
        %v1429 = vrsqrt.pop %v1428
        %v1430 = vmul.f32 %v1422, %v1429
        %v1432 = vlaneseq
        %v1433 = vshrl.u32 %v1432, 7
        %v1434 = vsub.s32 0, %v1433
        %v1435 = vrot.slane %v1415, %v1434
        %v1437 = vmul.f32 %v1430, %v1435
        %v1439 = vlaneseq
        %v1440 = vshrl.u32 %v1439, 7
        %v1441 = vsub.s32 0, %v1440
        %v1442 = vrot.slane %v1417, %v1441
        %v1444 = vadd.f32 %v1437, %v1442
        %v1445 = vpack.c.bf16 %v1444, %v1444
        %s1446 = scalar_lea.vmem %s3, 16
        %v1447 = vld [vmem:[%s1446] sm:$0xf]
        %v1448 = vld [vmem:[%s1446 + $0x4] sm:$0xf]
        %v1449 = vld [vmem:[%s1446 + $0x8] sm:$0xf]
        %v1450 = vld [vmem:[%s1446 + $0xc] sm:$0xf]
        %s1451 = scalar_lea.vmem %s4, 1
        %v1452 = vld [vmem:[%s1451] sm:$0x1]
        %v1454 = vlaneseq
        %v1455 = vshrl.u32 %v1454, 7
        %v1456 = vsub.s32 0, %v1455
        %v1457 = vrot.slane %v1452, %v1456
        %v1463 = vunpack.c.l.b16 %v1447
        %v1464 = vunpack.c.l.b16 %v1448
        %v1465 = vunpack.c.l.b16 %v1449
        %v1466 = vunpack.c.l.b16 %v1450
        %v1467 = vpack.c.b16 %v1464, %v1463
        %v1468 = vpack.c.b16 %v1466, %v1465
        %v1472 = vsel %vm566, %v1445, 0
        %1474 = vmatprep.subr.bf16.mxu0 0
        %1475 = vmatpush1.bf16.msra.mxu0 %v1467
        %1476 = vmatprep.subr.bf16.mxu0 0
        %1477 = vmatpush1.bf16.msra.mxu0 %v1468
        %1478 = vmatprep.subr.bf16.mxu0 0
        %1479 = vmatpush1.bf16.msra.mxu0 0
        %1480 = vmatprep.subr.bf16.mxu0 0
        %1481 = vmatpush1.bf16.msra.mxu0 0
        %1482 = vmatprep.subr.bf16.mxu0 0
        %1483 = vmatpush1.bf16.msra.mxu0 0
        %1484 = vmatprep.subr.bf16.mxu0 0
        %1485 = vmatpush1.bf16.msra.mxu0 0
        %1486 = vmatprep.subr.bf16.mxu0 0
        %1487 = vmatpush1.bf16.msra.mxu0 0
        %1488 = vmatprep.subr.bf16.mxu0 0
        %1489 = vmatpush1.bf16.msra.mxu0 0
        %1490 = vmatprep.subr.bf16.mxu0 0
        %1491 = vmatpush1.bf16.msra.mxu0 0
        %1492 = vmatprep.subr.bf16.mxu0 0
        %1493 = vmatpush1.bf16.msra.mxu0 0
        %1494 = vmatprep.subr.bf16.mxu0 0
        %1495 = vmatpush1.bf16.msra.mxu0 0
        %1496 = vmatprep.subr.bf16.mxu0 0
        %1497 = vmatpush1.bf16.msra.mxu0 0
        %1498 = vmatprep.subr.bf16.mxu0 0
        %1499 = vmatpush1.bf16.msra.mxu0 0
        %1500 = vmatprep.subr.bf16.mxu0 0
        %1501 = vmatpush1.bf16.msra.mxu0 0
        %1502 = vmatprep.subr.bf16.mxu0 0
        %1503 = vmatpush1.bf16.msra.mxu0 0
        %1504 = vmatprep.subr.bf16.mxu0 0
        %1505 = vmatpush1.bf16.msra.mxu0 0
        %1506 = vmatprep.mubr.bf16.mxu0 0
        %1507 = vmatmul.mubr.bf16.gmra.mrb[0].mxu0 %v1472
        %v1508 = vpop.f32.mrb[0].mxu0
        %v1509 = vadd.f32 %v1457, %v1508
        %v1510 = vpop.f32.mrb[0].mxu0
        %v1511 = vpop.f32.mrb[0].mxu0
        %v1512 = vpop.f32.mrb[0].mxu0
        %1513 = vdwg.mxu0
        %v1514 = vpack.c.bf16 %v1509, %v1509
        %1516 = vrot.lane.b32.xlu0 %v1514, 96
        %v1517 = vpop.permute.xlu0 %1516
        %v1519 = vsel %vm666, %v1514, 0
        %v1522 = vsel %vm666, %v1517, 0
        %1524 = vmatprep.subr.bf16.mxu0 0
        %1525 = vmatpush1.bf16.xpose.msra.mxu0 %v1522
        %1526 = vmatprep.subr.bf16.mxu0 0
        %1527 = vmatpush1.bf16.xpose.msra.mxu0 0
        %1528 = vmatprep.subr.bf16.mxu0 0
        %1529 = vmatpush1.bf16.xpose.msra.mxu0 0
        %1530 = vmatprep.subr.bf16.mxu0 0
        %1531 = vmatpush1.bf16.xpose.msra.mxu0 0
        %1532 = vmatprep.subr.bf16.mxu0 0
        %1533 = vmatpush1.bf16.xpose.msra.mxu0 0
        %1534 = vmatprep.subr.bf16.mxu0 0
        %1535 = vmatpush1.bf16.xpose.msra.mxu0 0
        %1536 = vmatprep.subr.bf16.mxu0 0
        %1537 = vmatpush1.bf16.xpose.msra.mxu0 0
        %1538 = vmatprep.subr.bf16.mxu0 0
        %1539 = vmatpush1.bf16.xpose.msra.mxu0 0
        %1540 = vmatprep.subr.bf16.mxu0 0
        %1541 = vmatpush1.bf16.xpose.msra.mxu0 0
        %1542 = vmatprep.subr.bf16.mxu0 0
        %1543 = vmatpush1.bf16.xpose.msra.mxu0 0
        %1544 = vmatprep.subr.bf16.mxu0 0
        %1545 = vmatpush1.bf16.xpose.msra.mxu0 0
        %1546 = vmatprep.subr.bf16.mxu0 0
        %1547 = vmatpush1.bf16.xpose.msra.mxu0 0
        %1548 = vmatprep.subr.bf16.mxu0 0
        %1549 = vmatpush1.bf16.xpose.msra.mxu0 0
        %1550 = vmatprep.subr.bf16.mxu0 0
        %1551 = vmatpush1.bf16.xpose.msra.mxu0 0
        %1552 = vmatprep.subr.bf16.mxu0 0
        %1553 = vmatpush1.bf16.xpose.msra.mxu0 0
        %1554 = vmatprep.subr.bf16.mxu0 0
        %1555 = vmatpush1.bf16.xpose.msra.mxu0 0
        %1556 = vmatprep.mubr.bf16.mxu0 0
        %1557 = vmatmul.mubr.bf16.gmra.mrb[0].mxu0 %v1519
        %v1558 = vpop.f32.mrb[0].mxu0
        %v1559 = vadd.f32 0.0, %v1558
        %v1560 = vpop.f32.mrb[0].mxu0
        %v1561 = vpop.f32.mrb[0].mxu0
        %v1562 = vpop.f32.mrb[0].mxu0
        %1563 = vdwg.mxu0
        %v1564 = vmul.f32 %v1559, 0.35355338
        %v1565 = vsel %vm563, %v1564, -1e+09
        %v1566 = vsel %vm666, %v1565, -inf
        %1567 = vmax.xlane.f32.xlu0 %v1566
        %v1568 = vpop.xlane.xlu0 %1567
        %v1569 = vsub.f32 %v1565, %v1568
        %v1570 = vmul.f32 %v1569, 1.442695
        %v1571 = vpow.pop %v1570
        %v1572 = vsel %vm666, %v1571, 0.0
        %1573 = vadd.xlane.f32.xlu0 %v1572
        %v1574 = vpop.xlane.xlu0 %1573
        %v1575 = vrcp.pop %v1574
        %v1576 = vmul.f32 %v1571, %v1575
        %v1577 = vpack.c.bf16 %v1576, %v1576
        %1578 = vrot.lane.b32.xlu0 %v1514, 64
        %v1579 = vpop.permute.xlu0 %1578
        %v1581 = vsel %vm666, %v1577, 0
        %v1584 = vsel %vm732, %v1579, 0
        %1586 = vmatprep.subr.bf16.mxu0 0
        %1587 = vmatpush1.bf16.msra.mxu0 %v1584
        %1588 = vmatprep.subr.bf16.mxu0 0
        %1589 = vmatpush1.bf16.msra.mxu0 0
        %1590 = vmatprep.subr.bf16.mxu0 0
        %1591 = vmatpush1.bf16.msra.mxu0 0
        %1592 = vmatprep.subr.bf16.mxu0 0
        %1593 = vmatpush1.bf16.msra.mxu0 0
        %1594 = vmatprep.subr.bf16.mxu0 0
        %1595 = vmatpush1.bf16.msra.mxu0 0
        %1596 = vmatprep.subr.bf16.mxu0 0
        %1597 = vmatpush1.bf16.msra.mxu0 0
        %1598 = vmatprep.subr.bf16.mxu0 0
        %1599 = vmatpush1.bf16.msra.mxu0 0
        %1600 = vmatprep.subr.bf16.mxu0 0
        %1601 = vmatpush1.bf16.msra.mxu0 0
        %1602 = vmatprep.subr.bf16.mxu0 0
        %1603 = vmatpush1.bf16.msra.mxu0 0
        %1604 = vmatprep.subr.bf16.mxu0 0
        %1605 = vmatpush1.bf16.msra.mxu0 0
        %1606 = vmatprep.subr.bf16.mxu0 0
        %1607 = vmatpush1.bf16.msra.mxu0 0
        %1608 = vmatprep.subr.bf16.mxu0 0
        %1609 = vmatpush1.bf16.msra.mxu0 0
        %1610 = vmatprep.subr.bf16.mxu0 0
        %1611 = vmatpush1.bf16.msra.mxu0 0
        %1612 = vmatprep.subr.bf16.mxu0 0
        %1613 = vmatpush1.bf16.msra.mxu0 0
        %1614 = vmatprep.subr.bf16.mxu0 0
        %1615 = vmatpush1.bf16.msra.mxu0 0
        %1616 = vmatprep.subr.bf16.mxu0 0
        %1617 = vmatpush1.bf16.msra.mxu0 0
        %1618 = vmatprep.mubr.bf16.mxu0 0
        %1619 = vmatmul.mubr.bf16.gmra.mrb[0].mxu0 %v1581
        %v1620 = vpop.f32.mrb[0].mxu0
        %v1621 = vadd.f32 0.0, %v1620
        %v1622 = vpop.f32.mrb[0].mxu0
        %v1623 = vpop.f32.mrb[0].mxu0
        %v1624 = vpop.f32.mrb[0].mxu0
        %1625 = vdwg.mxu0
        %1626 = vrot.lane.b32.xlu0 %v1514, 120
        %v1627 = vpop.permute.xlu0 %1626
        %1628 = vrot.lane.b32.xlu0 %v1514, 88
        %v1629 = vpop.permute.xlu0 %1628
        %v1631 = vsel %vm666, %v1627, 0
        %v1634 = vsel %vm666, %v1629, 0
        %1636 = vmatprep.subr.bf16.mxu0 0
        %1637 = vmatpush1.bf16.xpose.msra.mxu0 %v1634
        %1638 = vmatprep.subr.bf16.mxu0 0
        %1639 = vmatpush1.bf16.xpose.msra.mxu0 0
        %1640 = vmatprep.subr.bf16.mxu0 0
        %1641 = vmatpush1.bf16.xpose.msra.mxu0 0
        %1642 = vmatprep.subr.bf16.mxu0 0
        %1643 = vmatpush1.bf16.xpose.msra.mxu0 0
        %1644 = vmatprep.subr.bf16.mxu0 0
        %1645 = vmatpush1.bf16.xpose.msra.mxu0 0
        %1646 = vmatprep.subr.bf16.mxu0 0
        %1647 = vmatpush1.bf16.xpose.msra.mxu0 0
        %1648 = vmatprep.subr.bf16.mxu0 0
        %1649 = vmatpush1.bf16.xpose.msra.mxu0 0
        %1650 = vmatprep.subr.bf16.mxu0 0
        %1651 = vmatpush1.bf16.xpose.msra.mxu0 0
        %1652 = vmatprep.subr.bf16.mxu0 0
        %1653 = vmatpush1.bf16.xpose.msra.mxu0 0
        %1654 = vmatprep.subr.bf16.mxu0 0
        %1655 = vmatpush1.bf16.xpose.msra.mxu0 0
        %1656 = vmatprep.subr.bf16.mxu0 0
        %1657 = vmatpush1.bf16.xpose.msra.mxu0 0
        %1658 = vmatprep.subr.bf16.mxu0 0
        %1659 = vmatpush1.bf16.xpose.msra.mxu0 0
        %1660 = vmatprep.subr.bf16.mxu0 0
        %1661 = vmatpush1.bf16.xpose.msra.mxu0 0
        %1662 = vmatprep.subr.bf16.mxu0 0
        %1663 = vmatpush1.bf16.xpose.msra.mxu0 0
        %1664 = vmatprep.subr.bf16.mxu0 0
        %1665 = vmatpush1.bf16.xpose.msra.mxu0 0
        %1666 = vmatprep.subr.bf16.mxu0 0
        %1667 = vmatpush1.bf16.xpose.msra.mxu0 0
        %1668 = vmatprep.mubr.bf16.mxu0 0
        %1669 = vmatmul.mubr.bf16.gmra.mrb[0].mxu0 %v1631
        %v1670 = vpop.f32.mrb[0].mxu0
        %v1671 = vadd.f32 0.0, %v1670
        %v1672 = vpop.f32.mrb[0].mxu0
        %v1673 = vpop.f32.mrb[0].mxu0
        %v1674 = vpop.f32.mrb[0].mxu0
        %1675 = vdwg.mxu0
        %v1676 = vmul.f32 %v1671, 0.35355338
        %v1677 = vsel %vm563, %v1676, -1e+09
        %v1678 = vsel %vm666, %v1677, -inf
        %1679 = vmax.xlane.f32.xlu0 %v1678
        %v1680 = vpop.xlane.xlu0 %1679
        %v1681 = vsub.f32 %v1677, %v1680
        %v1682 = vmul.f32 %v1681, 1.442695
        %v1683 = vpow.pop %v1682
        %v1684 = vsel %vm666, %v1683, 0.0
        %1685 = vadd.xlane.f32.xlu0 %v1684
        %v1686 = vpop.xlane.xlu0 %1685
        %v1687 = vrcp.pop %v1686
        %v1688 = vmul.f32 %v1683, %v1687
        %v1689 = vpack.c.bf16 %v1688, %v1688
        %1690 = vrot.lane.b32.xlu0 %v1514, 56
        %v1691 = vpop.permute.xlu0 %1690
        %v1693 = vsel %vm666, %v1689, 0
        %v1696 = vsel %vm732, %v1691, 0
        %1698 = vmatprep.subr.bf16.mxu0 0
        %1699 = vmatpush1.bf16.msra.mxu0 %v1696
        %1700 = vmatprep.subr.bf16.mxu0 0
        %1701 = vmatpush1.bf16.msra.mxu0 0
        %1702 = vmatprep.subr.bf16.mxu0 0
        %1703 = vmatpush1.bf16.msra.mxu0 0
        %1704 = vmatprep.subr.bf16.mxu0 0
        %1705 = vmatpush1.bf16.msra.mxu0 0
        %1706 = vmatprep.subr.bf16.mxu0 0
        %1707 = vmatpush1.bf16.msra.mxu0 0
        %1708 = vmatprep.subr.bf16.mxu0 0
        %1709 = vmatpush1.bf16.msra.mxu0 0
        %1710 = vmatprep.subr.bf16.mxu0 0
        %1711 = vmatpush1.bf16.msra.mxu0 0
        %1712 = vmatprep.subr.bf16.mxu0 0
        %1713 = vmatpush1.bf16.msra.mxu0 0
        %1714 = vmatprep.subr.bf16.mxu0 0
        %1715 = vmatpush1.bf16.msra.mxu0 0
        %1716 = vmatprep.subr.bf16.mxu0 0
        %1717 = vmatpush1.bf16.msra.mxu0 0
        %1718 = vmatprep.subr.bf16.mxu0 0
        %1719 = vmatpush1.bf16.msra.mxu0 0
        %1720 = vmatprep.subr.bf16.mxu0 0
        %1721 = vmatpush1.bf16.msra.mxu0 0
        %1722 = vmatprep.subr.bf16.mxu0 0
        %1723 = vmatpush1.bf16.msra.mxu0 0
        %1724 = vmatprep.subr.bf16.mxu0 0
        %1725 = vmatpush1.bf16.msra.mxu0 0
        %1726 = vmatprep.subr.bf16.mxu0 0
        %1727 = vmatpush1.bf16.msra.mxu0 0
        %1728 = vmatprep.subr.bf16.mxu0 0
        %1729 = vmatpush1.bf16.msra.mxu0 0
        %1730 = vmatprep.mubr.bf16.mxu0 0
        %1731 = vmatmul.mubr.bf16.gmra.mrb[0].mxu0 %v1693
        %v1732 = vpop.f32.mrb[0].mxu0
        %v1733 = vadd.f32 0.0, %v1732
        %v1734 = vpop.f32.mrb[0].mxu0
        %v1735 = vpop.f32.mrb[0].mxu0
        %v1736 = vpop.f32.mrb[0].mxu0
        %1737 = vdwg.mxu0
        %1738 = vrot.lane.b32.xlu0 %v1514, 112
        %v1739 = vpop.permute.xlu0 %1738
        %1740 = vrot.lane.b32.xlu0 %v1514, 80
        %v1741 = vpop.permute.xlu0 %1740
        %v1743 = vsel %vm666, %v1739, 0
        %v1746 = vsel %vm666, %v1741, 0
        %1748 = vmatprep.subr.bf16.mxu0 0
        %1749 = vmatpush1.bf16.xpose.msra.mxu0 %v1746
        %1750 = vmatprep.subr.bf16.mxu0 0
        %1751 = vmatpush1.bf16.xpose.msra.mxu0 0
        %1752 = vmatprep.subr.bf16.mxu0 0
        %1753 = vmatpush1.bf16.xpose.msra.mxu0 0
        %1754 = vmatprep.subr.bf16.mxu0 0
        %1755 = vmatpush1.bf16.xpose.msra.mxu0 0
        %1756 = vmatprep.subr.bf16.mxu0 0
        %1757 = vmatpush1.bf16.xpose.msra.mxu0 0
        %1758 = vmatprep.subr.bf16.mxu0 0
        %1759 = vmatpush1.bf16.xpose.msra.mxu0 0
        %1760 = vmatprep.subr.bf16.mxu0 0
        %1761 = vmatpush1.bf16.xpose.msra.mxu0 0
        %1762 = vmatprep.subr.bf16.mxu0 0
        %1763 = vmatpush1.bf16.xpose.msra.mxu0 0
        %1764 = vmatprep.subr.bf16.mxu0 0
        %1765 = vmatpush1.bf16.xpose.msra.mxu0 0
        %1766 = vmatprep.subr.bf16.mxu0 0
        %1767 = vmatpush1.bf16.xpose.msra.mxu0 0
        %1768 = vmatprep.subr.bf16.mxu0 0
        %1769 = vmatpush1.bf16.xpose.msra.mxu0 0
        %1770 = vmatprep.subr.bf16.mxu0 0
        %1771 = vmatpush1.bf16.xpose.msra.mxu0 0
        %1772 = vmatprep.subr.bf16.mxu0 0
        %1773 = vmatpush1.bf16.xpose.msra.mxu0 0
        %1774 = vmatprep.subr.bf16.mxu0 0
        %1775 = vmatpush1.bf16.xpose.msra.mxu0 0
        %1776 = vmatprep.subr.bf16.mxu0 0
        %1777 = vmatpush1.bf16.xpose.msra.mxu0 0
        %1778 = vmatprep.subr.bf16.mxu0 0
        %1779 = vmatpush1.bf16.xpose.msra.mxu0 0
        %1780 = vmatprep.mubr.bf16.mxu0 0
        %1781 = vmatmul.mubr.bf16.gmra.mrb[0].mxu0 %v1743
        %v1782 = vpop.f32.mrb[0].mxu0
        %v1783 = vadd.f32 0.0, %v1782
        %v1784 = vpop.f32.mrb[0].mxu0
        %v1785 = vpop.f32.mrb[0].mxu0
        %v1786 = vpop.f32.mrb[0].mxu0
        %1787 = vdwg.mxu0
        %v1788 = vmul.f32 %v1783, 0.35355338
        %v1789 = vsel %vm563, %v1788, -1e+09
        %v1790 = vsel %vm666, %v1789, -inf
        %1791 = vmax.xlane.f32.xlu0 %v1790
        %v1792 = vpop.xlane.xlu0 %1791
        %v1793 = vsub.f32 %v1789, %v1792
        %v1794 = vmul.f32 %v1793, 1.442695
        %v1795 = vpow.pop %v1794
        %v1796 = vsel %vm666, %v1795, 0.0
        %1797 = vadd.xlane.f32.xlu0 %v1796
        %v1798 = vpop.xlane.xlu0 %1797
        %v1799 = vrcp.pop %v1798
        %v1800 = vmul.f32 %v1795, %v1799
        %v1801 = vpack.c.bf16 %v1800, %v1800
        %1802 = vrot.lane.b32.xlu0 %v1514, 48
        %v1803 = vpop.permute.xlu0 %1802
        %v1805 = vsel %vm666, %v1801, 0
        %v1808 = vsel %vm732, %v1803, 0
        %1810 = vmatprep.subr.bf16.mxu0 0
        %1811 = vmatpush1.bf16.msra.mxu0 %v1808
        %1812 = vmatprep.subr.bf16.mxu0 0
        %1813 = vmatpush1.bf16.msra.mxu0 0
        %1814 = vmatprep.subr.bf16.mxu0 0
        %1815 = vmatpush1.bf16.msra.mxu0 0
        %1816 = vmatprep.subr.bf16.mxu0 0
        %1817 = vmatpush1.bf16.msra.mxu0 0
        %1818 = vmatprep.subr.bf16.mxu0 0
        %1819 = vmatpush1.bf16.msra.mxu0 0
        %1820 = vmatprep.subr.bf16.mxu0 0
        %1821 = vmatpush1.bf16.msra.mxu0 0
        %1822 = vmatprep.subr.bf16.mxu0 0
        %1823 = vmatpush1.bf16.msra.mxu0 0
        %1824 = vmatprep.subr.bf16.mxu0 0
        %1825 = vmatpush1.bf16.msra.mxu0 0
        %1826 = vmatprep.subr.bf16.mxu0 0
        %1827 = vmatpush1.bf16.msra.mxu0 0
        %1828 = vmatprep.subr.bf16.mxu0 0
        %1829 = vmatpush1.bf16.msra.mxu0 0
        %1830 = vmatprep.subr.bf16.mxu0 0
        %1831 = vmatpush1.bf16.msra.mxu0 0
        %1832 = vmatprep.subr.bf16.mxu0 0
        %1833 = vmatpush1.bf16.msra.mxu0 0
        %1834 = vmatprep.subr.bf16.mxu0 0
        %1835 = vmatpush1.bf16.msra.mxu0 0
        %1836 = vmatprep.subr.bf16.mxu0 0
        %1837 = vmatpush1.bf16.msra.mxu0 0
        %1838 = vmatprep.subr.bf16.mxu0 0
        %1839 = vmatpush1.bf16.msra.mxu0 0
        %1840 = vmatprep.subr.bf16.mxu0 0
        %1841 = vmatpush1.bf16.msra.mxu0 0
        %1842 = vmatprep.mubr.bf16.mxu0 0
        %1843 = vmatmul.mubr.bf16.gmra.mrb[0].mxu0 %v1805
        %v1844 = vpop.f32.mrb[0].mxu0
        %v1845 = vadd.f32 0.0, %v1844
        %v1846 = vpop.f32.mrb[0].mxu0
        %v1847 = vpop.f32.mrb[0].mxu0
        %v1848 = vpop.f32.mrb[0].mxu0
        %1849 = vdwg.mxu0
        %1850 = vrot.lane.b32.xlu0 %v1514, 104
        %v1851 = vpop.permute.xlu0 %1850
        %1852 = vrot.lane.b32.xlu0 %v1514, 72
        %v1853 = vpop.permute.xlu0 %1852
        %v1855 = vsel %vm666, %v1851, 0
        %v1858 = vsel %vm666, %v1853, 0
        %1860 = vmatprep.subr.bf16.mxu0 0
        %1861 = vmatpush1.bf16.xpose.msra.mxu0 %v1858
        %1862 = vmatprep.subr.bf16.mxu0 0
        %1863 = vmatpush1.bf16.xpose.msra.mxu0 0
        %1864 = vmatprep.subr.bf16.mxu0 0
        %1865 = vmatpush1.bf16.xpose.msra.mxu0 0
        %1866 = vmatprep.subr.bf16.mxu0 0
        %1867 = vmatpush1.bf16.xpose.msra.mxu0 0
        %1868 = vmatprep.subr.bf16.mxu0 0
        %1869 = vmatpush1.bf16.xpose.msra.mxu0 0
        %1870 = vmatprep.subr.bf16.mxu0 0
        %1871 = vmatpush1.bf16.xpose.msra.mxu0 0
        %1872 = vmatprep.subr.bf16.mxu0 0
        %1873 = vmatpush1.bf16.xpose.msra.mxu0 0
        %1874 = vmatprep.subr.bf16.mxu0 0
        %1875 = vmatpush1.bf16.xpose.msra.mxu0 0
        %1876 = vmatprep.subr.bf16.mxu0 0
        %1877 = vmatpush1.bf16.xpose.msra.mxu0 0
        %1878 = vmatprep.subr.bf16.mxu0 0
        %1879 = vmatpush1.bf16.xpose.msra.mxu0 0
        %1880 = vmatprep.subr.bf16.mxu0 0
        %1881 = vmatpush1.bf16.xpose.msra.mxu0 0
        %1882 = vmatprep.subr.bf16.mxu0 0
        %1883 = vmatpush1.bf16.xpose.msra.mxu0 0
        %1884 = vmatprep.subr.bf16.mxu0 0
        %1885 = vmatpush1.bf16.xpose.msra.mxu0 0
        %1886 = vmatprep.subr.bf16.mxu0 0
        %1887 = vmatpush1.bf16.xpose.msra.mxu0 0
        %1888 = vmatprep.subr.bf16.mxu0 0
        %1889 = vmatpush1.bf16.xpose.msra.mxu0 0
        %1890 = vmatprep.subr.bf16.mxu0 0
        %1891 = vmatpush1.bf16.xpose.msra.mxu0 0
        %1892 = vmatprep.mubr.bf16.mxu0 0
        %1893 = vmatmul.mubr.bf16.gmra.mrb[0].mxu0 %v1855
        %v1894 = vpop.f32.mrb[0].mxu0
        %v1895 = vadd.f32 0.0, %v1894
        %v1896 = vpop.f32.mrb[0].mxu0
        %v1897 = vpop.f32.mrb[0].mxu0
        %v1898 = vpop.f32.mrb[0].mxu0
        %1899 = vdwg.mxu0
        %v1900 = vmul.f32 %v1895, 0.35355338
        %v1901 = vsel %vm563, %v1900, -1e+09
        %v1902 = vsel %vm666, %v1901, -inf
        %1903 = vmax.xlane.f32.xlu0 %v1902
        %v1904 = vpop.xlane.xlu0 %1903
        %v1905 = vsub.f32 %v1901, %v1904
        %v1906 = vmul.f32 %v1905, 1.442695
        %v1907 = vpow.pop %v1906
        %v1908 = vsel %vm666, %v1907, 0.0
        %1909 = vadd.xlane.f32.xlu0 %v1908
        %v1910 = vpop.xlane.xlu0 %1909
        %v1911 = vrcp.pop %v1910
        %v1912 = vmul.f32 %v1907, %v1911
        %v1913 = vpack.c.bf16 %v1912, %v1912
        %1914 = vrot.lane.b32.xlu0 %v1514, 40
        %v1915 = vpop.permute.xlu0 %1914
        %v1917 = vsel %vm666, %v1913, 0
        %v1920 = vsel %vm732, %v1915, 0
        %1922 = vmatprep.subr.bf16.mxu0 0
        %1923 = vmatpush1.bf16.msra.mxu0 %v1920
        %1924 = vmatprep.subr.bf16.mxu0 0
        %1925 = vmatpush1.bf16.msra.mxu0 0
        %1926 = vmatprep.subr.bf16.mxu0 0
        %1927 = vmatpush1.bf16.msra.mxu0 0
        %1928 = vmatprep.subr.bf16.mxu0 0
        %1929 = vmatpush1.bf16.msra.mxu0 0
        %1930 = vmatprep.subr.bf16.mxu0 0
        %1931 = vmatpush1.bf16.msra.mxu0 0
        %1932 = vmatprep.subr.bf16.mxu0 0
        %1933 = vmatpush1.bf16.msra.mxu0 0
        %1934 = vmatprep.subr.bf16.mxu0 0
        %1935 = vmatpush1.bf16.msra.mxu0 0
        %1936 = vmatprep.subr.bf16.mxu0 0
        %1937 = vmatpush1.bf16.msra.mxu0 0
        %1938 = vmatprep.subr.bf16.mxu0 0
        %1939 = vmatpush1.bf16.msra.mxu0 0
        %1940 = vmatprep.subr.bf16.mxu0 0
        %1941 = vmatpush1.bf16.msra.mxu0 0
        %1942 = vmatprep.subr.bf16.mxu0 0
        %1943 = vmatpush1.bf16.msra.mxu0 0
        %1944 = vmatprep.subr.bf16.mxu0 0
        %1945 = vmatpush1.bf16.msra.mxu0 0
        %1946 = vmatprep.subr.bf16.mxu0 0
        %1947 = vmatpush1.bf16.msra.mxu0 0
        %1948 = vmatprep.subr.bf16.mxu0 0
        %1949 = vmatpush1.bf16.msra.mxu0 0
        %1950 = vmatprep.subr.bf16.mxu0 0
        %1951 = vmatpush1.bf16.msra.mxu0 0
        %1952 = vmatprep.subr.bf16.mxu0 0
        %1953 = vmatpush1.bf16.msra.mxu0 0
        %1954 = vmatprep.mubr.bf16.mxu0 0
        %1955 = vmatmul.mubr.bf16.gmra.mrb[0].mxu0 %v1917
        %v1956 = vpop.f32.mrb[0].mxu0
        %v1957 = vadd.f32 0.0, %v1956
        %v1958 = vpop.f32.mrb[0].mxu0
        %v1959 = vpop.f32.mrb[0].mxu0
        %v1960 = vpop.f32.mrb[0].mxu0
        %1961 = vdwg.mxu0
        %1963 = vrot.lane.b32.xlu0 %v1733, 8
        %v1964 = vpop.permute.xlu0 %1963
        %1967 = vrot.lane.b32.xlu0 %v1845, 16
        %v1968 = vpop.permute.xlu0 %1967
        %1971 = vrot.lane.b32.xlu0 %v1957, 24
        %v1972 = vpop.permute.xlu0 %1971
        %v1974 = vsel %vm666, %v1621, %v1964
        %v1975 = vsel %vm1125, %v1974, %v1968
        %v1976 = vsel %vm1127, %v1975, %v1972
        %v1977 = vpack.c.bf16 %v1976, %v1976
        %s1978 = scalar_lea.vmem %s5, 16
        %v1979 = vld [vmem:[%s1978] sm:$0xf]
        %v1980 = vld [vmem:[%s1978 + $0x4] sm:$0xf]
        %v1981 = vld [vmem:[%s1978 + $0x8] sm:$0xf]
        %v1982 = vld [vmem:[%s1978 + $0xc] sm:$0xf]
        %s1983 = scalar_lea.vmem %s6, 1
        %v1984 = vld [vmem:[%s1983] sm:$0x1]
        %v1986 = vlaneseq
        %v1987 = vshrl.u32 %v1986, 7
        %v1988 = vsub.s32 0, %v1987
        %v1989 = vrot.slane %v1984, %v1988
        %v1995 = vunpack.c.l.b16 %v1979
        %v1996 = vunpack.c.l.b16 %v1980
        %v1997 = vunpack.c.l.b16 %v1981
        %v1998 = vunpack.c.l.b16 %v1982
        %v1999 = vpack.c.b16 %v1996, %v1995
        %v2000 = vpack.c.b16 %v1998, %v1997
        %v2004 = vsel %vm566, %v1977, 0
        %2006 = vmatprep.subr.bf16.mxu0 0
        %2007 = vmatpush1.bf16.msra.mxu0 %v1999
        %2008 = vmatprep.subr.bf16.mxu0 0
        %2009 = vmatpush1.bf16.msra.mxu0 %v2000
        %2010 = vmatprep.subr.bf16.mxu0 0
        %2011 = vmatpush1.bf16.msra.mxu0 0
        %2012 = vmatprep.subr.bf16.mxu0 0
        %2013 = vmatpush1.bf16.msra.mxu0 0
        %2014 = vmatprep.subr.bf16.mxu0 0
        %2015 = vmatpush1.bf16.msra.mxu0 0
        %2016 = vmatprep.subr.bf16.mxu0 0
        %2017 = vmatpush1.bf16.msra.mxu0 0
        %2018 = vmatprep.subr.bf16.mxu0 0
        %2019 = vmatpush1.bf16.msra.mxu0 0
        %2020 = vmatprep.subr.bf16.mxu0 0
        %2021 = vmatpush1.bf16.msra.mxu0 0
        %2022 = vmatprep.subr.bf16.mxu0 0
        %2023 = vmatpush1.bf16.msra.mxu0 0
        %2024 = vmatprep.subr.bf16.mxu0 0
        %2025 = vmatpush1.bf16.msra.mxu0 0
        %2026 = vmatprep.subr.bf16.mxu0 0
        %2027 = vmatpush1.bf16.msra.mxu0 0
        %2028 = vmatprep.subr.bf16.mxu0 0
        %2029 = vmatpush1.bf16.msra.mxu0 0
        %2030 = vmatprep.subr.bf16.mxu0 0
        %2031 = vmatpush1.bf16.msra.mxu0 0
        %2032 = vmatprep.subr.bf16.mxu0 0
        %2033 = vmatpush1.bf16.msra.mxu0 0
        %2034 = vmatprep.subr.bf16.mxu0 0
        %2035 = vmatpush1.bf16.msra.mxu0 0
        %2036 = vmatprep.subr.bf16.mxu0 0
        %2037 = vmatpush1.bf16.msra.mxu0 0
        %2038 = vmatprep.mubr.bf16.mxu0 0
        %2039 = vmatmul.mubr.bf16.gmra.mrb[0].mxu0 %v2004
        %v2040 = vpop.f32.mrb[0].mxu0
        %v2041 = vadd.f32 %v1989, %v2040
        %v2042 = vpop.f32.mrb[0].mxu0
        %v2043 = vpop.f32.mrb[0].mxu0
        %v2044 = vpop.f32.mrb[0].mxu0
        %2045 = vdwg.mxu0
        %v2046 = vadd.f32 %v1413, %v2041
        %s2047 = scalar_lea.vmem %s7, 1
        %v2048 = vld [vmem:[%s2047] sm:$0x1]
        %s2049 = scalar_lea.vmem %s8, 1
        %v2050 = vld [vmem:[%s2049] sm:$0x1]
        %v2051 = vsel %vm566, %v2046, 0.0
        %2052 = vadd.xlane.f32.xlu0 %v2051
        %v2053 = vpop.xlane.xlu0 %2052
        %v2054 = vmul.f32 %v2053, %v570
        %v2055 = vsub.f32 %v2046, %v2054
        %v2056 = vmul.f32 %v2055, %v2055
        %v2057 = vsel %vm566, %v2056, 0.0
        %2058 = vadd.xlane.f32.xlu0 %v2057
        %v2059 = vpop.xlane.xlu0 %2058
        %v2060 = vmul.f32 %v2059, %v570
        %v2061 = vadd.f32 %v2060, 1e-05
        %v2062 = vrsqrt.pop %v2061
        %v2063 = vmul.f32 %v2055, %v2062
        %v2065 = vlaneseq
        %v2066 = vshrl.u32 %v2065, 7
        %v2067 = vsub.s32 0, %v2066
        %v2068 = vrot.slane %v2048, %v2067
        %v2070 = vmul.f32 %v2063, %v2068
        %v2072 = vlaneseq
        %v2073 = vshrl.u32 %v2072, 7
        %v2074 = vsub.s32 0, %v2073
        %v2075 = vrot.slane %v2050, %v2074
        %v2077 = vadd.f32 %v2070, %v2075
        %v2078 = vpack.c.bf16 %v2077, %v2077
        %s2079 = scalar_lea.vmem %s9, 16
        %v2080 = vld [vmem:[%s2079] sm:$0xf]
        %v2081 = vld [vmem:[%s2079 + $0x4] sm:$0xf]
        %v2082 = vld [vmem:[%s2079 + $0x8] sm:$0xf]
        %v2083 = vld [vmem:[%s2079 + $0xc] sm:$0xf]
        %s2084 = scalar_lea.vmem %s10, 1
        %v2085 = vld [vmem:[%s2084] sm:$0x1]
        %v2087 = vlaneseq
        %v2088 = vshrl.u32 %v2087, 7
        %v2089 = vsub.s32 0, %v2088
        %v2090 = vrot.slane %v2085, %v2089
        %v2096 = vunpack.c.l.b16 %v2080
        %v2097 = vunpack.c.l.b16 %v2081
        %v2098 = vunpack.c.l.b16 %v2082
        %v2099 = vunpack.c.l.b16 %v2083
        %v2100 = vpack.c.b16 %v2097, %v2096
        %v2101 = vpack.c.b16 %v2099, %v2098
        %v2105 = vsel %vm566, %v2078, 0
        %2107 = vmatprep.subr.bf16.mxu0 0
        %2108 = vmatpush1.bf16.msra.mxu0 %v2100
        %2109 = vmatprep.subr.bf16.mxu0 0
        %2110 = vmatpush1.bf16.msra.mxu0 %v2101
        %2111 = vmatprep.subr.bf16.mxu0 0
        %2112 = vmatpush1.bf16.msra.mxu0 0
        %2113 = vmatprep.subr.bf16.mxu0 0
        %2114 = vmatpush1.bf16.msra.mxu0 0
        %2115 = vmatprep.subr.bf16.mxu0 0
        %2116 = vmatpush1.bf16.msra.mxu0 0
        %2117 = vmatprep.subr.bf16.mxu0 0
        %2118 = vmatpush1.bf16.msra.mxu0 0
        %2119 = vmatprep.subr.bf16.mxu0 0
        %2120 = vmatpush1.bf16.msra.mxu0 0
        %2121 = vmatprep.subr.bf16.mxu0 0
        %2122 = vmatpush1.bf16.msra.mxu0 0
        %2123 = vmatprep.subr.bf16.mxu0 0
        %2124 = vmatpush1.bf16.msra.mxu0 0
        %2125 = vmatprep.subr.bf16.mxu0 0
        %2126 = vmatpush1.bf16.msra.mxu0 0
        %2127 = vmatprep.subr.bf16.mxu0 0
        %2128 = vmatpush1.bf16.msra.mxu0 0
        %2129 = vmatprep.subr.bf16.mxu0 0
        %2130 = vmatpush1.bf16.msra.mxu0 0
        %2131 = vmatprep.subr.bf16.mxu0 0
        %2132 = vmatpush1.bf16.msra.mxu0 0
        %2133 = vmatprep.subr.bf16.mxu0 0
        %2134 = vmatpush1.bf16.msra.mxu0 0
        %2135 = vmatprep.subr.bf16.mxu0 0
        %2136 = vmatpush1.bf16.msra.mxu0 0
        %2137 = vmatprep.subr.bf16.mxu0 0
        %2138 = vmatpush1.bf16.msra.mxu0 0
        %2139 = vmatprep.mubr.bf16.mxu0 0
        %2140 = vmatmul.mubr.bf16.gmra.mrb[0].mxu0 %v2105
        %v2141 = vpop.f32.mrb[0].mxu0
        %v2142 = vadd.f32 %v2090, %v2141
        %v2143 = vpop.f32.mrb[0].mxu0
        %v2144 = vpop.f32.mrb[0].mxu0
        %v2145 = vpop.f32.mrb[0].mxu0
        %2146 = vdwg.mxu0
        %v2147 = vmul.f32 %v2142, 1.702
        %v2148 = vxor.u32 %v2147, 2147483648
        %v2149 = vmul.f32 %v2148, 1.442695
        %v2150 = vpow.pop %v2149
        %v2151 = vadd.f32 %v2150, 1.0
        %v2152 = vrcp.pop %v2151
        %v2153 = vmul.f32 1.0, %v2152
        %v2154 = vmul.f32 %v2142, %v2153
        %v2155 = vpack.c.bf16 %v2154, %v2154
        %s2156 = scalar_lea.vmem %s11, 64
        %v2157 = vld [vmem:[%s2156] sm:$0xf]
        %v2158 = vld [vmem:[%s2156 + $0x4] sm:$0xf]
        %v2159 = vld [vmem:[%s2156 + $0x8] sm:$0xf]
        %v2160 = vld [vmem:[%s2156 + $0xc] sm:$0xf]
        %v2161 = vld [vmem:[%s2156 + $0x10] sm:$0xf]
        %v2162 = vld [vmem:[%s2156 + $0x14] sm:$0xf]
        %v2163 = vld [vmem:[%s2156 + $0x18] sm:$0xf]
        %v2164 = vld [vmem:[%s2156 + $0x1c] sm:$0xf]
        %v2165 = vld [vmem:[%s2156 + $0x20] sm:$0xf]
        %v2166 = vld [vmem:[%s2156 + $0x24] sm:$0xf]
        %v2167 = vld [vmem:[%s2156 + $0x28] sm:$0xf]
        %v2168 = vld [vmem:[%s2156 + $0x2c] sm:$0xf]
        %v2169 = vld [vmem:[%s2156 + $0x30] sm:$0xf]
        %v2170 = vld [vmem:[%s2156 + $0x34] sm:$0xf]
        %v2171 = vld [vmem:[%s2156 + $0x38] sm:$0xf]
        %v2172 = vld [vmem:[%s2156 + $0x3c] sm:$0xf]
        %s2173 = scalar_lea.vmem %s12, 1
        %v2174 = vld [vmem:[%s2173] sm:$0x1]
        %v2176 = vlaneseq
        %v2177 = vshrl.u32 %v2176, 7
        %v2178 = vsub.s32 0, %v2177
        %v2179 = vrot.slane %v2174, %v2178
        %v2197 = vunpack.c.l.b16 %v2157
        %v2198 = vunpack.c.l.b16 %v2158
        %v2199 = vunpack.c.l.b16 %v2159
        %v2200 = vunpack.c.l.b16 %v2160
        %v2201 = vunpack.c.l.b16 %v2161
        %v2202 = vunpack.c.l.b16 %v2162
        %v2203 = vunpack.c.l.b16 %v2163
        %v2204 = vunpack.c.l.b16 %v2164
        %v2205 = vunpack.c.l.b16 %v2165
        %v2206 = vunpack.c.l.b16 %v2166
        %v2207 = vunpack.c.l.b16 %v2167
        %v2208 = vunpack.c.l.b16 %v2168
        %v2209 = vunpack.c.l.b16 %v2169
        %v2210 = vunpack.c.l.b16 %v2170
        %v2211 = vunpack.c.l.b16 %v2171
        %v2212 = vunpack.c.l.b16 %v2172
        %v2213 = vpack.c.b16 %v2198, %v2197
        %v2214 = vpack.c.b16 %v2200, %v2199
        %v2215 = vpack.c.b16 %v2202, %v2201
        %v2216 = vpack.c.b16 %v2204, %v2203
        %v2217 = vpack.c.b16 %v2206, %v2205
        %v2218 = vpack.c.b16 %v2208, %v2207
        %v2219 = vpack.c.b16 %v2210, %v2209
        %v2220 = vpack.c.b16 %v2212, %v2211
        %2229 = vmatprep.subr.bf16.mxu0 0
        %2230 = vmatpush1.bf16.msra.mxu0 %v2213
        %2231 = vmatprep.subr.bf16.mxu0 0
        %2232 = vmatpush1.bf16.msra.mxu0 %v2214
        %2233 = vmatprep.subr.bf16.mxu0 0
        %2234 = vmatpush1.bf16.msra.mxu0 %v2215
        %2235 = vmatprep.subr.bf16.mxu0 0
        %2236 = vmatpush1.bf16.msra.mxu0 %v2216
        %2237 = vmatprep.subr.bf16.mxu0 0
        %2238 = vmatpush1.bf16.msra.mxu0 %v2217
        %2239 = vmatprep.subr.bf16.mxu0 0
        %2240 = vmatpush1.bf16.msra.mxu0 %v2218
        %2241 = vmatprep.subr.bf16.mxu0 0
        %2242 = vmatpush1.bf16.msra.mxu0 %v2219
        %2243 = vmatprep.subr.bf16.mxu0 0
        %2244 = vmatpush1.bf16.msra.mxu0 %v2220
        %2245 = vmatprep.subr.bf16.mxu0 0
        %2246 = vmatpush1.bf16.msra.mxu0 0
        %2247 = vmatprep.subr.bf16.mxu0 0
        %2248 = vmatpush1.bf16.msra.mxu0 0
        %2249 = vmatprep.subr.bf16.mxu0 0
        %2250 = vmatpush1.bf16.msra.mxu0 0
        %2251 = vmatprep.subr.bf16.mxu0 0
        %2252 = vmatpush1.bf16.msra.mxu0 0
        %2253 = vmatprep.subr.bf16.mxu0 0
        %2254 = vmatpush1.bf16.msra.mxu0 0
        %2255 = vmatprep.subr.bf16.mxu0 0
        %2256 = vmatpush1.bf16.msra.mxu0 0
        %2257 = vmatprep.subr.bf16.mxu0 0
        %2258 = vmatpush1.bf16.msra.mxu0 0
        %2259 = vmatprep.subr.bf16.mxu0 0
        %2260 = vmatpush1.bf16.msra.mxu0 0
        %2261 = vmatprep.mubr.bf16.mxu0 0
        %2262 = vmatmul.mubr.bf16.gmra.mrb[0].mxu0 %v2155
        %v2263 = vpop.f32.mrb[0].mxu0
        %v2264 = vadd.f32 %v2179, %v2263
        %v2265 = vpop.f32.mrb[0].mxu0
        %v2266 = vpop.f32.mrb[0].mxu0
        %v2267 = vpop.f32.mrb[0].mxu0
        %2268 = vdwg.mxu0
        %v2269 = vadd.f32 %v2046, %v2264
        %v2270 = vld [vmem:[%s13] sm:$0x1]
        %v2271 = vld [vmem:[%s14] sm:$0x1]
        %v2272 = vsel %vm566, %v2269, 0.0
        %2273 = vadd.xlane.f32.xlu0 %v2272
        %v2274 = vpop.xlane.xlu0 %2273
        %v2275 = vmul.f32 %v2274, %v570
        %v2276 = vsub.f32 %v2269, %v2275
        %v2277 = vmul.f32 %v2276, %v2276
        %v2278 = vsel %vm566, %v2277, 0.0
        %2279 = vadd.xlane.f32.xlu0 %v2278
        %v2280 = vpop.xlane.xlu0 %2279
        %v2281 = vmul.f32 %v2280, %v570
        %v2282 = vadd.f32 %v2281, 1e-05
        %v2283 = vrsqrt.pop %v2282
        %v2284 = vmul.f32 %v2276, %v2283
        %v2286 = vlaneseq
        %v2287 = vshrl.u32 %v2286, 7
        %v2288 = vsub.s32 0, %v2287
        %v2289 = vrot.slane %v2270, %v2288
        %v2291 = vmul.f32 %v2284, %v2289
        %v2293 = vlaneseq
        %v2294 = vshrl.u32 %v2293, 7
        %v2295 = vsub.s32 0, %v2294
        %v2296 = vrot.slane %v2271, %v2295
        %v2298 = vadd.f32 %v2291, %v2296
        %v2299 = vld [vmem:[%s556] sm:$0x1]
        %v2301 = vsel %vm666, %v2299, 0
        %2303 = vmatprep.subr.mxu0 0.0
        %2304 = vmatpush1.msra.mxu0 %v2298
        %2305 = vmatprep.subr.mxu0 0.0
        %2306 = vmatpush1.msra.mxu0 0.0
        %2307 = vmatprep.subr.mxu0 0.0
        %2308 = vmatpush1.msra.mxu0 0.0
        %2309 = vmatprep.subr.mxu0 0.0
        %2310 = vmatpush1.msra.mxu0 0.0
        %2311 = vmatprep.subr.mxu0 0.0
        %2312 = vmatpush1.msra.mxu0 0.0
        %2313 = vmatprep.subr.mxu0 0.0
        %2314 = vmatpush1.msra.mxu0 0.0
        %2315 = vmatprep.subr.mxu0 0.0
        %2316 = vmatpush1.msra.mxu0 0.0
        %2317 = vmatprep.subr.mxu0 0.0
        %2318 = vmatpush1.msra.mxu0 0.0
        %2319 = vmatprep.subr.mxu0 0.0
        %2320 = vmatpush1.msra.mxu0 0.0
        %2321 = vmatprep.subr.mxu0 0.0
        %2322 = vmatpush1.msra.mxu0 0.0
        %2323 = vmatprep.subr.mxu0 0.0
        %2324 = vmatpush1.msra.mxu0 0.0
        %2325 = vmatprep.subr.mxu0 0.0
        %2326 = vmatpush1.msra.mxu0 0.0
        %2327 = vmatprep.subr.mxu0 0.0
        %2328 = vmatpush1.msra.mxu0 0.0
        %2329 = vmatprep.subr.mxu0 0.0
        %2330 = vmatpush1.msra.mxu0 0.0
        %2331 = vmatprep.subr.mxu0 0.0
        %2332 = vmatpush1.msra.mxu0 0.0
        %2333 = vmatprep.subr.mxu0 0.0
        %2334 = vmatpush1.msra.mxu0 0.0
        %2335 = vmatprep.subr.mxu0 0.0
        %2336 = vmatpush1.msra.mxu0 0.0
        %2337 = vmatprep.subr.mxu0 0.0
        %2338 = vmatpush1.msra.mxu0 0.0
        %2339 = vmatprep.subr.mxu0 0.0
        %2340 = vmatpush1.msra.mxu0 0.0
        %2341 = vmatprep.subr.mxu0 0.0
        %2342 = vmatpush1.msra.mxu0 0.0
        %2343 = vmatprep.subr.mxu0 0.0
        %2344 = vmatpush1.msra.mxu0 0.0
        %2345 = vmatprep.subr.mxu0 0.0
        %2346 = vmatpush1.msra.mxu0 0.0
        %2347 = vmatprep.subr.mxu0 0.0
        %2348 = vmatpush1.msra.mxu0 0.0
        %2349 = vmatprep.subr.mxu0 0.0
        %2350 = vmatpush1.msra.mxu0 0.0
        %2351 = vmatprep.subr.mxu0 0.0
        %2352 = vmatpush1.msra.mxu0 0.0
        %2353 = vmatprep.subr.mxu0 0.0
        %2354 = vmatpush1.msra.mxu0 0.0
        %2355 = vmatprep.subr.mxu0 0.0
        %2356 = vmatpush1.msra.mxu0 0.0
        %2357 = vmatprep.subr.mxu0 0.0
        %2358 = vmatpush1.msra.mxu0 0.0
        %2359 = vmatprep.subr.mxu0 0.0
        %2360 = vmatpush1.msra.mxu0 0.0
        %2361 = vmatprep.subr.mxu0 0.0
        %2362 = vmatpush1.msra.mxu0 0.0
        %2363 = vmatprep.subr.mxu0 0.0
        %2364 = vmatpush1.msra.mxu0 0.0
        %2365 = vmatprep.subr.mxu0 0.0
        %2366 = vmatpush1.msra.mxu0 0.0
        %2367 = vmatprep.mubr.f32.mxu0 0.0
        %2368 = vmatmul.mubr.f32.gmra.mrb[0].mxu0 %v2301
        %v2369 = vpop.f32.mrb[0].mxu0
        %v2370 = vadd.f32 0.0, %v2369
        %v2371 = vpop.f32.mrb[0].mxu0
        %2372 = vdwg.mxu0
        %v2373 = vpack.c.bf16 %v2370, %v2370
        %v2374 = vld [vmem:[%s16] sm:$0xf]
        %v2375 = vld [vmem:[%s16 + $0x4] sm:$0xf]
        %v2376 = vld [vmem:[%s16 + $0x8] sm:$0xf]
        %v2377 = vld [vmem:[%s16 + $0xc] sm:$0xf]
        %v2382 = vunpack.c.l.b16 %v2374
        %v2383 = vunpack.c.l.b16 %v2375
        %v2384 = vunpack.c.l.b16 %v2376
        %v2385 = vunpack.c.l.b16 %v2377
        %v2386 = vpack.c.b16 %v2383, %v2382
        %v2387 = vpack.c.b16 %v2385, %v2384
        %v2391 = vsel %vm566, %v2373, 0
        %2393 = vmatprep.subr.bf16.mxu0 0
        %2394 = vmatpush1.bf16.msra.mxu0 %v2386
        %2395 = vmatprep.subr.bf16.mxu0 0
        %2396 = vmatpush1.bf16.msra.mxu0 %v2387
        %2397 = vmatprep.subr.bf16.mxu0 0
        %2398 = vmatpush1.bf16.msra.mxu0 0
        %2399 = vmatprep.subr.bf16.mxu0 0
        %2400 = vmatpush1.bf16.msra.mxu0 0
        %2401 = vmatprep.subr.bf16.mxu0 0
        %2402 = vmatpush1.bf16.msra.mxu0 0
        %2403 = vmatprep.subr.bf16.mxu0 0
        %2404 = vmatpush1.bf16.msra.mxu0 0
        %2405 = vmatprep.subr.bf16.mxu0 0
        %2406 = vmatpush1.bf16.msra.mxu0 0
        %2407 = vmatprep.subr.bf16.mxu0 0
        %2408 = vmatpush1.bf16.msra.mxu0 0
        %2409 = vmatprep.subr.bf16.mxu0 0
        %2410 = vmatpush1.bf16.msra.mxu0 0
        %2411 = vmatprep.subr.bf16.mxu0 0
        %2412 = vmatpush1.bf16.msra.mxu0 0
        %2413 = vmatprep.subr.bf16.mxu0 0
        %2414 = vmatpush1.bf16.msra.mxu0 0
        %2415 = vmatprep.subr.bf16.mxu0 0
        %2416 = vmatpush1.bf16.msra.mxu0 0
        %2417 = vmatprep.subr.bf16.mxu0 0
        %2418 = vmatpush1.bf16.msra.mxu0 0
        %2419 = vmatprep.subr.bf16.mxu0 0
        %2420 = vmatpush1.bf16.msra.mxu0 0
        %2421 = vmatprep.subr.bf16.mxu0 0
        %2422 = vmatpush1.bf16.msra.mxu0 0
        %2423 = vmatprep.subr.bf16.mxu0 0
        %2424 = vmatpush1.bf16.msra.mxu0 0
        %2425 = vmatprep.mubr.bf16.mxu0 0
        %2426 = vmatmul.mubr.bf16.gmra.mrb[0].mxu0 %v2391
        %v2427 = vpop.f32.mrb[0].mxu0
        %v2428 = vadd.f32 0.0, %v2427
        %v2429 = vpop.f32.mrb[0].mxu0
        %v2430 = vpop.f32.mrb[0].mxu0
        %v2431 = vpop.f32.mrb[0].mxu0
        %2432 = vdwg.mxu0
        %vm2433 = vcmask 253952
        %2434 = vst.msk [vmem:[%s549] sm:$0x1] %vm2433, %v2428
        %s2435 = sand.u32 %s406, 1
        %s2436 = scalar_lea.sflag [#allocation3], %s2435
        %s2437 = sand.u32 %s406, 1
        %s2438 = scalar_lea.vmem [#allocation2], %s2437
        // Predicated region
        $region89: #{tpu_custom_call.1} parent=87 // pred_check
          %p2439 = pneg %p416
        $region90: #{tpu_custom_call.1} parent=87 // pred_check_branch
          %2441 = sbr.rel (%p2439) target = $region92
        $region91: #{tpu_custom_call.1} parent=87 // pred_region
          %s2443 = ssub.s32 16, 16
          %2444 = vsyncadd %s2436, %s2443
          %s2445 = smul.addr %s31, 16
          %s2446 = scalar_lea.hbm %s17, %s2445
          %s2448 = sshll.u32 %s2438, 4
          %s2449 = int_to_ptr.vmem [resolvable:$true] %s2448
          %2451 = dma.vmem_to_hbm [thread:$0]  %s2449, 16, %s2446, %s2436
        $region92: #{tpu_custom_call.1} parent=87 // pred_fallthru
          _
      $region88: #{tpu_custom_call.1} parent=5 // pred_fallthru
        _
      %p2452 = scmp.le.s32.totalorder 2, %s26
      // Predicated region
      $region93: #{tpu_custom_call.1} parent=5 // pred_check
        %p2453 = pneg %p2452
      $region94: #{tpu_custom_call.1} parent=5 // pred_check_branch
        %2455 = sbr.rel (%p2453) target = $region96
      $region95: #{tpu_custom_call.1} parent=5 // pred_region
        %s2456 = ssub.s32 %s26, 2
        // Predicated region
        $region97: #{tpu_custom_call.1} parent=95 // pred_check
          %p2457 = pneg %p422
        $region98: #{tpu_custom_call.1} parent=95 // pred_check_branch
          %2459 = sbr.rel (%p2457) target = $region100
        $region99: #{tpu_custom_call.1} parent=95 // pred_region
          %s2460 = sand.u32 %s407, 1
          %s2461 = scalar_lea.sflag [#allocation3], %s2460
          %s2462 = sand.u32 %s407, 1
          %s2463 = scalar_lea.vmem [#allocation2], %s2462
          %2464 = dma.done %s2461, 16
        $region100: #{tpu_custom_call.1} parent=95 // pred_fallthru
          _
      $region96: #{tpu_custom_call.1} parent=5 // pred_fallthru
        _
    $region6: #{tpu_custom_call.1} parent=1 // loop_footer
      %s30 = sadd.s32 1, %s26
    $region7: #{tpu_custom_call.1} parent=1 // loop_footer_branch
      %25 = sbr.rel target = $region3
    $region8: #{tpu_custom_call.1} parent=1 // loop_exit
      _
    %2465 = vsyncpa [#allocation3], 1
    %s2466 = scalar_lea.sflag [#allocation3], 1
    %2467 = vsyncpa %s2466, 1

</llo_original>
